<compile_context>
chip_gen: v6e
topology: v6e:2x2x1
jax: 0.10.0
libtpu: 0.0.40
codegen_flags: <defaults>
</compile_context>

<pallas_src>
import functools
import math

import jax
import jax.numpy as jnp
import numpy as np
from jax.experimental import pallas as pl
from jax.experimental.pallas import tpu as pltpu

_LANE = 128
_SUBLANE = 8
_VMEM_BUDGET = 12 << 20      # double-buffered tiles + constants, < v5e default
_E_BYTES_CAP = 4 << 20       # constants are double-buffered: keep E modest
_SMALL_N_ELEMS = 1 << 15     # below this many output elems, pure JAX is faster


def _pos_enc_kernel(t_ref, e_ref, phase_ref, o_ref):
    """t_ref:(TILE,P) packed times; e_ref:(P,L) frequency-scaled expansion
    matrix (one nonzero power of two per column); phase_ref:(1,L) 0 or pi/2;
    o_ref:(TILE,L) packed embedding (single lane-dense full-tile store)."""
    scaled = jnp.dot(
        t_ref[...],
        e_ref[...],
        precision=jax.lax.Precision.HIGHEST,   # exact 2^i * t (see header)
        preferred_element_type=jnp.float32,
    )
    # TODO(synk): on v7x the sin polynomial (VALU), not HBM, is the binding
    # slot; a bounded-range sine would be ~2-3x cheaper but is only valid for
    # bounded t, so the general jnp.sin is kept for module-faithful semantics.
    o_ref[...] = jnp.sin(scaled + phase_ref[...]).astype(o_ref.dtype)


def _choose_r_pack(d, out_dim):
    """Smallest packing making l_w lane-dense; raise it to also make p_w
    lane-dense when that keeps p_w <= 128 and the expansion matrix small."""
    base = _LANE // math.gcd(out_dim, _LANE)     # l_w = r*out_dim % 128 == 0
    best = base
    m = 1
    while True:
        r = base * m
        p_w = r * d
        if p_w > _LANE:
            break
        if p_w % _LANE == 0 and p_w * (r * out_dim) * 4 <= _E_BYTES_CAP:
            best = r
            break
        m += 1
    return best


@functools.lru_cache(maxsize=None)
def _expansion_constants(t_channel, d, r_pack):
    """E[(P,L)] frequency-scaled expansion matrix and phase[(1,L)] (0 / pi/2)."""
    out_dim = 2 * t_channel * d
    p_w = r_pack * d
    l_w = r_pack * out_dim
    lane = np.arange(l_w)
    c = lane % out_dim                       # column within one original row
    band = c // (2 * d)                      # frequency index i
    is_cos = (c // d) % 2                    # 0 = sin block, 1 = cos block
    src = (lane // out_dim) * d + (c % d)    # packed input lane feeding lane
    e_mat = np.zeros((p_w, l_w), np.float32)
    e_mat[src, lane] = (2.0 ** band).astype(np.float32)   # exact powers of 2
    phase = (is_cos * (np.pi / 2.0)).astype(np.float32).reshape(1, l_w)
    return jnp.asarray(e_mat), jnp.asarray(phase)


def _choose_tile_rows(n_pack, p_w, l_w, e_bytes):
    row_bytes = 4 * (p_w + l_w)                       # in + out bytes per row
    const_bytes = 2 * (e_bytes + 4 * _SUBLANE * l_w)  # E + (sublane-padded) phase
    avail = max(_VMEM_BUDGET - const_bytes, 1 << 20)
    tile = avail // (2 * row_bytes)                   # double-buffered tiles
    tile = min(tile, pl.cdiv(n_pack, 4))              # >=4 grid steps if possible
    tile = max(_SUBLANE, (tile // _SUBLANE) * _SUBLANE)
    tile = min(tile, ((n_pack + _SUBLANE - 1) // _SUBLANE) * _SUBLANE)
    return int(tile)


def _positional_encoding_jax(t, t_channel):
    """Fused pure-JAX path (t already (..., d) float32)."""
    d = t.shape[-1]
    freqs = 2.0 ** jnp.arange(t_channel, dtype=jnp.float32)        # (C,)
    x = t[..., None, :] * freqs[:, None]                           # (..., C, d)
    emb = jnp.stack([jnp.sin(x), jnp.cos(x)], axis=-2)             # (..., C, 2, d)
    return emb.reshape(*t.shape[:-1], 2 * t_channel * d)


def positional_encoding(t, t_channel, *, tile_rows=None, force_kernel=False):
    """JAX/Pallas equivalent of PositionalEncoding(t_channel).forward(t)."""
    t = jnp.asarray(t, jnp.float32)
    if t.ndim == 1:
        t = t[:, None]                        # (B,) -> (B, 1)
    lead_shape = t.shape[:-1]
    d = int(t.shape[-1])
    out_dim = 2 * t_channel * d
    n = int(np.prod(lead_shape)) if lead_shape else 1

    r_pack = _choose_r_pack(d, out_dim)
    p_w = r_pack * d
    l_w = r_pack * out_dim
    e_bytes = p_w * l_w * 4

    # Small-N / degenerate-shape dispatch: kernel launch cannot pay off there.
    use_kernel = force_kernel or (
        n * out_dim >= _SMALL_N_ELEMS
        and e_bytes <= _E_BYTES_CAP
        and p_w <= 4 * _LANE)
    if not use_kernel:
        return _positional_encoding_jax(t, t_channel)

    t2d = t.reshape(n, d)
    n_pad = ((n + r_pack - 1) // r_pack) * r_pack
    if n_pad != n:
        # Callers supplying N as a multiple of r_pack avoid this pad and the
        # post-kernel row slice (an extra HBM copy of the output).
        t2d = jnp.pad(t2d, ((0, n_pad - n), (0, 0)))
    n_pack = n_pad // r_pack
    t_packed = t2d.reshape(n_pack, p_w)       # free row-major reshape

    e_mat, phase = _expansion_constants(t_channel, d, r_pack)

    if tile_rows is None:
        tile_rows = _choose_tile_rows(n_pack, p_w, l_w, e_bytes)
    else:
        tile_rows = max(_SUBLANE, (int(tile_rows) // _SUBLANE) * _SUBLANE)

    grid = (pl.cdiv(n_pack, tile_rows),)

    out_packed = pl.pallas_call(
        _pos_enc_kernel,
        out_shape=jax.ShapeDtypeStruct((n_pack, l_w), jnp.float32),
        grid=grid,
        in_specs=[
            pl.BlockSpec((tile_rows, p_w), lambda i: (i, 0)),
            pl.BlockSpec((p_w, l_w), lambda i: (0, 0)),
            pl.BlockSpec((1, l_w), lambda i: (0, 0)),
        ],
        out_specs=pl.BlockSpec((tile_rows, l_w), lambda i: (i, 0)),
        compiler_params=pltpu.CompilerParams(
            dimension_semantics=("parallel",)),
    )(t_packed, e_mat, phase)

    out = out_packed.reshape(n_pad, out_dim)  # free row-major reshape
    if n_pad != n:
        out = out[:n]                         # only emitted for ragged N
    return out.reshape(*lead_shape, out_dim)


def _reference(t, t_channel):
    """Pure-JAX reference mirroring the PyTorch module loop exactly."""
    t = jnp.asarray(t, jnp.float32)
    if t.ndim == 1:
        t = t[:, None]
    parts = []
    for i in range(t_channel):
        parts.append(jnp.sin((2.0 ** i) * t))
        parts.append(jnp.cos((2.0 ** i) * t))
    return jnp.concatenate(parts, axis=-1)


if __name__ == "__main__":
    key = jax.random.PRNGKey(0)
    k1, k2, k3 = jax.random.split(key, 3)
    t_channel = 4
    batch = 8

    # 1) Typical diffusion-time input (B,): small-N fused pure-JAX dispatch.
    t1 = jax.random.uniform(k1, (batch,), dtype=jnp.float32)
    ref1 = _reference(t1, t_channel)
    emb1 = jax.block_until_ready(positional_encoding(t1, t_channel))
    assert emb1.shape == (batch, 2 * t_channel), emb1.shape
    assert jnp.allclose(emb1, ref1, atol=1e-5, rtol=1e-5), "mismatch (small-N path)"

    # 2) Same tiny input forced through the Pallas kernel (padded packed row).
    emb2 = jax.block_until_ready(
        positional_encoding(t1[:, None], t_channel, force_kernel=True))
    assert jnp.allclose(emb2, ref1, atol=1e-5, rtol=1e-5), "mismatch (kernel, tiny)"

    # 3) Larger ragged N: lane-dense packing (r_pack=128), multi-step pipelined
    #    grid, padded tail row and post-kernel slice.
    n_big = 20003
    t3 = jax.random.uniform(k2, (n_big,), dtype=jnp.float32)
    emb3 = jax.block_until_ready(positional_encoding(t3, t_channel))
    ref3 = _reference(t3, t_channel)
    assert emb3.shape == (n_big, 2 * t_channel), emb3.shape
    assert jnp.allclose(emb3, ref3, atol=1e-5, rtol=1e-5), "mismatch (large N)"

    # 4) Multi-channel time input (B, D) with D > 1 (out_dim=18, r_pack=64).
    t4 = jax.random.uniform(k3, (6, 3), dtype=jnp.float32)
    emb4 = jax.block_until_ready(positional_encoding(t4, 3, force_kernel=True))
    ref4 = _reference(t4, 3)
    assert emb4.shape == (6, 2 * 3 * 3), emb4.shape
    assert jnp.allclose(emb4, ref4, atol=1e-5, rtol=1e-5), "mismatch (D>1)"

    print("KERNEL_OK")
</pallas_src>

<mosaic_0001>
module attributes {stable_mosaic.version = 11 : i64} {
  func.func @_pos_enc_kernel(%arg0: i32, %arg1: memref<8x128xf32, #tpu.memory_space<vmem>>, %arg2: memref<128x1024xf32, #tpu.memory_space<vmem>>, %arg3: memref<1x1024xf32, #tpu.memory_space<vmem>>, %arg4: memref<8x1024xf32, #tpu.memory_space<vmem>>) attributes {dimension_semantics = [#tpu.dimension_semantics<parallel>], iteration_bounds = array<i64: 1>, scalar_prefetch = 0 : i64, scratch_operands = 0 : i64, tpu.core_type = #tpu.core_type<tc>, window_params = [{transform_indices = @transform_0, window_bounds = array<i64: 8, 128>}, {pipeline_mode = #tpu.pipeline_mode<synchronous>, transform_indices = @transform_1, window_bounds = array<i64: 128, 1024>}, {pipeline_mode = #tpu.pipeline_mode<synchronous>, transform_indices = @transform_2, window_bounds = array<i64: 1, 1024>}, {transform_indices = @transform_3, window_bounds = array<i64: 8, 1024>}]} {
    %c0 = arith.constant 0 : index
    %c0_0 = arith.constant 0 : index
    %0 = vector.load %arg1[%c0, %c0_0] : memref<8x128xf32, #tpu.memory_space<vmem>>, vector<8x128xf32>
    %c0_1 = arith.constant 0 : index
    %c0_2 = arith.constant 0 : index
    %1 = vector.load %arg2[%c0_1, %c0_2] : memref<128x1024xf32, #tpu.memory_space<vmem>>, vector<128x1024xf32>
    %cst = arith.constant dense<0.000000e+00> : vector<8x1024xf32>
    %2 = tpu.matmul %0, %1, %cst {dimension_numbers = #tpu.dot_dimension_numbers<[1], [0], [0], [1], [0, 0, 1, 1], [], []>, precision = #tpu.contract_precision<fp32>} : vector<8x128xf32>, vector<128x1024xf32>, vector<8x1024xf32> -> vector<8x1024xf32>
    %c0_3 = arith.constant 0 : index
    %c0_4 = arith.constant 0 : index
    %3 = vector.load %arg3[%c0_3, %c0_4] : memref<1x1024xf32, #tpu.memory_space<vmem>>, vector<1x1024xf32>
    %4 = vector.broadcast %3 : vector<1x1024xf32> to vector<8x1024xf32>
    %5 = arith.addf %2, %4 : vector<8x1024xf32>
    %6 = math.sin %5 : vector<8x1024xf32>
    %c0_5 = arith.constant 0 : index
    %c0_6 = arith.constant 0 : index
    %7 = vector.load %arg4[%c0_5, %c0_6] : memref<8x1024xf32, #tpu.memory_space<vmem>>, vector<8x1024xf32>
    tpu.vector_store %arg4[%c0_5, %c0_6], %6 {strides = array<i32>} : memref<8x1024xf32, #tpu.memory_space<vmem>>, vector<8x1024xf32>,
    return
  }
  func.func @transform_0(%arg0: i32) -> (i32, i32) {
    %c0_i32 = arith.constant 0 : i32
    %c0_i32_0 = arith.constant 0 : i32
    return %arg0, %c0_i32 : i32, i32
  }
  func.func @transform_1(%arg0: i32) -> (i32, i32) {
    %c0_i32 = arith.constant 0 : i32
    %c0_i32_0 = arith.constant 0 : i32
    %c0_i32_1 = arith.constant 0 : i32
    return %c0_i32, %c0_i32_0 : i32, i32
  }
  func.func @transform_2(%arg0: i32) -> (i32, i32) {
    %c0_i32 = arith.constant 0 : i32
    %c0_i32_0 = arith.constant 0 : i32
    %c0_i32_1 = arith.constant 0 : i32
    return %c0_i32, %c0_i32_0 : i32, i32
  }
  func.func @transform_3(%arg0: i32) -> (i32, i32) {
    %c0_i32 = arith.constant 0 : i32
    %c0_i32_0 = arith.constant 0 : i32
    return %arg0, %c0_i32 : i32, i32
  }
}

</mosaic_0001>

<llo_original>
// kernel: tpu_custom_call.1
$region0: #{tpu_custom_call.1}
  #allocation0 [shape = 'u32[]', space=smem, size = 0x4, offset = 0x4, fixed_abs, tag = 'smem constant byte address 0x4 - core index']
  #allocation1 [shape = 'u32[144,128]{1,0:T(1,128)}', space=vmem, size = 0x12000, scoped, tag = 'internal scratch']
  %s0 = inlined_call_operand.hbm [shape: f32[1,128], index: 0, kind: input, shape index: {}]
  %s1 = inlined_call_operand.hbm [shape: f32[128,1024], index: 1, kind: input, shape index: {}]
  %s2 = inlined_call_operand.hbm [shape: f32[1,1024], index: 2, kind: input, shape index: {}]
  %s3 = inlined_call_operand.hbm [shape: f32[1,1024], index: 3, kind: output, shape index: {}]
  %s4 = sld [smem:[#allocation0]]
  $region34: #{tpu_custom_call.1} parent=0
    _
  %s6 = ssub.s32 1, %s4
  %s7 = scalar_select 0, %s6, %s4
  $region1: #{tpu_custom_call.1} parent=0
    #allocation2 [shape = 'u8[4096]{0}', space=vmem, size = 0x1000, scoped, tag = 'input window, operand 0, single buffered']
    #allocation3 [shape = 's32[1]{0}', space=sflag, size = 0x4, scoped, tag = 'scoped memory for tpu_custom_call.1']
    #allocation4 [shape = 's32[1]{0}', space=sflag, size = 0x4, scoped, tag = 'scoped memory for tpu_custom_call.1']
    #allocation5 [shape = 'u8[524288]{0}', space=vmem, size = 0x80000, scoped, tag = 'input window, operand 1, single buffered']
    #allocation6 [shape = 's32[1]{0}', space=sflag, size = 0x4, scoped, tag = 'scoped memory for tpu_custom_call.1']
    #allocation7 [shape = 'u8[4096]{0}', space=vmem, size = 0x1000, scoped, tag = 'input window, operand 2, single buffered']
    #allocation8 [shape = 'u8[32768]{0}', space=vmem, size = 0x8000, scoped, tag = 'output window, operand 0, single buffered']
    %8 = vsyncpa [#allocation3], 0
    %9 = vsyncpa [#allocation6], 0
    %10 = vsyncpa [#allocation4], 0
    // Predicated region
    $region2: #{tpu_custom_call.1} parent=1 // pred_check
      _
    $region3: #{tpu_custom_call.1} parent=1 // pred_check_branch
      %12 = sbr.rel (0) target = $region5
    $region4: #{tpu_custom_call.1} parent=1 // pred_region
      %s14 = ssub.s32 128, 16
      %15 = vsyncadd [#allocation3], %s14
      %s16 = sshll.u32 [#allocation2], 4
      %s17 = int_to_ptr.vmem [resolvable:$true] %s16
      %22 = dma.hbm_to_vmem [thread:$0]  %s0, 16, %s17, [#allocation3], 16, 16, 1
    $region5: #{tpu_custom_call.1} parent=1 // pred_fallthru
      _
    // Predicated region
    $region6: #{tpu_custom_call.1} parent=1 // pred_check
      _
    $region7: #{tpu_custom_call.1} parent=1 // pred_check_branch
      %24 = sbr.rel (0) target = $region9
    $region8: #{tpu_custom_call.1} parent=1 // pred_region
      %s26 = ssub.s32 16384, 16384
      %27 = vsyncadd [#allocation6], %s26
      %s28 = sshll.u32 [#allocation5], 4
      %s29 = int_to_ptr.vmem [resolvable:$true] %s28
      %34 = dma.hbm_to_vmem [thread:$0]  %s1, 16384, %s29, [#allocation6], 1024, 1024, 64
    $region9: #{tpu_custom_call.1} parent=1 // pred_fallthru
      _
    // Predicated region
    $region10: #{tpu_custom_call.1} parent=1 // pred_check
      _
    $region11: #{tpu_custom_call.1} parent=1 // pred_check_branch
      %36 = sbr.rel (0) target = $region13
    $region12: #{tpu_custom_call.1} parent=1 // pred_region
      %s38 = ssub.s32 128, 128
      %39 = vsyncadd [#allocation6], %s38
      %s41 = sshll.u32 [#allocation7], 4
      %s42 = int_to_ptr.vmem [resolvable:$true] %s41
      %44 = dma.hbm_to_vmem [thread:$0]  %s2, 128, %s42, [#allocation6]
    $region13: #{tpu_custom_call.1} parent=1 // pred_fallthru
      _
    // Predicated region
    $region14: #{tpu_custom_call.1} parent=1 // pred_check
      _
    $region15: #{tpu_custom_call.1} parent=1 // pred_check_branch
      %46 = sbr.rel (0) target = $region17
    $region16: #{tpu_custom_call.1} parent=1 // pred_region
      %47 = dma.done [#allocation3], 128
    $region17: #{tpu_custom_call.1} parent=1 // pred_fallthru
      _
    // Predicated region
    $region18: #{tpu_custom_call.1} parent=1 // pred_check
      _
    $region19: #{tpu_custom_call.1} parent=1 // pred_check_branch
      %49 = sbr.rel (0) target = $region21
    $region20: #{tpu_custom_call.1} parent=1 // pred_region
      %50 = dma.done [#allocation6], 16384
    $region21: #{tpu_custom_call.1} parent=1 // pred_fallthru
      _
    // Predicated region
    $region22: #{tpu_custom_call.1} parent=1 // pred_check
      _
    $region23: #{tpu_custom_call.1} parent=1 // pred_check_branch
      %52 = sbr.rel (0) target = $region25
    $region24: #{tpu_custom_call.1} parent=1 // pred_region
      %53 = dma.done [#allocation6], 128
    $region25: #{tpu_custom_call.1} parent=1 // pred_fallthru
      _
    %v54 = vld [vmem:[#allocation2] sm:$0xff]
    %v55 = vld [vmem:[#allocation5] sm:$0xff]
    %v56 = vld [vmem:[#allocation5 + $0x8] sm:$0xff]
    %v57 = vld [vmem:[#allocation5 + $0x10] sm:$0xff]
    %v58 = vld [vmem:[#allocation5 + $0x18] sm:$0xff]
    %v59 = vld [vmem:[#allocation5 + $0x20] sm:$0xff]
    %v60 = vld [vmem:[#allocation5 + $0x28] sm:$0xff]
    %v61 = vld [vmem:[#allocation5 + $0x30] sm:$0xff]
    %v62 = vld [vmem:[#allocation5 + $0x38] sm:$0xff]
    %v63 = vld [vmem:[#allocation5 + $0x40] sm:$0xff]
    %v64 = vld [vmem:[#allocation5 + $0x48] sm:$0xff]
    %v65 = vld [vmem:[#allocation5 + $0x50] sm:$0xff]
    %v66 = vld [vmem:[#allocation5 + $0x58] sm:$0xff]
    %v67 = vld [vmem:[#allocation5 + $0x60] sm:$0xff]
    %v68 = vld [vmem:[#allocation5 + $0x68] sm:$0xff]
    %v69 = vld [vmem:[#allocation5 + $0x70] sm:$0xff]
    %v70 = vld [vmem:[#allocation5 + $0x78] sm:$0xff]
    %v71 = vld [vmem:[#allocation5 + $0x80] sm:$0xff]
    %v72 = vld [vmem:[#allocation5 + $0x88] sm:$0xff]
    %v73 = vld [vmem:[#allocation5 + $0x90] sm:$0xff]
    %v74 = vld [vmem:[#allocation5 + $0x98] sm:$0xff]
    %v75 = vld [vmem:[#allocation5 + $0xa0] sm:$0xff]
    %v76 = vld [vmem:[#allocation5 + $0xa8] sm:$0xff]
    %v77 = vld [vmem:[#allocation5 + $0xb0] sm:$0xff]
    %v78 = vld [vmem:[#allocation5 + $0xb8] sm:$0xff]
    %v79 = vld [vmem:[#allocation5 + $0xc0] sm:$0xff]
    %v80 = vld [vmem:[#allocation5 + $0xc8] sm:$0xff]
    %v81 = vld [vmem:[#allocation5 + $0xd0] sm:$0xff]
    %v82 = vld [vmem:[#allocation5 + $0xd8] sm:$0xff]
    %v83 = vld [vmem:[#allocation5 + $0xe0] sm:$0xff]
    %v84 = vld [vmem:[#allocation5 + $0xe8] sm:$0xff]
    %v85 = vld [vmem:[#allocation5 + $0xf0] sm:$0xff]
    %v86 = vld [vmem:[#allocation5 + $0xf8] sm:$0xff]
    %v87 = vld [vmem:[#allocation5 + $0x100] sm:$0xff]
    %v88 = vld [vmem:[#allocation5 + $0x108] sm:$0xff]
    %v89 = vld [vmem:[#allocation5 + $0x110] sm:$0xff]
    %v90 = vld [vmem:[#allocation5 + $0x118] sm:$0xff]
    %v91 = vld [vmem:[#allocation5 + $0x120] sm:$0xff]
    %v92 = vld [vmem:[#allocation5 + $0x128] sm:$0xff]
    %v93 = vld [vmem:[#allocation5 + $0x130] sm:$0xff]
    %v94 = vld [vmem:[#allocation5 + $0x138] sm:$0xff]
    %v95 = vld [vmem:[#allocation5 + $0x140] sm:$0xff]
    %v96 = vld [vmem:[#allocation5 + $0x148] sm:$0xff]
    %v97 = vld [vmem:[#allocation5 + $0x150] sm:$0xff]
    %v98 = vld [vmem:[#allocation5 + $0x158] sm:$0xff]
    %v99 = vld [vmem:[#allocation5 + $0x160] sm:$0xff]
    %v100 = vld [vmem:[#allocation5 + $0x168] sm:$0xff]
    %v101 = vld [vmem:[#allocation5 + $0x170] sm:$0xff]
    %v102 = vld [vmem:[#allocation5 + $0x178] sm:$0xff]
    %v103 = vld [vmem:[#allocation5 + $0x180] sm:$0xff]
    %v104 = vld [vmem:[#allocation5 + $0x188] sm:$0xff]
    %v105 = vld [vmem:[#allocation5 + $0x190] sm:$0xff]
    %v106 = vld [vmem:[#allocation5 + $0x198] sm:$0xff]
    %v107 = vld [vmem:[#allocation5 + $0x1a0] sm:$0xff]
    %v108 = vld [vmem:[#allocation5 + $0x1a8] sm:$0xff]
    %v109 = vld [vmem:[#allocation5 + $0x1b0] sm:$0xff]
    %v110 = vld [vmem:[#allocation5 + $0x1b8] sm:$0xff]
    %v111 = vld [vmem:[#allocation5 + $0x1c0] sm:$0xff]
    %v112 = vld [vmem:[#allocation5 + $0x1c8] sm:$0xff]
    %v113 = vld [vmem:[#allocation5 + $0x1d0] sm:$0xff]
    %v114 = vld [vmem:[#allocation5 + $0x1d8] sm:$0xff]
    %v115 = vld [vmem:[#allocation5 + $0x1e0] sm:$0xff]
    %v116 = vld [vmem:[#allocation5 + $0x1e8] sm:$0xff]
    %v117 = vld [vmem:[#allocation5 + $0x1f0] sm:$0xff]
    %v118 = vld [vmem:[#allocation5 + $0x1f8] sm:$0xff]
    %v119 = vld [vmem:[#allocation5 + $0x200] sm:$0xff]
    %v120 = vld [vmem:[#allocation5 + $0x208] sm:$0xff]
    %v121 = vld [vmem:[#allocation5 + $0x210] sm:$0xff]
    %v122 = vld [vmem:[#allocation5 + $0x218] sm:$0xff]
    %v123 = vld [vmem:[#allocation5 + $0x220] sm:$0xff]
    %v124 = vld [vmem:[#allocation5 + $0x228] sm:$0xff]
    %v125 = vld [vmem:[#allocation5 + $0x230] sm:$0xff]
    %v126 = vld [vmem:[#allocation5 + $0x238] sm:$0xff]
    %v127 = vld [vmem:[#allocation5 + $0x240] sm:$0xff]
    %v128 = vld [vmem:[#allocation5 + $0x248] sm:$0xff]
    %v129 = vld [vmem:[#allocation5 + $0x250] sm:$0xff]
    %v130 = vld [vmem:[#allocation5 + $0x258] sm:$0xff]
    %v131 = vld [vmem:[#allocation5 + $0x260] sm:$0xff]
    %v132 = vld [vmem:[#allocation5 + $0x268] sm:$0xff]
    %v133 = vld [vmem:[#allocation5 + $0x270] sm:$0xff]
    %v134 = vld [vmem:[#allocation5 + $0x278] sm:$0xff]
    %v135 = vld [vmem:[#allocation5 + $0x280] sm:$0xff]
    %v136 = vld [vmem:[#allocation5 + $0x288] sm:$0xff]
    %v137 = vld [vmem:[#allocation5 + $0x290] sm:$0xff]
    %v138 = vld [vmem:[#allocation5 + $0x298] sm:$0xff]
    %v139 = vld [vmem:[#allocation5 + $0x2a0] sm:$0xff]
    %v140 = vld [vmem:[#allocation5 + $0x2a8] sm:$0xff]
    %v141 = vld [vmem:[#allocation5 + $0x2b0] sm:$0xff]
    %v142 = vld [vmem:[#allocation5 + $0x2b8] sm:$0xff]
    %v143 = vld [vmem:[#allocation5 + $0x2c0] sm:$0xff]
    %v144 = vld [vmem:[#allocation5 + $0x2c8] sm:$0xff]
    %v145 = vld [vmem:[#allocation5 + $0x2d0] sm:$0xff]
    %v146 = vld [vmem:[#allocation5 + $0x2d8] sm:$0xff]
    %v147 = vld [vmem:[#allocation5 + $0x2e0] sm:$0xff]
    %v148 = vld [vmem:[#allocation5 + $0x2e8] sm:$0xff]
    %v149 = vld [vmem:[#allocation5 + $0x2f0] sm:$0xff]
    %v150 = vld [vmem:[#allocation5 + $0x2f8] sm:$0xff]
    %v151 = vld [vmem:[#allocation5 + $0x300] sm:$0xff]
    %v152 = vld [vmem:[#allocation5 + $0x308] sm:$0xff]
    %v153 = vld [vmem:[#allocation5 + $0x310] sm:$0xff]
    %v154 = vld [vmem:[#allocation5 + $0x318] sm:$0xff]
    %v155 = vld [vmem:[#allocation5 + $0x320] sm:$0xff]
    %v156 = vld [vmem:[#allocation5 + $0x328] sm:$0xff]
    %v157 = vld [vmem:[#allocation5 + $0x330] sm:$0xff]
    %v158 = vld [vmem:[#allocation5 + $0x338] sm:$0xff]
    %v159 = vld [vmem:[#allocation5 + $0x340] sm:$0xff]
    %v160 = vld [vmem:[#allocation5 + $0x348] sm:$0xff]
    %v161 = vld [vmem:[#allocation5 + $0x350] sm:$0xff]
    %v162 = vld [vmem:[#allocation5 + $0x358] sm:$0xff]
    %v163 = vld [vmem:[#allocation5 + $0x360] sm:$0xff]
    %v164 = vld [vmem:[#allocation5 + $0x368] sm:$0xff]
    %v165 = vld [vmem:[#allocation5 + $0x370] sm:$0xff]
    %v166 = vld [vmem:[#allocation5 + $0x378] sm:$0xff]
    %v167 = vld [vmem:[#allocation5 + $0x380] sm:$0xff]
    %v168 = vld [vmem:[#allocation5 + $0x388] sm:$0xff]
    %v169 = vld [vmem:[#allocation5 + $0x390] sm:$0xff]
    %v170 = vld [vmem:[#allocation5 + $0x398] sm:$0xff]
    %v171 = vld [vmem:[#allocation5 + $0x3a0] sm:$0xff]
    %v172 = vld [vmem:[#allocation5 + $0x3a8] sm:$0xff]
    %v173 = vld [vmem:[#allocation5 + $0x3b0] sm:$0xff]
    %v174 = vld [vmem:[#allocation5 + $0x3b8] sm:$0xff]
    %v175 = vld [vmem:[#allocation5 + $0x3c0] sm:$0xff]
    %v176 = vld [vmem:[#allocation5 + $0x3c8] sm:$0xff]
    %v177 = vld [vmem:[#allocation5 + $0x3d0] sm:$0xff]
    %v178 = vld [vmem:[#allocation5 + $0x3d8] sm:$0xff]
    %v179 = vld [vmem:[#allocation5 + $0x3e0] sm:$0xff]
    %v180 = vld [vmem:[#allocation5 + $0x3e8] sm:$0xff]
    %v181 = vld [vmem:[#allocation5 + $0x3f0] sm:$0xff]
    %v182 = vld [vmem:[#allocation5 + $0x3f8] sm:$0xff]
    %v183 = vld [vmem:[#allocation7] sm:$0xff]
    %v185 = vlaneseq
    %v186 = vshrl.u32 %v185, 7
    %v187 = vsub.s32 0, %v186
    %v188 = vrot.slane %v183, %v187
    %v189 = vlaneseq
    %v190 = vshrl.u32 %v189, 7
    %v191 = vsub.s32 1, %v190
    %v192 = vrot.slane %v183, %v191
    %v193 = vlaneseq
    %v194 = vshrl.u32 %v193, 7
    %v195 = vsub.s32 2, %v194
    %v196 = vrot.slane %v183, %v195
    %v197 = vlaneseq
    %v198 = vshrl.u32 %v197, 7
    %v199 = vsub.s32 3, %v198
    %v200 = vrot.slane %v183, %v199
    %v201 = vlaneseq
    %v202 = vshrl.u32 %v201, 7
    %v203 = vsub.s32 4, %v202
    %v204 = vrot.slane %v183, %v203
    %v205 = vlaneseq
    %v206 = vshrl.u32 %v205, 7
    %v207 = vsub.s32 5, %v206
    %v208 = vrot.slane %v183, %v207
    %v209 = vlaneseq
    %v210 = vshrl.u32 %v209, 7
    %v211 = vsub.s32 6, %v210
    %v212 = vrot.slane %v183, %v211
    %v213 = vlaneseq
    %v214 = vshrl.u32 %v213, 7
    %v215 = vsub.s32 7, %v214
    %v216 = vrot.slane %v183, %v215
    %v225 = vand.u32 %v176, 4294901760
    %226 = vmatprep.subr.mxu0 %v225
    %v227 = vand.u32 %v175, 4294901760
    %228 = vmatpush1.msra.mxu0 %v227
    %v229 = vand.u32 %v168, 4294901760
    %230 = vmatprep.subr.mxu0 %v229
    %v231 = vand.u32 %v167, 4294901760
    %232 = vmatpush1.msra.mxu0 %v231
    %v233 = vand.u32 %v160, 4294901760
    %234 = vmatprep.subr.mxu0 %v233
    %v235 = vand.u32 %v159, 4294901760
    %236 = vmatpush1.msra.mxu0 %v235
    %v237 = vand.u32 %v152, 4294901760
    %238 = vmatprep.subr.mxu0 %v237
    %v239 = vand.u32 %v151, 4294901760
    %240 = vmatpush1.msra.mxu0 %v239
    %v241 = vand.u32 %v144, 4294901760
    %242 = vmatprep.subr.mxu0 %v241
    %v243 = vand.u32 %v143, 4294901760
    %244 = vmatpush1.msra.mxu0 %v243
    %v245 = vand.u32 %v136, 4294901760
    %246 = vmatprep.subr.mxu0 %v245
    %v247 = vand.u32 %v135, 4294901760
    %248 = vmatpush1.msra.mxu0 %v247
    %v249 = vand.u32 %v128, 4294901760
    %250 = vmatprep.subr.mxu0 %v249
    %v251 = vand.u32 %v127, 4294901760
    %252 = vmatpush1.msra.mxu0 %v251
    %v253 = vand.u32 %v120, 4294901760
    %254 = vmatprep.subr.mxu0 %v253
    %v255 = vand.u32 %v119, 4294901760
    %256 = vmatpush1.msra.mxu0 %v255
    %v257 = vand.u32 %v112, 4294901760
    %258 = vmatprep.subr.mxu0 %v257
    %v259 = vand.u32 %v111, 4294901760
    %260 = vmatpush1.msra.mxu0 %v259
    %v261 = vand.u32 %v104, 4294901760
    %262 = vmatprep.subr.mxu0 %v261
    %v263 = vand.u32 %v103, 4294901760
    %264 = vmatpush1.msra.mxu0 %v263
    %v265 = vand.u32 %v96, 4294901760
    %266 = vmatprep.subr.mxu0 %v265
    %v267 = vand.u32 %v95, 4294901760
    %268 = vmatpush1.msra.mxu0 %v267
    %v269 = vand.u32 %v88, 4294901760
    %270 = vmatprep.subr.mxu0 %v269
    %v271 = vand.u32 %v87, 4294901760
    %272 = vmatpush1.msra.mxu0 %v271
    %v273 = vand.u32 %v80, 4294901760
    %274 = vmatprep.subr.mxu0 %v273
    %v275 = vand.u32 %v79, 4294901760
    %276 = vmatpush1.msra.mxu0 %v275
    %v277 = vand.u32 %v72, 4294901760
    %278 = vmatprep.subr.mxu0 %v277
    %v279 = vand.u32 %v71, 4294901760
    %280 = vmatpush1.msra.mxu0 %v279
    %v281 = vand.u32 %v64, 4294901760
    %282 = vmatprep.subr.mxu0 %v281
    %v283 = vand.u32 %v63, 4294901760
    %284 = vmatpush1.msra.mxu0 %v283
    %v285 = vand.u32 %v56, 4294901760
    %286 = vmatprep.subr.mxu0 %v285
    %v287 = vand.u32 %v55, 4294901760
    %288 = vmatpush1.msra.mxu0 %v287
    %289 = vmatprep.subr.mxu0 0.0
    %290 = vmatpush2.msra.mxu0 0.0
    %291 = vmatprep.subr.mxu0 0.0
    %292 = vmatpush2.msra.mxu0 0.0
    %293 = vmatprep.subr.mxu0 0.0
    %294 = vmatpush2.msra.mxu0 0.0
    %295 = vmatprep.subr.mxu0 0.0
    %296 = vmatpush2.msra.mxu0 0.0
    %297 = vmatprep.subr.mxu0 0.0
    %298 = vmatpush2.msra.mxu0 0.0
    %299 = vmatprep.subr.mxu0 0.0
    %300 = vmatpush2.msra.mxu0 0.0
    %301 = vmatprep.subr.mxu0 0.0
    %302 = vmatpush2.msra.mxu0 0.0
    %303 = vmatprep.subr.mxu0 0.0
    %304 = vmatpush2.msra.mxu0 0.0
    %305 = vmatprep.subr.mxu0 0.0
    %306 = vmatpush2.msra.mxu0 0.0
    %307 = vmatprep.subr.mxu0 0.0
    %308 = vmatpush2.msra.mxu0 0.0
    %309 = vmatprep.subr.mxu0 0.0
    %310 = vmatpush2.msra.mxu0 0.0
    %311 = vmatprep.subr.mxu0 0.0
    %312 = vmatpush2.msra.mxu0 0.0
    %313 = vmatprep.subr.mxu0 0.0
    %314 = vmatpush2.msra.mxu0 0.0
    %315 = vmatprep.subr.mxu0 0.0
    %316 = vmatpush2.msra.mxu0 0.0
    %317 = vmatprep.subr.mxu0 0.0
    %318 = vmatpush2.msra.mxu0 0.0
    %319 = vmatprep.subr.mxu0 0.0
    %320 = vmatpush2.msra.mxu0 0.0
    %321 = vmatprep.mubr.f32.mxu0 0.0
    %v322 = vand.u32 %v54, 4294901760
    %v323 = vsub.f32 %v54, %v322
    %v324 = vand.u32 %v323, 4294901760
    %v325 = vsub.f32 %v323, %v324
    %v326 = vand.u32 %v325, 4294901760
    %327 = vmatmul.mubr.f32.gmra.mxu0 %v326
    %v328 = vpop.f32.mrf.mxu0
    %v329 = vadd.f32 %v188, %v328
    %v330 = vpop.f32.mrf.mxu0
    %v331 = vadd.f32 %v192, %v330
    %332 = vdwg.mxu0
    %v333 = vand.u32 %v176, 4294901760
    %v334 = vsub.f32 %v176, %v333
    %v335 = vand.u32 %v334, 4294901760
    %v336 = vsub.f32 %v334, %v335
    %v337 = vand.u32 %v336, 4294901760
    %338 = vmatprep.subr.mxu0 %v337
    %v339 = vand.u32 %v175, 4294901760
    %v340 = vsub.f32 %v175, %v339
    %v341 = vand.u32 %v340, 4294901760
    %v342 = vsub.f32 %v340, %v341
    %v343 = vand.u32 %v342, 4294901760
    %344 = vmatpush1.msra.mxu0 %v343
    %v345 = vand.u32 %v168, 4294901760
    %v346 = vsub.f32 %v168, %v345
    %v347 = vand.u32 %v346, 4294901760
    %v348 = vsub.f32 %v346, %v347
    %v349 = vand.u32 %v348, 4294901760
    %350 = vmatprep.subr.mxu0 %v349
    %v351 = vand.u32 %v167, 4294901760
    %v352 = vsub.f32 %v167, %v351
    %v353 = vand.u32 %v352, 4294901760
    %v354 = vsub.f32 %v352, %v353
    %v355 = vand.u32 %v354, 4294901760
    %356 = vmatpush1.msra.mxu0 %v355
    %v357 = vand.u32 %v160, 4294901760
    %v358 = vsub.f32 %v160, %v357
    %v359 = vand.u32 %v358, 4294901760
    %v360 = vsub.f32 %v358, %v359
    %v361 = vand.u32 %v360, 4294901760
    %362 = vmatprep.subr.mxu0 %v361
    %v363 = vand.u32 %v159, 4294901760
    %v364 = vsub.f32 %v159, %v363
    %v365 = vand.u32 %v364, 4294901760
    %v366 = vsub.f32 %v364, %v365
    %v367 = vand.u32 %v366, 4294901760
    %368 = vmatpush1.msra.mxu0 %v367
    %v369 = vand.u32 %v152, 4294901760
    %v370 = vsub.f32 %v152, %v369
    %v371 = vand.u32 %v370, 4294901760
    %v372 = vsub.f32 %v370, %v371
    %v373 = vand.u32 %v372, 4294901760
    %374 = vmatprep.subr.mxu0 %v373
    %v375 = vand.u32 %v151, 4294901760
    %v376 = vsub.f32 %v151, %v375
    %v377 = vand.u32 %v376, 4294901760
    %v378 = vsub.f32 %v376, %v377
    %v379 = vand.u32 %v378, 4294901760
    %380 = vmatpush1.msra.mxu0 %v379
    %v381 = vand.u32 %v144, 4294901760
    %v382 = vsub.f32 %v144, %v381
    %v383 = vand.u32 %v382, 4294901760
    %v384 = vsub.f32 %v382, %v383
    %v385 = vand.u32 %v384, 4294901760
    %386 = vmatprep.subr.mxu0 %v385
    %v387 = vand.u32 %v143, 4294901760
    %v388 = vsub.f32 %v143, %v387
    %v389 = vand.u32 %v388, 4294901760
    %v390 = vsub.f32 %v388, %v389
    %v391 = vand.u32 %v390, 4294901760
    %392 = vmatpush1.msra.mxu0 %v391
    %v393 = vand.u32 %v136, 4294901760
    %v394 = vsub.f32 %v136, %v393
    %v395 = vand.u32 %v394, 4294901760
    %v396 = vsub.f32 %v394, %v395
    %v397 = vand.u32 %v396, 4294901760
    %398 = vmatprep.subr.mxu0 %v397
    %v399 = vand.u32 %v135, 4294901760
    %v400 = vsub.f32 %v135, %v399
    %v401 = vand.u32 %v400, 4294901760
    %v402 = vsub.f32 %v400, %v401
    %v403 = vand.u32 %v402, 4294901760
    %404 = vmatpush1.msra.mxu0 %v403
    %v405 = vand.u32 %v128, 4294901760
    %v406 = vsub.f32 %v128, %v405
    %v407 = vand.u32 %v406, 4294901760
    %v408 = vsub.f32 %v406, %v407
    %v409 = vand.u32 %v408, 4294901760
    %410 = vmatprep.subr.mxu0 %v409
    %v411 = vand.u32 %v127, 4294901760
    %v412 = vsub.f32 %v127, %v411
    %v413 = vand.u32 %v412, 4294901760
    %v414 = vsub.f32 %v412, %v413
    %v415 = vand.u32 %v414, 4294901760
    %416 = vmatpush1.msra.mxu0 %v415
    %v417 = vand.u32 %v120, 4294901760
    %v418 = vsub.f32 %v120, %v417
    %v419 = vand.u32 %v418, 4294901760
    %v420 = vsub.f32 %v418, %v419
    %v421 = vand.u32 %v420, 4294901760
    %422 = vmatprep.subr.mxu0 %v421
    %v423 = vand.u32 %v119, 4294901760
    %v424 = vsub.f32 %v119, %v423
    %v425 = vand.u32 %v424, 4294901760
    %v426 = vsub.f32 %v424, %v425
    %v427 = vand.u32 %v426, 4294901760
    %428 = vmatpush1.msra.mxu0 %v427
    %v429 = vand.u32 %v112, 4294901760
    %v430 = vsub.f32 %v112, %v429
    %v431 = vand.u32 %v430, 4294901760
    %v432 = vsub.f32 %v430, %v431
    %v433 = vand.u32 %v432, 4294901760
    %434 = vmatprep.subr.mxu0 %v433
    %v435 = vand.u32 %v111, 4294901760
    %v436 = vsub.f32 %v111, %v435
    %v437 = vand.u32 %v436, 4294901760
    %v438 = vsub.f32 %v436, %v437
    %v439 = vand.u32 %v438, 4294901760
    %440 = vmatpush1.msra.mxu0 %v439
    %v441 = vand.u32 %v104, 4294901760
    %v442 = vsub.f32 %v104, %v441
    %v443 = vand.u32 %v442, 4294901760
    %v444 = vsub.f32 %v442, %v443
    %v445 = vand.u32 %v444, 4294901760
    %446 = vmatprep.subr.mxu0 %v445
    %v447 = vand.u32 %v103, 4294901760
    %v448 = vsub.f32 %v103, %v447
    %v449 = vand.u32 %v448, 4294901760
    %v450 = vsub.f32 %v448, %v449
    %v451 = vand.u32 %v450, 4294901760
    %452 = vmatpush1.msra.mxu0 %v451
    %v453 = vand.u32 %v96, 4294901760
    %v454 = vsub.f32 %v96, %v453
    %v455 = vand.u32 %v454, 4294901760
    %v456 = vsub.f32 %v454, %v455
    %v457 = vand.u32 %v456, 4294901760
    %458 = vmatprep.subr.mxu0 %v457
    %v459 = vand.u32 %v95, 4294901760
    %v460 = vsub.f32 %v95, %v459
    %v461 = vand.u32 %v460, 4294901760
    %v462 = vsub.f32 %v460, %v461
    %v463 = vand.u32 %v462, 4294901760
    %464 = vmatpush1.msra.mxu0 %v463
    %v465 = vand.u32 %v88, 4294901760
    %v466 = vsub.f32 %v88, %v465
    %v467 = vand.u32 %v466, 4294901760
    %v468 = vsub.f32 %v466, %v467
    %v469 = vand.u32 %v468, 4294901760
    %470 = vmatprep.subr.mxu0 %v469
    %v471 = vand.u32 %v87, 4294901760
    %v472 = vsub.f32 %v87, %v471
    %v473 = vand.u32 %v472, 4294901760
    %v474 = vsub.f32 %v472, %v473
    %v475 = vand.u32 %v474, 4294901760
    %476 = vmatpush1.msra.mxu0 %v475
    %v477 = vand.u32 %v80, 4294901760
    %v478 = vsub.f32 %v80, %v477
    %v479 = vand.u32 %v478, 4294901760
    %v480 = vsub.f32 %v478, %v479
    %v481 = vand.u32 %v480, 4294901760
    %482 = vmatprep.subr.mxu0 %v481
    %v483 = vand.u32 %v79, 4294901760
    %v484 = vsub.f32 %v79, %v483
    %v485 = vand.u32 %v484, 4294901760
    %v486 = vsub.f32 %v484, %v485
    %v487 = vand.u32 %v486, 4294901760
    %488 = vmatpush1.msra.mxu0 %v487
    %v489 = vand.u32 %v72, 4294901760
    %v490 = vsub.f32 %v72, %v489
    %v491 = vand.u32 %v490, 4294901760
    %v492 = vsub.f32 %v490, %v491
    %v493 = vand.u32 %v492, 4294901760
    %494 = vmatprep.subr.mxu0 %v493
    %v495 = vand.u32 %v71, 4294901760
    %v496 = vsub.f32 %v71, %v495
    %v497 = vand.u32 %v496, 4294901760
    %v498 = vsub.f32 %v496, %v497
    %v499 = vand.u32 %v498, 4294901760
    %500 = vmatpush1.msra.mxu0 %v499
    %v501 = vand.u32 %v64, 4294901760
    %v502 = vsub.f32 %v64, %v501
    %v503 = vand.u32 %v502, 4294901760
    %v504 = vsub.f32 %v502, %v503
    %v505 = vand.u32 %v504, 4294901760
    %506 = vmatprep.subr.mxu0 %v505
    %v507 = vand.u32 %v63, 4294901760
    %v508 = vsub.f32 %v63, %v507
    %v509 = vand.u32 %v508, 4294901760
    %v510 = vsub.f32 %v508, %v509
    %v511 = vand.u32 %v510, 4294901760
    %512 = vmatpush1.msra.mxu0 %v511
    %v513 = vand.u32 %v56, 4294901760
    %v514 = vsub.f32 %v56, %v513
    %v515 = vand.u32 %v514, 4294901760
    %v516 = vsub.f32 %v514, %v515
    %v517 = vand.u32 %v516, 4294901760
    %518 = vmatprep.subr.mxu0 %v517
    %v519 = vand.u32 %v55, 4294901760
    %v520 = vsub.f32 %v55, %v519
    %v521 = vand.u32 %v520, 4294901760
    %v522 = vsub.f32 %v520, %v521
    %v523 = vand.u32 %v522, 4294901760
    %524 = vmatpush1.msra.mxu0 %v523
    %525 = vmatprep.subr.mxu0 0.0
    %526 = vmatpush2.msra.mxu0 0.0
    %527 = vmatprep.subr.mxu0 0.0
    %528 = vmatpush2.msra.mxu0 0.0
    %529 = vmatprep.subr.mxu0 0.0
    %530 = vmatpush2.msra.mxu0 0.0
    %531 = vmatprep.subr.mxu0 0.0
    %532 = vmatpush2.msra.mxu0 0.0
    %533 = vmatprep.subr.mxu0 0.0
    %534 = vmatpush2.msra.mxu0 0.0
    %535 = vmatprep.subr.mxu0 0.0
    %536 = vmatpush2.msra.mxu0 0.0
    %537 = vmatprep.subr.mxu0 0.0
    %538 = vmatpush2.msra.mxu0 0.0
    %539 = vmatprep.subr.mxu0 0.0
    %540 = vmatpush2.msra.mxu0 0.0
    %541 = vmatprep.subr.mxu0 0.0
    %542 = vmatpush2.msra.mxu0 0.0
    %543 = vmatprep.subr.mxu0 0.0
    %544 = vmatpush2.msra.mxu0 0.0
    %545 = vmatprep.subr.mxu0 0.0
    %546 = vmatpush2.msra.mxu0 0.0
    %547 = vmatprep.subr.mxu0 0.0
    %548 = vmatpush2.msra.mxu0 0.0
    %549 = vmatprep.subr.mxu0 0.0
    %550 = vmatpush2.msra.mxu0 0.0
    %551 = vmatprep.subr.mxu0 0.0
    %552 = vmatpush2.msra.mxu0 0.0
    %553 = vmatprep.subr.mxu0 0.0
    %554 = vmatpush2.msra.mxu0 0.0
    %555 = vmatprep.subr.mxu0 0.0
    %556 = vmatpush2.msra.mxu0 0.0
    %557 = vmatprep.mubr.f32.mxu0 0.0
    %v558 = vand.u32 %v54, 4294901760
    %559 = vmatmul.mubr.f32.gmra.mxu0 %v558
    %v560 = vpop.f32.mrf.mxu0
    %v561 = vadd.f32 %v329, %v560
    %v562 = vpop.f32.mrf.mxu0
    %v563 = vadd.f32 %v331, %v562
    %564 = vdwg.mxu0
    %v565 = vand.u32 %v176, 4294901760
    %v566 = vsub.f32 %v176, %v565
    %567 = vmatprep.subr.mxu0 %v566
    %v568 = vand.u32 %v175, 4294901760
    %v569 = vsub.f32 %v175, %v568
    %570 = vmatpush1.msra.mxu0 %v569
    %v571 = vand.u32 %v168, 4294901760
    %v572 = vsub.f32 %v168, %v571
    %573 = vmatprep.subr.mxu0 %v572
    %v574 = vand.u32 %v167, 4294901760
    %v575 = vsub.f32 %v167, %v574
    %576 = vmatpush1.msra.mxu0 %v575
    %v577 = vand.u32 %v160, 4294901760
    %v578 = vsub.f32 %v160, %v577
    %579 = vmatprep.subr.mxu0 %v578
    %v580 = vand.u32 %v159, 4294901760
    %v581 = vsub.f32 %v159, %v580
    %582 = vmatpush1.msra.mxu0 %v581
    %v583 = vand.u32 %v152, 4294901760
    %v584 = vsub.f32 %v152, %v583
    %585 = vmatprep.subr.mxu0 %v584
    %v586 = vand.u32 %v151, 4294901760
    %v587 = vsub.f32 %v151, %v586
    %588 = vmatpush1.msra.mxu0 %v587
    %v589 = vand.u32 %v144, 4294901760
    %v590 = vsub.f32 %v144, %v589
    %591 = vmatprep.subr.mxu0 %v590
    %v592 = vand.u32 %v143, 4294901760
    %v593 = vsub.f32 %v143, %v592
    %594 = vmatpush1.msra.mxu0 %v593
    %v595 = vand.u32 %v136, 4294901760
    %v596 = vsub.f32 %v136, %v595
    %597 = vmatprep.subr.mxu0 %v596
    %v598 = vand.u32 %v135, 4294901760
    %v599 = vsub.f32 %v135, %v598
    %600 = vmatpush1.msra.mxu0 %v599
    %v601 = vand.u32 %v128, 4294901760
    %v602 = vsub.f32 %v128, %v601
    %603 = vmatprep.subr.mxu0 %v602
    %v604 = vand.u32 %v127, 4294901760
    %v605 = vsub.f32 %v127, %v604
    %606 = vmatpush1.msra.mxu0 %v605
    %v607 = vand.u32 %v120, 4294901760
    %v608 = vsub.f32 %v120, %v607
    %609 = vmatprep.subr.mxu0 %v608
    %v610 = vand.u32 %v119, 4294901760
    %v611 = vsub.f32 %v119, %v610
    %612 = vmatpush1.msra.mxu0 %v611
    %v613 = vand.u32 %v112, 4294901760
    %v614 = vsub.f32 %v112, %v613
    %615 = vmatprep.subr.mxu0 %v614
    %v616 = vand.u32 %v111, 4294901760
    %v617 = vsub.f32 %v111, %v616
    %618 = vmatpush1.msra.mxu0 %v617
    %v619 = vand.u32 %v104, 4294901760
    %v620 = vsub.f32 %v104, %v619
    %621 = vmatprep.subr.mxu0 %v620
    %v622 = vand.u32 %v103, 4294901760
    %v623 = vsub.f32 %v103, %v622
    %624 = vmatpush1.msra.mxu0 %v623
    %v625 = vand.u32 %v96, 4294901760
    %v626 = vsub.f32 %v96, %v625
    %627 = vmatprep.subr.mxu0 %v626
    %v628 = vand.u32 %v95, 4294901760
    %v629 = vsub.f32 %v95, %v628
    %630 = vmatpush1.msra.mxu0 %v629
    %v631 = vand.u32 %v88, 4294901760
    %v632 = vsub.f32 %v88, %v631
    %633 = vmatprep.subr.mxu0 %v632
    %v634 = vand.u32 %v87, 4294901760
    %v635 = vsub.f32 %v87, %v634
    %636 = vmatpush1.msra.mxu0 %v635
    %v637 = vand.u32 %v80, 4294901760
    %v638 = vsub.f32 %v80, %v637
    %639 = vmatprep.subr.mxu0 %v638
    %v640 = vand.u32 %v79, 4294901760
    %v641 = vsub.f32 %v79, %v640
    %642 = vmatpush1.msra.mxu0 %v641
    %v643 = vand.u32 %v72, 4294901760
    %v644 = vsub.f32 %v72, %v643
    %645 = vmatprep.subr.mxu0 %v644
    %v646 = vand.u32 %v71, 4294901760
    %v647 = vsub.f32 %v71, %v646
    %648 = vmatpush1.msra.mxu0 %v647
    %v649 = vand.u32 %v64, 4294901760
    %v650 = vsub.f32 %v64, %v649
    %651 = vmatprep.subr.mxu0 %v650
    %v652 = vand.u32 %v63, 4294901760
    %v653 = vsub.f32 %v63, %v652
    %654 = vmatpush1.msra.mxu0 %v653
    %v655 = vand.u32 %v56, 4294901760
    %v656 = vsub.f32 %v56, %v655
    %657 = vmatprep.subr.mxu0 %v656
    %v658 = vand.u32 %v55, 4294901760
    %v659 = vsub.f32 %v55, %v658
    %660 = vmatpush1.msra.mxu0 %v659
    %661 = vmatprep.subr.mxu0 0.0
    %662 = vmatpush2.msra.mxu0 0.0
    %663 = vmatprep.subr.mxu0 0.0
    %664 = vmatpush2.msra.mxu0 0.0
    %665 = vmatprep.subr.mxu0 0.0
    %666 = vmatpush2.msra.mxu0 0.0
    %667 = vmatprep.subr.mxu0 0.0
    %668 = vmatpush2.msra.mxu0 0.0
    %669 = vmatprep.subr.mxu0 0.0
    %670 = vmatpush2.msra.mxu0 0.0
    %671 = vmatprep.subr.mxu0 0.0
    %672 = vmatpush2.msra.mxu0 0.0
    %673 = vmatprep.subr.mxu0 0.0
    %674 = vmatpush2.msra.mxu0 0.0
    %675 = vmatprep.subr.mxu0 0.0
    %676 = vmatpush2.msra.mxu0 0.0
    %677 = vmatprep.subr.mxu0 0.0
    %678 = vmatpush2.msra.mxu0 0.0
    %679 = vmatprep.subr.mxu0 0.0
    %680 = vmatpush2.msra.mxu0 0.0
    %681 = vmatprep.subr.mxu0 0.0
    %682 = vmatpush2.msra.mxu0 0.0
    %683 = vmatprep.subr.mxu0 0.0
    %684 = vmatpush2.msra.mxu0 0.0
    %685 = vmatprep.subr.mxu0 0.0
    %686 = vmatpush2.msra.mxu0 0.0
    %687 = vmatprep.subr.mxu0 0.0
    %688 = vmatpush2.msra.mxu0 0.0
    %689 = vmatprep.subr.mxu0 0.0
    %690 = vmatpush2.msra.mxu0 0.0
    %691 = vmatprep.subr.mxu0 0.0
    %692 = vmatpush2.msra.mxu0 0.0
    %693 = vmatprep.mubr.f32.mxu0 0.0
    %v694 = vand.u32 %v54, 4294901760
    %v695 = vsub.f32 %v54, %v694
    %696 = vmatmul.mubr.f32.gmra.mxu0 %v695
    %v697 = vpop.f32.mrf.mxu0
    %v698 = vadd.f32 %v561, %v697
    %v699 = vpop.f32.mrf.mxu0
    %v700 = vadd.f32 %v563, %v699
    %701 = vdwg.mxu0
    %v702 = vand.u32 %v176, 4294901760
    %703 = vmatprep.subr.mxu0 %v702
    %v704 = vand.u32 %v175, 4294901760
    %705 = vmatpush1.msra.mxu0 %v704
    %v706 = vand.u32 %v168, 4294901760
    %707 = vmatprep.subr.mxu0 %v706
    %v708 = vand.u32 %v167, 4294901760
    %709 = vmatpush1.msra.mxu0 %v708
    %v710 = vand.u32 %v160, 4294901760
    %711 = vmatprep.subr.mxu0 %v710
    %v712 = vand.u32 %v159, 4294901760
    %713 = vmatpush1.msra.mxu0 %v712
    %v714 = vand.u32 %v152, 4294901760
    %715 = vmatprep.subr.mxu0 %v714
    %v716 = vand.u32 %v151, 4294901760
    %717 = vmatpush1.msra.mxu0 %v716
    %v718 = vand.u32 %v144, 4294901760
    %719 = vmatprep.subr.mxu0 %v718
    %v720 = vand.u32 %v143, 4294901760
    %721 = vmatpush1.msra.mxu0 %v720
    %v722 = vand.u32 %v136, 4294901760
    %723 = vmatprep.subr.mxu0 %v722
    %v724 = vand.u32 %v135, 4294901760
    %725 = vmatpush1.msra.mxu0 %v724
    %v726 = vand.u32 %v128, 4294901760
    %727 = vmatprep.subr.mxu0 %v726
    %v728 = vand.u32 %v127, 4294901760
    %729 = vmatpush1.msra.mxu0 %v728
    %v730 = vand.u32 %v120, 4294901760
    %731 = vmatprep.subr.mxu0 %v730
    %v732 = vand.u32 %v119, 4294901760
    %733 = vmatpush1.msra.mxu0 %v732
    %v734 = vand.u32 %v112, 4294901760
    %735 = vmatprep.subr.mxu0 %v734
    %v736 = vand.u32 %v111, 4294901760
    %737 = vmatpush1.msra.mxu0 %v736
    %v738 = vand.u32 %v104, 4294901760
    %739 = vmatprep.subr.mxu0 %v738
    %v740 = vand.u32 %v103, 4294901760
    %741 = vmatpush1.msra.mxu0 %v740
    %v742 = vand.u32 %v96, 4294901760
    %743 = vmatprep.subr.mxu0 %v742
    %v744 = vand.u32 %v95, 4294901760
    %745 = vmatpush1.msra.mxu0 %v744
    %v746 = vand.u32 %v88, 4294901760
    %747 = vmatprep.subr.mxu0 %v746
    %v748 = vand.u32 %v87, 4294901760
    %749 = vmatpush1.msra.mxu0 %v748
    %v750 = vand.u32 %v80, 4294901760
    %751 = vmatprep.subr.mxu0 %v750
    %v752 = vand.u32 %v79, 4294901760
    %753 = vmatpush1.msra.mxu0 %v752
    %v754 = vand.u32 %v72, 4294901760
    %755 = vmatprep.subr.mxu0 %v754
    %v756 = vand.u32 %v71, 4294901760
    %757 = vmatpush1.msra.mxu0 %v756
    %v758 = vand.u32 %v64, 4294901760
    %759 = vmatprep.subr.mxu0 %v758
    %v760 = vand.u32 %v63, 4294901760
    %761 = vmatpush1.msra.mxu0 %v760
    %v762 = vand.u32 %v56, 4294901760
    %763 = vmatprep.subr.mxu0 %v762
    %v764 = vand.u32 %v55, 4294901760
    %765 = vmatpush1.msra.mxu0 %v764
    %766 = vmatprep.subr.mxu0 0.0
    %767 = vmatpush2.msra.mxu0 0.0
    %768 = vmatprep.subr.mxu0 0.0
    %769 = vmatpush2.msra.mxu0 0.0
    %770 = vmatprep.subr.mxu0 0.0
    %771 = vmatpush2.msra.mxu0 0.0
    %772 = vmatprep.subr.mxu0 0.0
    %773 = vmatpush2.msra.mxu0 0.0
    %774 = vmatprep.subr.mxu0 0.0
    %775 = vmatpush2.msra.mxu0 0.0
    %776 = vmatprep.subr.mxu0 0.0
    %777 = vmatpush2.msra.mxu0 0.0
    %778 = vmatprep.subr.mxu0 0.0
    %779 = vmatpush2.msra.mxu0 0.0
    %780 = vmatprep.subr.mxu0 0.0
    %781 = vmatpush2.msra.mxu0 0.0
    %782 = vmatprep.subr.mxu0 0.0
    %783 = vmatpush2.msra.mxu0 0.0
    %784 = vmatprep.subr.mxu0 0.0
    %785 = vmatpush2.msra.mxu0 0.0
    %786 = vmatprep.subr.mxu0 0.0
    %787 = vmatpush2.msra.mxu0 0.0
    %788 = vmatprep.subr.mxu0 0.0
    %789 = vmatpush2.msra.mxu0 0.0
    %790 = vmatprep.subr.mxu0 0.0
    %791 = vmatpush2.msra.mxu0 0.0
    %792 = vmatprep.subr.mxu0 0.0
    %793 = vmatpush2.msra.mxu0 0.0
    %794 = vmatprep.subr.mxu0 0.0
    %795 = vmatpush2.msra.mxu0 0.0
    %796 = vmatprep.subr.mxu0 0.0
    %797 = vmatpush2.msra.mxu0 0.0
    %798 = vmatprep.mubr.f32.mxu0 0.0
    %v799 = vand.u32 %v54, 4294901760
    %v800 = vsub.f32 %v54, %v799
    %v801 = vand.u32 %v800, 4294901760
    %802 = vmatmul.mubr.f32.gmra.mxu0 %v801
    %v803 = vpop.f32.mrf.mxu0
    %v804 = vadd.f32 %v698, %v803
    %v805 = vpop.f32.mrf.mxu0
    %v806 = vadd.f32 %v700, %v805
    %807 = vdwg.mxu0
    %v808 = vand.u32 %v176, 4294901760
    %v809 = vsub.f32 %v176, %v808
    %v810 = vand.u32 %v809, 4294901760
    %811 = vmatprep.subr.mxu0 %v810
    %v812 = vand.u32 %v175, 4294901760
    %v813 = vsub.f32 %v175, %v812
    %v814 = vand.u32 %v813, 4294901760
    %815 = vmatpush1.msra.mxu0 %v814
    %v816 = vand.u32 %v168, 4294901760
    %v817 = vsub.f32 %v168, %v816
    %v818 = vand.u32 %v817, 4294901760
    %819 = vmatprep.subr.mxu0 %v818
    %v820 = vand.u32 %v167, 4294901760
    %v821 = vsub.f32 %v167, %v820
    %v822 = vand.u32 %v821, 4294901760
    %823 = vmatpush1.msra.mxu0 %v822
    %v824 = vand.u32 %v160, 4294901760
    %v825 = vsub.f32 %v160, %v824
    %v826 = vand.u32 %v825, 4294901760
    %827 = vmatprep.subr.mxu0 %v826
    %v828 = vand.u32 %v159, 4294901760
    %v829 = vsub.f32 %v159, %v828
    %v830 = vand.u32 %v829, 4294901760
    %831 = vmatpush1.msra.mxu0 %v830
    %v832 = vand.u32 %v152, 4294901760
    %v833 = vsub.f32 %v152, %v832
    %v834 = vand.u32 %v833, 4294901760
    %835 = vmatprep.subr.mxu0 %v834
    %v836 = vand.u32 %v151, 4294901760
    %v837 = vsub.f32 %v151, %v836
    %v838 = vand.u32 %v837, 4294901760
    %839 = vmatpush1.msra.mxu0 %v838
    %v840 = vand.u32 %v144, 4294901760
    %v841 = vsub.f32 %v144, %v840
    %v842 = vand.u32 %v841, 4294901760
    %843 = vmatprep.subr.mxu0 %v842
    %v844 = vand.u32 %v143, 4294901760
    %v845 = vsub.f32 %v143, %v844
    %v846 = vand.u32 %v845, 4294901760
    %847 = vmatpush1.msra.mxu0 %v846
    %v848 = vand.u32 %v136, 4294901760
    %v849 = vsub.f32 %v136, %v848
    %v850 = vand.u32 %v849, 4294901760
    %851 = vmatprep.subr.mxu0 %v850
    %v852 = vand.u32 %v135, 4294901760
    %v853 = vsub.f32 %v135, %v852
    %v854 = vand.u32 %v853, 4294901760
    %855 = vmatpush1.msra.mxu0 %v854
    %v856 = vand.u32 %v128, 4294901760
    %v857 = vsub.f32 %v128, %v856
    %v858 = vand.u32 %v857, 4294901760
    %859 = vmatprep.subr.mxu0 %v858
    %v860 = vand.u32 %v127, 4294901760
    %v861 = vsub.f32 %v127, %v860
    %v862 = vand.u32 %v861, 4294901760
    %863 = vmatpush1.msra.mxu0 %v862
    %v864 = vand.u32 %v120, 4294901760
    %v865 = vsub.f32 %v120, %v864
    %v866 = vand.u32 %v865, 4294901760
    %867 = vmatprep.subr.mxu0 %v866
    %v868 = vand.u32 %v119, 4294901760
    %v869 = vsub.f32 %v119, %v868
    %v870 = vand.u32 %v869, 4294901760
    %871 = vmatpush1.msra.mxu0 %v870
    %v872 = vand.u32 %v112, 4294901760
    %v873 = vsub.f32 %v112, %v872
    %v874 = vand.u32 %v873, 4294901760
    %875 = vmatprep.subr.mxu0 %v874
    %v876 = vand.u32 %v111, 4294901760
    %v877 = vsub.f32 %v111, %v876
    %v878 = vand.u32 %v877, 4294901760
    %879 = vmatpush1.msra.mxu0 %v878
    %v880 = vand.u32 %v104, 4294901760
    %v881 = vsub.f32 %v104, %v880
    %v882 = vand.u32 %v881, 4294901760
    %883 = vmatprep.subr.mxu0 %v882
    %v884 = vand.u32 %v103, 4294901760
    %v885 = vsub.f32 %v103, %v884
    %v886 = vand.u32 %v885, 4294901760
    %887 = vmatpush1.msra.mxu0 %v886
    %v888 = vand.u32 %v96, 4294901760
    %v889 = vsub.f32 %v96, %v888
    %v890 = vand.u32 %v889, 4294901760
    %891 = vmatprep.subr.mxu0 %v890
    %v892 = vand.u32 %v95, 4294901760
    %v893 = vsub.f32 %v95, %v892
    %v894 = vand.u32 %v893, 4294901760
    %895 = vmatpush1.msra.mxu0 %v894
    %v896 = vand.u32 %v88, 4294901760
    %v897 = vsub.f32 %v88, %v896
    %v898 = vand.u32 %v897, 4294901760
    %899 = vmatprep.subr.mxu0 %v898
    %v900 = vand.u32 %v87, 4294901760
    %v901 = vsub.f32 %v87, %v900
    %v902 = vand.u32 %v901, 4294901760
    %903 = vmatpush1.msra.mxu0 %v902
    %v904 = vand.u32 %v80, 4294901760
    %v905 = vsub.f32 %v80, %v904
    %v906 = vand.u32 %v905, 4294901760
    %907 = vmatprep.subr.mxu0 %v906
    %v908 = vand.u32 %v79, 4294901760
    %v909 = vsub.f32 %v79, %v908
    %v910 = vand.u32 %v909, 4294901760
    %911 = vmatpush1.msra.mxu0 %v910
    %v912 = vand.u32 %v72, 4294901760
    %v913 = vsub.f32 %v72, %v912
    %v914 = vand.u32 %v913, 4294901760
    %915 = vmatprep.subr.mxu0 %v914
    %v916 = vand.u32 %v71, 4294901760
    %v917 = vsub.f32 %v71, %v916
    %v918 = vand.u32 %v917, 4294901760
    %919 = vmatpush1.msra.mxu0 %v918
    %v920 = vand.u32 %v64, 4294901760
    %v921 = vsub.f32 %v64, %v920
    %v922 = vand.u32 %v921, 4294901760
    %923 = vmatprep.subr.mxu0 %v922
    %v924 = vand.u32 %v63, 4294901760
    %v925 = vsub.f32 %v63, %v924
    %v926 = vand.u32 %v925, 4294901760
    %927 = vmatpush1.msra.mxu0 %v926
    %v928 = vand.u32 %v56, 4294901760
    %v929 = vsub.f32 %v56, %v928
    %v930 = vand.u32 %v929, 4294901760
    %931 = vmatprep.subr.mxu0 %v930
    %v932 = vand.u32 %v55, 4294901760
    %v933 = vsub.f32 %v55, %v932
    %v934 = vand.u32 %v933, 4294901760
    %935 = vmatpush1.msra.mxu0 %v934
    %936 = vmatprep.subr.mxu0 0.0
    %937 = vmatpush2.msra.mxu0 0.0
    %938 = vmatprep.subr.mxu0 0.0
    %939 = vmatpush2.msra.mxu0 0.0
    %940 = vmatprep.subr.mxu0 0.0
    %941 = vmatpush2.msra.mxu0 0.0
    %942 = vmatprep.subr.mxu0 0.0
    %943 = vmatpush2.msra.mxu0 0.0
    %944 = vmatprep.subr.mxu0 0.0
    %945 = vmatpush2.msra.mxu0 0.0
    %946 = vmatprep.subr.mxu0 0.0
    %947 = vmatpush2.msra.mxu0 0.0
    %948 = vmatprep.subr.mxu0 0.0
    %949 = vmatpush2.msra.mxu0 0.0
    %950 = vmatprep.subr.mxu0 0.0
    %951 = vmatpush2.msra.mxu0 0.0
    %952 = vmatprep.subr.mxu0 0.0
    %953 = vmatpush2.msra.mxu0 0.0
    %954 = vmatprep.subr.mxu0 0.0
    %955 = vmatpush2.msra.mxu0 0.0
    %956 = vmatprep.subr.mxu0 0.0
    %957 = vmatpush2.msra.mxu0 0.0
    %958 = vmatprep.subr.mxu0 0.0
    %959 = vmatpush2.msra.mxu0 0.0
    %960 = vmatprep.subr.mxu0 0.0
    %961 = vmatpush2.msra.mxu0 0.0
    %962 = vmatprep.subr.mxu0 0.0
    %963 = vmatpush2.msra.mxu0 0.0
    %964 = vmatprep.subr.mxu0 0.0
    %965 = vmatpush2.msra.mxu0 0.0
    %966 = vmatprep.subr.mxu0 0.0
    %967 = vmatpush2.msra.mxu0 0.0
    %968 = vmatprep.mubr.f32.mxu0 0.0
    %v969 = vand.u32 %v54, 4294901760
    %970 = vmatmul.mubr.f32.gmra.mxu0 %v969
    %v971 = vpop.f32.mrf.mxu0
    %v972 = vadd.f32 %v804, %v971
    %v973 = vpop.f32.mrf.mxu0
    %v974 = vadd.f32 %v806, %v973
    %975 = vdwg.mxu0
    %v976 = vand.u32 %v176, 4294901760
    %977 = vmatprep.subr.mxu0 %v976
    %v978 = vand.u32 %v175, 4294901760
    %979 = vmatpush1.msra.mxu0 %v978
    %v980 = vand.u32 %v168, 4294901760
    %981 = vmatprep.subr.mxu0 %v980
    %v982 = vand.u32 %v167, 4294901760
    %983 = vmatpush1.msra.mxu0 %v982
    %v984 = vand.u32 %v160, 4294901760
    %985 = vmatprep.subr.mxu0 %v984
    %v986 = vand.u32 %v159, 4294901760
    %987 = vmatpush1.msra.mxu0 %v986
    %v988 = vand.u32 %v152, 4294901760
    %989 = vmatprep.subr.mxu0 %v988
    %v990 = vand.u32 %v151, 4294901760
    %991 = vmatpush1.msra.mxu0 %v990
    %v992 = vand.u32 %v144, 4294901760
    %993 = vmatprep.subr.mxu0 %v992
    %v994 = vand.u32 %v143, 4294901760
    %995 = vmatpush1.msra.mxu0 %v994
    %v996 = vand.u32 %v136, 4294901760
    %997 = vmatprep.subr.mxu0 %v996
    %v998 = vand.u32 %v135, 4294901760
    %999 = vmatpush1.msra.mxu0 %v998
    %v1000 = vand.u32 %v128, 4294901760
    %1001 = vmatprep.subr.mxu0 %v1000
    %v1002 = vand.u32 %v127, 4294901760
    %1003 = vmatpush1.msra.mxu0 %v1002
    %v1004 = vand.u32 %v120, 4294901760
    %1005 = vmatprep.subr.mxu0 %v1004
    %v1006 = vand.u32 %v119, 4294901760
    %1007 = vmatpush1.msra.mxu0 %v1006
    %v1008 = vand.u32 %v112, 4294901760
    %1009 = vmatprep.subr.mxu0 %v1008
    %v1010 = vand.u32 %v111, 4294901760
    %1011 = vmatpush1.msra.mxu0 %v1010
    %v1012 = vand.u32 %v104, 4294901760
    %1013 = vmatprep.subr.mxu0 %v1012
    %v1014 = vand.u32 %v103, 4294901760
    %1015 = vmatpush1.msra.mxu0 %v1014
    %v1016 = vand.u32 %v96, 4294901760
    %1017 = vmatprep.subr.mxu0 %v1016
    %v1018 = vand.u32 %v95, 4294901760
    %1019 = vmatpush1.msra.mxu0 %v1018
    %v1020 = vand.u32 %v88, 4294901760
    %1021 = vmatprep.subr.mxu0 %v1020
    %v1022 = vand.u32 %v87, 4294901760
    %1023 = vmatpush1.msra.mxu0 %v1022
    %v1024 = vand.u32 %v80, 4294901760
    %1025 = vmatprep.subr.mxu0 %v1024
    %v1026 = vand.u32 %v79, 4294901760
    %1027 = vmatpush1.msra.mxu0 %v1026
    %v1028 = vand.u32 %v72, 4294901760
    %1029 = vmatprep.subr.mxu0 %v1028
    %v1030 = vand.u32 %v71, 4294901760
    %1031 = vmatpush1.msra.mxu0 %v1030
    %v1032 = vand.u32 %v64, 4294901760
    %1033 = vmatprep.subr.mxu0 %v1032
    %v1034 = vand.u32 %v63, 4294901760
    %1035 = vmatpush1.msra.mxu0 %v1034
    %v1036 = vand.u32 %v56, 4294901760
    %1037 = vmatprep.subr.mxu0 %v1036
    %v1038 = vand.u32 %v55, 4294901760
    %1039 = vmatpush1.msra.mxu0 %v1038
    %1040 = vmatprep.subr.mxu0 0.0
    %1041 = vmatpush2.msra.mxu0 0.0
    %1042 = vmatprep.subr.mxu0 0.0
    %1043 = vmatpush2.msra.mxu0 0.0
    %1044 = vmatprep.subr.mxu0 0.0
    %1045 = vmatpush2.msra.mxu0 0.0
    %1046 = vmatprep.subr.mxu0 0.0
    %1047 = vmatpush2.msra.mxu0 0.0
    %1048 = vmatprep.subr.mxu0 0.0
    %1049 = vmatpush2.msra.mxu0 0.0
    %1050 = vmatprep.subr.mxu0 0.0
    %1051 = vmatpush2.msra.mxu0 0.0
    %1052 = vmatprep.subr.mxu0 0.0
    %1053 = vmatpush2.msra.mxu0 0.0
    %1054 = vmatprep.subr.mxu0 0.0
    %1055 = vmatpush2.msra.mxu0 0.0
    %1056 = vmatprep.subr.mxu0 0.0
    %1057 = vmatpush2.msra.mxu0 0.0
    %1058 = vmatprep.subr.mxu0 0.0
    %1059 = vmatpush2.msra.mxu0 0.0
    %1060 = vmatprep.subr.mxu0 0.0
    %1061 = vmatpush2.msra.mxu0 0.0
    %1062 = vmatprep.subr.mxu0 0.0
    %1063 = vmatpush2.msra.mxu0 0.0
    %1064 = vmatprep.subr.mxu0 0.0
    %1065 = vmatpush2.msra.mxu0 0.0
    %1066 = vmatprep.subr.mxu0 0.0
    %1067 = vmatpush2.msra.mxu0 0.0
    %1068 = vmatprep.subr.mxu0 0.0
    %1069 = vmatpush2.msra.mxu0 0.0
    %1070 = vmatprep.subr.mxu0 0.0
    %1071 = vmatpush2.msra.mxu0 0.0
    %1072 = vmatprep.mubr.f32.mxu0 0.0
    %v1073 = vand.u32 %v54, 4294901760
    %1074 = vmatmul.mubr.f32.gmra.mxu0 %v1073
    %v1075 = vpop.f32.mrf.mxu0
    %v1076 = vadd.f32 %v972, %v1075
    %v1077 = vpop.f32.mrf.mxu0
    %v1078 = vadd.f32 %v974, %v1077
    %1079 = vdwg.mxu0
    %v1080 = vand.u32 %v178, 4294901760
    %1081 = vmatprep.subr.mxu0 %v1080
    %v1082 = vand.u32 %v177, 4294901760
    %1083 = vmatpush1.msra.mxu0 %v1082
    %v1084 = vand.u32 %v170, 4294901760
    %1085 = vmatprep.subr.mxu0 %v1084
    %v1086 = vand.u32 %v169, 4294901760
    %1087 = vmatpush1.msra.mxu0 %v1086
    %v1088 = vand.u32 %v162, 4294901760
    %1089 = vmatprep.subr.mxu0 %v1088
    %v1090 = vand.u32 %v161, 4294901760
    %1091 = vmatpush1.msra.mxu0 %v1090
    %v1092 = vand.u32 %v154, 4294901760
    %1093 = vmatprep.subr.mxu0 %v1092
    %v1094 = vand.u32 %v153, 4294901760
    %1095 = vmatpush1.msra.mxu0 %v1094
    %v1096 = vand.u32 %v146, 4294901760
    %1097 = vmatprep.subr.mxu0 %v1096
    %v1098 = vand.u32 %v145, 4294901760
    %1099 = vmatpush1.msra.mxu0 %v1098
    %v1100 = vand.u32 %v138, 4294901760
    %1101 = vmatprep.subr.mxu0 %v1100
    %v1102 = vand.u32 %v137, 4294901760
    %1103 = vmatpush1.msra.mxu0 %v1102
    %v1104 = vand.u32 %v130, 4294901760
    %1105 = vmatprep.subr.mxu0 %v1104
    %v1106 = vand.u32 %v129, 4294901760
    %1107 = vmatpush1.msra.mxu0 %v1106
    %v1108 = vand.u32 %v122, 4294901760
    %1109 = vmatprep.subr.mxu0 %v1108
    %v1110 = vand.u32 %v121, 4294901760
    %1111 = vmatpush1.msra.mxu0 %v1110
    %v1112 = vand.u32 %v114, 4294901760
    %1113 = vmatprep.subr.mxu0 %v1112
    %v1114 = vand.u32 %v113, 4294901760
    %1115 = vmatpush1.msra.mxu0 %v1114
    %v1116 = vand.u32 %v106, 4294901760
    %1117 = vmatprep.subr.mxu0 %v1116
    %v1118 = vand.u32 %v105, 4294901760
    %1119 = vmatpush1.msra.mxu0 %v1118
    %v1120 = vand.u32 %v98, 4294901760
    %1121 = vmatprep.subr.mxu0 %v1120
    %v1122 = vand.u32 %v97, 4294901760
    %1123 = vmatpush1.msra.mxu0 %v1122
    %v1124 = vand.u32 %v90, 4294901760
    %1125 = vmatprep.subr.mxu0 %v1124
    %v1126 = vand.u32 %v89, 4294901760
    %1127 = vmatpush1.msra.mxu0 %v1126
    %v1128 = vand.u32 %v82, 4294901760
    %1129 = vmatprep.subr.mxu0 %v1128
    %v1130 = vand.u32 %v81, 4294901760
    %1131 = vmatpush1.msra.mxu0 %v1130
    %v1132 = vand.u32 %v74, 4294901760
    %1133 = vmatprep.subr.mxu0 %v1132
    %v1134 = vand.u32 %v73, 4294901760
    %1135 = vmatpush1.msra.mxu0 %v1134
    %v1136 = vand.u32 %v66, 4294901760
    %1137 = vmatprep.subr.mxu0 %v1136
    %v1138 = vand.u32 %v65, 4294901760
    %1139 = vmatpush1.msra.mxu0 %v1138
    %v1140 = vand.u32 %v58, 4294901760
    %1141 = vmatprep.subr.mxu0 %v1140
    %v1142 = vand.u32 %v57, 4294901760
    %1143 = vmatpush1.msra.mxu0 %v1142
    %1144 = vmatprep.subr.mxu0 0.0
    %1145 = vmatpush2.msra.mxu0 0.0
    %1146 = vmatprep.subr.mxu0 0.0
    %1147 = vmatpush2.msra.mxu0 0.0
    %1148 = vmatprep.subr.mxu0 0.0
    %1149 = vmatpush2.msra.mxu0 0.0
    %1150 = vmatprep.subr.mxu0 0.0
    %1151 = vmatpush2.msra.mxu0 0.0
    %1152 = vmatprep.subr.mxu0 0.0
    %1153 = vmatpush2.msra.mxu0 0.0
    %1154 = vmatprep.subr.mxu0 0.0
    %1155 = vmatpush2.msra.mxu0 0.0
    %1156 = vmatprep.subr.mxu0 0.0
    %1157 = vmatpush2.msra.mxu0 0.0
    %1158 = vmatprep.subr.mxu0 0.0
    %1159 = vmatpush2.msra.mxu0 0.0
    %1160 = vmatprep.subr.mxu0 0.0
    %1161 = vmatpush2.msra.mxu0 0.0
    %1162 = vmatprep.subr.mxu0 0.0
    %1163 = vmatpush2.msra.mxu0 0.0
    %1164 = vmatprep.subr.mxu0 0.0
    %1165 = vmatpush2.msra.mxu0 0.0
    %1166 = vmatprep.subr.mxu0 0.0
    %1167 = vmatpush2.msra.mxu0 0.0
    %1168 = vmatprep.subr.mxu0 0.0
    %1169 = vmatpush2.msra.mxu0 0.0
    %1170 = vmatprep.subr.mxu0 0.0
    %1171 = vmatpush2.msra.mxu0 0.0
    %1172 = vmatprep.subr.mxu0 0.0
    %1173 = vmatpush2.msra.mxu0 0.0
    %1174 = vmatprep.subr.mxu0 0.0
    %1175 = vmatpush2.msra.mxu0 0.0
    %1176 = vmatprep.mubr.f32.mxu0 0.0
    %v1177 = vand.u32 %v54, 4294901760
    %v1178 = vsub.f32 %v54, %v1177
    %v1179 = vand.u32 %v1178, 4294901760
    %v1180 = vsub.f32 %v1178, %v1179
    %v1181 = vand.u32 %v1180, 4294901760
    %1182 = vmatmul.mubr.f32.gmra.mxu0 %v1181
    %v1183 = vpop.f32.mrf.mxu0
    %v1184 = vadd.f32 %v196, %v1183
    %v1185 = vpop.f32.mrf.mxu0
    %v1186 = vadd.f32 %v200, %v1185
    %1187 = vdwg.mxu0
    %v1188 = vand.u32 %v178, 4294901760
    %v1189 = vsub.f32 %v178, %v1188
    %v1190 = vand.u32 %v1189, 4294901760
    %v1191 = vsub.f32 %v1189, %v1190
    %v1192 = vand.u32 %v1191, 4294901760
    %1193 = vmatprep.subr.mxu0 %v1192
    %v1194 = vand.u32 %v177, 4294901760
    %v1195 = vsub.f32 %v177, %v1194
    %v1196 = vand.u32 %v1195, 4294901760
    %v1197 = vsub.f32 %v1195, %v1196
    %v1198 = vand.u32 %v1197, 4294901760
    %1199 = vmatpush1.msra.mxu0 %v1198
    %v1200 = vand.u32 %v170, 4294901760
    %v1201 = vsub.f32 %v170, %v1200
    %v1202 = vand.u32 %v1201, 4294901760
    %v1203 = vsub.f32 %v1201, %v1202
    %v1204 = vand.u32 %v1203, 4294901760
    %1205 = vmatprep.subr.mxu0 %v1204
    %v1206 = vand.u32 %v169, 4294901760
    %v1207 = vsub.f32 %v169, %v1206
    %v1208 = vand.u32 %v1207, 4294901760
    %v1209 = vsub.f32 %v1207, %v1208
    %v1210 = vand.u32 %v1209, 4294901760
    %1211 = vmatpush1.msra.mxu0 %v1210
    %v1212 = vand.u32 %v162, 4294901760
    %v1213 = vsub.f32 %v162, %v1212
    %v1214 = vand.u32 %v1213, 4294901760
    %v1215 = vsub.f32 %v1213, %v1214
    %v1216 = vand.u32 %v1215, 4294901760
    %1217 = vmatprep.subr.mxu0 %v1216
    %v1218 = vand.u32 %v161, 4294901760
    %v1219 = vsub.f32 %v161, %v1218
    %v1220 = vand.u32 %v1219, 4294901760
    %v1221 = vsub.f32 %v1219, %v1220
    %v1222 = vand.u32 %v1221, 4294901760
    %1223 = vmatpush1.msra.mxu0 %v1222
    %v1224 = vand.u32 %v154, 4294901760
    %v1225 = vsub.f32 %v154, %v1224
    %v1226 = vand.u32 %v1225, 4294901760
    %v1227 = vsub.f32 %v1225, %v1226
    %v1228 = vand.u32 %v1227, 4294901760
    %1229 = vmatprep.subr.mxu0 %v1228
    %v1230 = vand.u32 %v153, 4294901760
    %v1231 = vsub.f32 %v153, %v1230
    %v1232 = vand.u32 %v1231, 4294901760
    %v1233 = vsub.f32 %v1231, %v1232
    %v1234 = vand.u32 %v1233, 4294901760
    %1235 = vmatpush1.msra.mxu0 %v1234
    %v1236 = vand.u32 %v146, 4294901760
    %v1237 = vsub.f32 %v146, %v1236
    %v1238 = vand.u32 %v1237, 4294901760
    %v1239 = vsub.f32 %v1237, %v1238
    %v1240 = vand.u32 %v1239, 4294901760
    %1241 = vmatprep.subr.mxu0 %v1240
    %v1242 = vand.u32 %v145, 4294901760
    %v1243 = vsub.f32 %v145, %v1242
    %v1244 = vand.u32 %v1243, 4294901760
    %v1245 = vsub.f32 %v1243, %v1244
    %v1246 = vand.u32 %v1245, 4294901760
    %1247 = vmatpush1.msra.mxu0 %v1246
    %v1248 = vand.u32 %v138, 4294901760
    %v1249 = vsub.f32 %v138, %v1248
    %v1250 = vand.u32 %v1249, 4294901760
    %v1251 = vsub.f32 %v1249, %v1250
    %v1252 = vand.u32 %v1251, 4294901760
    %1253 = vmatprep.subr.mxu0 %v1252
    %v1254 = vand.u32 %v137, 4294901760
    %v1255 = vsub.f32 %v137, %v1254
    %v1256 = vand.u32 %v1255, 4294901760
    %v1257 = vsub.f32 %v1255, %v1256
    %v1258 = vand.u32 %v1257, 4294901760
    %1259 = vmatpush1.msra.mxu0 %v1258
    %v1260 = vand.u32 %v130, 4294901760
    %v1261 = vsub.f32 %v130, %v1260
    %v1262 = vand.u32 %v1261, 4294901760
    %v1263 = vsub.f32 %v1261, %v1262
    %v1264 = vand.u32 %v1263, 4294901760
    %1265 = vmatprep.subr.mxu0 %v1264
    %v1266 = vand.u32 %v129, 4294901760
    %v1267 = vsub.f32 %v129, %v1266
    %v1268 = vand.u32 %v1267, 4294901760
    %v1269 = vsub.f32 %v1267, %v1268
    %v1270 = vand.u32 %v1269, 4294901760
    %1271 = vmatpush1.msra.mxu0 %v1270
    %v1272 = vand.u32 %v122, 4294901760
    %v1273 = vsub.f32 %v122, %v1272
    %v1274 = vand.u32 %v1273, 4294901760
    %v1275 = vsub.f32 %v1273, %v1274
    %v1276 = vand.u32 %v1275, 4294901760
    %1277 = vmatprep.subr.mxu0 %v1276
    %v1278 = vand.u32 %v121, 4294901760
    %v1279 = vsub.f32 %v121, %v1278
    %v1280 = vand.u32 %v1279, 4294901760
    %v1281 = vsub.f32 %v1279, %v1280
    %v1282 = vand.u32 %v1281, 4294901760
    %1283 = vmatpush1.msra.mxu0 %v1282
    %v1284 = vand.u32 %v114, 4294901760
    %v1285 = vsub.f32 %v114, %v1284
    %v1286 = vand.u32 %v1285, 4294901760
    %v1287 = vsub.f32 %v1285, %v1286
    %v1288 = vand.u32 %v1287, 4294901760
    %1289 = vmatprep.subr.mxu0 %v1288
    %v1290 = vand.u32 %v113, 4294901760
    %v1291 = vsub.f32 %v113, %v1290
    %v1292 = vand.u32 %v1291, 4294901760
    %v1293 = vsub.f32 %v1291, %v1292
    %v1294 = vand.u32 %v1293, 4294901760
    %1295 = vmatpush1.msra.mxu0 %v1294
    %v1296 = vand.u32 %v106, 4294901760
    %v1297 = vsub.f32 %v106, %v1296
    %v1298 = vand.u32 %v1297, 4294901760
    %v1299 = vsub.f32 %v1297, %v1298
    %v1300 = vand.u32 %v1299, 4294901760
    %1301 = vmatprep.subr.mxu0 %v1300
    %v1302 = vand.u32 %v105, 4294901760
    %v1303 = vsub.f32 %v105, %v1302
    %v1304 = vand.u32 %v1303, 4294901760
    %v1305 = vsub.f32 %v1303, %v1304
    %v1306 = vand.u32 %v1305, 4294901760
    %1307 = vmatpush1.msra.mxu0 %v1306
    %v1308 = vand.u32 %v98, 4294901760
    %v1309 = vsub.f32 %v98, %v1308
    %v1310 = vand.u32 %v1309, 4294901760
    %v1311 = vsub.f32 %v1309, %v1310
    %v1312 = vand.u32 %v1311, 4294901760
    %1313 = vmatprep.subr.mxu0 %v1312
    %v1314 = vand.u32 %v97, 4294901760
    %v1315 = vsub.f32 %v97, %v1314
    %v1316 = vand.u32 %v1315, 4294901760
    %v1317 = vsub.f32 %v1315, %v1316
    %v1318 = vand.u32 %v1317, 4294901760
    %1319 = vmatpush1.msra.mxu0 %v1318
    %v1320 = vand.u32 %v90, 4294901760
    %v1321 = vsub.f32 %v90, %v1320
    %v1322 = vand.u32 %v1321, 4294901760
    %v1323 = vsub.f32 %v1321, %v1322
    %v1324 = vand.u32 %v1323, 4294901760
    %1325 = vmatprep.subr.mxu0 %v1324
    %v1326 = vand.u32 %v89, 4294901760
    %v1327 = vsub.f32 %v89, %v1326
    %v1328 = vand.u32 %v1327, 4294901760
    %v1329 = vsub.f32 %v1327, %v1328
    %v1330 = vand.u32 %v1329, 4294901760
    %1331 = vmatpush1.msra.mxu0 %v1330
    %v1332 = vand.u32 %v82, 4294901760
    %v1333 = vsub.f32 %v82, %v1332
    %v1334 = vand.u32 %v1333, 4294901760
    %v1335 = vsub.f32 %v1333, %v1334
    %v1336 = vand.u32 %v1335, 4294901760
    %1337 = vmatprep.subr.mxu0 %v1336
    %v1338 = vand.u32 %v81, 4294901760
    %v1339 = vsub.f32 %v81, %v1338
    %v1340 = vand.u32 %v1339, 4294901760
    %v1341 = vsub.f32 %v1339, %v1340
    %v1342 = vand.u32 %v1341, 4294901760
    %1343 = vmatpush1.msra.mxu0 %v1342
    %v1344 = vand.u32 %v74, 4294901760
    %v1345 = vsub.f32 %v74, %v1344
    %v1346 = vand.u32 %v1345, 4294901760
    %v1347 = vsub.f32 %v1345, %v1346
    %v1348 = vand.u32 %v1347, 4294901760
    %1349 = vmatprep.subr.mxu0 %v1348
    %v1350 = vand.u32 %v73, 4294901760
    %v1351 = vsub.f32 %v73, %v1350
    %v1352 = vand.u32 %v1351, 4294901760
    %v1353 = vsub.f32 %v1351, %v1352
    %v1354 = vand.u32 %v1353, 4294901760
    %1355 = vmatpush1.msra.mxu0 %v1354
    %v1356 = vand.u32 %v66, 4294901760
    %v1357 = vsub.f32 %v66, %v1356
    %v1358 = vand.u32 %v1357, 4294901760
    %v1359 = vsub.f32 %v1357, %v1358
    %v1360 = vand.u32 %v1359, 4294901760
    %1361 = vmatprep.subr.mxu0 %v1360
    %v1362 = vand.u32 %v65, 4294901760
    %v1363 = vsub.f32 %v65, %v1362
    %v1364 = vand.u32 %v1363, 4294901760
    %v1365 = vsub.f32 %v1363, %v1364
    %v1366 = vand.u32 %v1365, 4294901760
    %1367 = vmatpush1.msra.mxu0 %v1366
    %v1368 = vand.u32 %v58, 4294901760
    %v1369 = vsub.f32 %v58, %v1368
    %v1370 = vand.u32 %v1369, 4294901760
    %v1371 = vsub.f32 %v1369, %v1370
    %v1372 = vand.u32 %v1371, 4294901760
    %1373 = vmatprep.subr.mxu0 %v1372
    %v1374 = vand.u32 %v57, 4294901760
    %v1375 = vsub.f32 %v57, %v1374
    %v1376 = vand.u32 %v1375, 4294901760
    %v1377 = vsub.f32 %v1375, %v1376
    %v1378 = vand.u32 %v1377, 4294901760
    %1379 = vmatpush1.msra.mxu0 %v1378
    %1380 = vmatprep.subr.mxu0 0.0
    %1381 = vmatpush2.msra.mxu0 0.0
    %1382 = vmatprep.subr.mxu0 0.0
    %1383 = vmatpush2.msra.mxu0 0.0
    %1384 = vmatprep.subr.mxu0 0.0
    %1385 = vmatpush2.msra.mxu0 0.0
    %1386 = vmatprep.subr.mxu0 0.0
    %1387 = vmatpush2.msra.mxu0 0.0
    %1388 = vmatprep.subr.mxu0 0.0
    %1389 = vmatpush2.msra.mxu0 0.0
    %1390 = vmatprep.subr.mxu0 0.0
    %1391 = vmatpush2.msra.mxu0 0.0
    %1392 = vmatprep.subr.mxu0 0.0
    %1393 = vmatpush2.msra.mxu0 0.0
    %1394 = vmatprep.subr.mxu0 0.0
    %1395 = vmatpush2.msra.mxu0 0.0
    %1396 = vmatprep.subr.mxu0 0.0
    %1397 = vmatpush2.msra.mxu0 0.0
    %1398 = vmatprep.subr.mxu0 0.0
    %1399 = vmatpush2.msra.mxu0 0.0
    %1400 = vmatprep.subr.mxu0 0.0
    %1401 = vmatpush2.msra.mxu0 0.0
    %1402 = vmatprep.subr.mxu0 0.0
    %1403 = vmatpush2.msra.mxu0 0.0
    %1404 = vmatprep.subr.mxu0 0.0
    %1405 = vmatpush2.msra.mxu0 0.0
    %1406 = vmatprep.subr.mxu0 0.0
    %1407 = vmatpush2.msra.mxu0 0.0
    %1408 = vmatprep.subr.mxu0 0.0
    %1409 = vmatpush2.msra.mxu0 0.0
    %1410 = vmatprep.subr.mxu0 0.0
    %1411 = vmatpush2.msra.mxu0 0.0
    %1412 = vmatprep.mubr.f32.mxu0 0.0
    %v1413 = vand.u32 %v54, 4294901760
    %1414 = vmatmul.mubr.f32.gmra.mxu0 %v1413
    %v1415 = vpop.f32.mrf.mxu0
    %v1416 = vadd.f32 %v1184, %v1415
    %v1417 = vpop.f32.mrf.mxu0
    %v1418 = vadd.f32 %v1186, %v1417
    %1419 = vdwg.mxu0
    %v1420 = vand.u32 %v178, 4294901760
    %v1421 = vsub.f32 %v178, %v1420
    %1422 = vmatprep.subr.mxu0 %v1421
    %v1423 = vand.u32 %v177, 4294901760
    %v1424 = vsub.f32 %v177, %v1423
    %1425 = vmatpush1.msra.mxu0 %v1424
    %v1426 = vand.u32 %v170, 4294901760
    %v1427 = vsub.f32 %v170, %v1426
    %1428 = vmatprep.subr.mxu0 %v1427
    %v1429 = vand.u32 %v169, 4294901760
    %v1430 = vsub.f32 %v169, %v1429
    %1431 = vmatpush1.msra.mxu0 %v1430
    %v1432 = vand.u32 %v162, 4294901760
    %v1433 = vsub.f32 %v162, %v1432
    %1434 = vmatprep.subr.mxu0 %v1433
    %v1435 = vand.u32 %v161, 4294901760
    %v1436 = vsub.f32 %v161, %v1435
    %1437 = vmatpush1.msra.mxu0 %v1436
    %v1438 = vand.u32 %v154, 4294901760
    %v1439 = vsub.f32 %v154, %v1438
    %1440 = vmatprep.subr.mxu0 %v1439
    %v1441 = vand.u32 %v153, 4294901760
    %v1442 = vsub.f32 %v153, %v1441
    %1443 = vmatpush1.msra.mxu0 %v1442
    %v1444 = vand.u32 %v146, 4294901760
    %v1445 = vsub.f32 %v146, %v1444
    %1446 = vmatprep.subr.mxu0 %v1445
    %v1447 = vand.u32 %v145, 4294901760
    %v1448 = vsub.f32 %v145, %v1447
    %1449 = vmatpush1.msra.mxu0 %v1448
    %v1450 = vand.u32 %v138, 4294901760
    %v1451 = vsub.f32 %v138, %v1450
    %1452 = vmatprep.subr.mxu0 %v1451
    %v1453 = vand.u32 %v137, 4294901760
    %v1454 = vsub.f32 %v137, %v1453
    %1455 = vmatpush1.msra.mxu0 %v1454
    %v1456 = vand.u32 %v130, 4294901760
    %v1457 = vsub.f32 %v130, %v1456
    %1458 = vmatprep.subr.mxu0 %v1457
    %v1459 = vand.u32 %v129, 4294901760
    %v1460 = vsub.f32 %v129, %v1459
    %1461 = vmatpush1.msra.mxu0 %v1460
    %v1462 = vand.u32 %v122, 4294901760
    %v1463 = vsub.f32 %v122, %v1462
    %1464 = vmatprep.subr.mxu0 %v1463
    %v1465 = vand.u32 %v121, 4294901760
    %v1466 = vsub.f32 %v121, %v1465
    %1467 = vmatpush1.msra.mxu0 %v1466
    %v1468 = vand.u32 %v114, 4294901760
    %v1469 = vsub.f32 %v114, %v1468
    %1470 = vmatprep.subr.mxu0 %v1469
    %v1471 = vand.u32 %v113, 4294901760
    %v1472 = vsub.f32 %v113, %v1471
    %1473 = vmatpush1.msra.mxu0 %v1472
    %v1474 = vand.u32 %v106, 4294901760
    %v1475 = vsub.f32 %v106, %v1474
    %1476 = vmatprep.subr.mxu0 %v1475
    %v1477 = vand.u32 %v105, 4294901760
    %v1478 = vsub.f32 %v105, %v1477
    %1479 = vmatpush1.msra.mxu0 %v1478
    %v1480 = vand.u32 %v98, 4294901760
    %v1481 = vsub.f32 %v98, %v1480
    %1482 = vmatprep.subr.mxu0 %v1481
    %v1483 = vand.u32 %v97, 4294901760
    %v1484 = vsub.f32 %v97, %v1483
    %1485 = vmatpush1.msra.mxu0 %v1484
    %v1486 = vand.u32 %v90, 4294901760
    %v1487 = vsub.f32 %v90, %v1486
    %1488 = vmatprep.subr.mxu0 %v1487
    %v1489 = vand.u32 %v89, 4294901760
    %v1490 = vsub.f32 %v89, %v1489
    %1491 = vmatpush1.msra.mxu0 %v1490
    %v1492 = vand.u32 %v82, 4294901760
    %v1493 = vsub.f32 %v82, %v1492
    %1494 = vmatprep.subr.mxu0 %v1493
    %v1495 = vand.u32 %v81, 4294901760
    %v1496 = vsub.f32 %v81, %v1495
    %1497 = vmatpush1.msra.mxu0 %v1496
    %v1498 = vand.u32 %v74, 4294901760
    %v1499 = vsub.f32 %v74, %v1498
    %1500 = vmatprep.subr.mxu0 %v1499
    %v1501 = vand.u32 %v73, 4294901760
    %v1502 = vsub.f32 %v73, %v1501
    %1503 = vmatpush1.msra.mxu0 %v1502
    %v1504 = vand.u32 %v66, 4294901760
    %v1505 = vsub.f32 %v66, %v1504
    %1506 = vmatprep.subr.mxu0 %v1505
    %v1507 = vand.u32 %v65, 4294901760
    %v1508 = vsub.f32 %v65, %v1507
    %1509 = vmatpush1.msra.mxu0 %v1508
    %v1510 = vand.u32 %v58, 4294901760
    %v1511 = vsub.f32 %v58, %v1510
    %1512 = vmatprep.subr.mxu0 %v1511
    %v1513 = vand.u32 %v57, 4294901760
    %v1514 = vsub.f32 %v57, %v1513
    %1515 = vmatpush1.msra.mxu0 %v1514
    %1516 = vmatprep.subr.mxu0 0.0
    %1517 = vmatpush2.msra.mxu0 0.0
    %1518 = vmatprep.subr.mxu0 0.0
    %1519 = vmatpush2.msra.mxu0 0.0
    %1520 = vmatprep.subr.mxu0 0.0
    %1521 = vmatpush2.msra.mxu0 0.0
    %1522 = vmatprep.subr.mxu0 0.0
    %1523 = vmatpush2.msra.mxu0 0.0
    %1524 = vmatprep.subr.mxu0 0.0
    %1525 = vmatpush2.msra.mxu0 0.0
    %1526 = vmatprep.subr.mxu0 0.0
    %1527 = vmatpush2.msra.mxu0 0.0
    %1528 = vmatprep.subr.mxu0 0.0
    %1529 = vmatpush2.msra.mxu0 0.0
    %1530 = vmatprep.subr.mxu0 0.0
    %1531 = vmatpush2.msra.mxu0 0.0
    %1532 = vmatprep.subr.mxu0 0.0
    %1533 = vmatpush2.msra.mxu0 0.0
    %1534 = vmatprep.subr.mxu0 0.0
    %1535 = vmatpush2.msra.mxu0 0.0
    %1536 = vmatprep.subr.mxu0 0.0
    %1537 = vmatpush2.msra.mxu0 0.0
    %1538 = vmatprep.subr.mxu0 0.0
    %1539 = vmatpush2.msra.mxu0 0.0
    %1540 = vmatprep.subr.mxu0 0.0
    %1541 = vmatpush2.msra.mxu0 0.0
    %1542 = vmatprep.subr.mxu0 0.0
    %1543 = vmatpush2.msra.mxu0 0.0
    %1544 = vmatprep.subr.mxu0 0.0
    %1545 = vmatpush2.msra.mxu0 0.0
    %1546 = vmatprep.subr.mxu0 0.0
    %1547 = vmatpush2.msra.mxu0 0.0
    %1548 = vmatprep.mubr.f32.mxu0 0.0
    %v1549 = vand.u32 %v54, 4294901760
    %v1550 = vsub.f32 %v54, %v1549
    %1551 = vmatmul.mubr.f32.gmra.mxu0 %v1550
    %v1552 = vpop.f32.mrf.mxu0
    %v1553 = vadd.f32 %v1416, %v1552
    %v1554 = vpop.f32.mrf.mxu0
    %v1555 = vadd.f32 %v1418, %v1554
    %1556 = vdwg.mxu0
    %v1557 = vand.u32 %v178, 4294901760
    %1558 = vmatprep.subr.mxu0 %v1557
    %v1559 = vand.u32 %v177, 4294901760
    %1560 = vmatpush1.msra.mxu0 %v1559
    %v1561 = vand.u32 %v170, 4294901760
    %1562 = vmatprep.subr.mxu0 %v1561
    %v1563 = vand.u32 %v169, 4294901760
    %1564 = vmatpush1.msra.mxu0 %v1563
    %v1565 = vand.u32 %v162, 4294901760
    %1566 = vmatprep.subr.mxu0 %v1565
    %v1567 = vand.u32 %v161, 4294901760
    %1568 = vmatpush1.msra.mxu0 %v1567
    %v1569 = vand.u32 %v154, 4294901760
    %1570 = vmatprep.subr.mxu0 %v1569
    %v1571 = vand.u32 %v153, 4294901760
    %1572 = vmatpush1.msra.mxu0 %v1571
    %v1573 = vand.u32 %v146, 4294901760
    %1574 = vmatprep.subr.mxu0 %v1573
    %v1575 = vand.u32 %v145, 4294901760
    %1576 = vmatpush1.msra.mxu0 %v1575
    %v1577 = vand.u32 %v138, 4294901760
    %1578 = vmatprep.subr.mxu0 %v1577
    %v1579 = vand.u32 %v137, 4294901760
    %1580 = vmatpush1.msra.mxu0 %v1579
    %v1581 = vand.u32 %v130, 4294901760
    %1582 = vmatprep.subr.mxu0 %v1581
    %v1583 = vand.u32 %v129, 4294901760
    %1584 = vmatpush1.msra.mxu0 %v1583
    %v1585 = vand.u32 %v122, 4294901760
    %1586 = vmatprep.subr.mxu0 %v1585
    %v1587 = vand.u32 %v121, 4294901760
    %1588 = vmatpush1.msra.mxu0 %v1587
    %v1589 = vand.u32 %v114, 4294901760
    %1590 = vmatprep.subr.mxu0 %v1589
    %v1591 = vand.u32 %v113, 4294901760
    %1592 = vmatpush1.msra.mxu0 %v1591
    %v1593 = vand.u32 %v106, 4294901760
    %1594 = vmatprep.subr.mxu0 %v1593
    %v1595 = vand.u32 %v105, 4294901760
    %1596 = vmatpush1.msra.mxu0 %v1595
    %v1597 = vand.u32 %v98, 4294901760
    %1598 = vmatprep.subr.mxu0 %v1597
    %v1599 = vand.u32 %v97, 4294901760
    %1600 = vmatpush1.msra.mxu0 %v1599
    %v1601 = vand.u32 %v90, 4294901760
    %1602 = vmatprep.subr.mxu0 %v1601
    %v1603 = vand.u32 %v89, 4294901760
    %1604 = vmatpush1.msra.mxu0 %v1603
    %v1605 = vand.u32 %v82, 4294901760
    %1606 = vmatprep.subr.mxu0 %v1605
    %v1607 = vand.u32 %v81, 4294901760
    %1608 = vmatpush1.msra.mxu0 %v1607
    %v1609 = vand.u32 %v74, 4294901760
    %1610 = vmatprep.subr.mxu0 %v1609
    %v1611 = vand.u32 %v73, 4294901760
    %1612 = vmatpush1.msra.mxu0 %v1611
    %v1613 = vand.u32 %v66, 4294901760
    %1614 = vmatprep.subr.mxu0 %v1613
    %v1615 = vand.u32 %v65, 4294901760
    %1616 = vmatpush1.msra.mxu0 %v1615
    %v1617 = vand.u32 %v58, 4294901760
    %1618 = vmatprep.subr.mxu0 %v1617
    %v1619 = vand.u32 %v57, 4294901760
    %1620 = vmatpush1.msra.mxu0 %v1619
    %1621 = vmatprep.subr.mxu0 0.0
    %1622 = vmatpush2.msra.mxu0 0.0
    %1623 = vmatprep.subr.mxu0 0.0
    %1624 = vmatpush2.msra.mxu0 0.0
    %1625 = vmatprep.subr.mxu0 0.0
    %1626 = vmatpush2.msra.mxu0 0.0
    %1627 = vmatprep.subr.mxu0 0.0
    %1628 = vmatpush2.msra.mxu0 0.0
    %1629 = vmatprep.subr.mxu0 0.0
    %1630 = vmatpush2.msra.mxu0 0.0
    %1631 = vmatprep.subr.mxu0 0.0
    %1632 = vmatpush2.msra.mxu0 0.0
    %1633 = vmatprep.subr.mxu0 0.0
    %1634 = vmatpush2.msra.mxu0 0.0
    %1635 = vmatprep.subr.mxu0 0.0
    %1636 = vmatpush2.msra.mxu0 0.0
    %1637 = vmatprep.subr.mxu0 0.0
    %1638 = vmatpush2.msra.mxu0 0.0
    %1639 = vmatprep.subr.mxu0 0.0
    %1640 = vmatpush2.msra.mxu0 0.0
    %1641 = vmatprep.subr.mxu0 0.0
    %1642 = vmatpush2.msra.mxu0 0.0
    %1643 = vmatprep.subr.mxu0 0.0
    %1644 = vmatpush2.msra.mxu0 0.0
    %1645 = vmatprep.subr.mxu0 0.0
    %1646 = vmatpush2.msra.mxu0 0.0
    %1647 = vmatprep.subr.mxu0 0.0
    %1648 = vmatpush2.msra.mxu0 0.0
    %1649 = vmatprep.subr.mxu0 0.0
    %1650 = vmatpush2.msra.mxu0 0.0
    %1651 = vmatprep.subr.mxu0 0.0
    %1652 = vmatpush2.msra.mxu0 0.0
    %1653 = vmatprep.mubr.f32.mxu0 0.0
    %v1654 = vand.u32 %v54, 4294901760
    %v1655 = vsub.f32 %v54, %v1654
    %v1656 = vand.u32 %v1655, 4294901760
    %1657 = vmatmul.mubr.f32.gmra.mxu0 %v1656
    %v1658 = vpop.f32.mrf.mxu0
    %v1659 = vadd.f32 %v1553, %v1658
    %v1660 = vpop.f32.mrf.mxu0
    %v1661 = vadd.f32 %v1555, %v1660
    %1662 = vdwg.mxu0
    %v1663 = vand.u32 %v178, 4294901760
    %v1664 = vsub.f32 %v178, %v1663
    %v1665 = vand.u32 %v1664, 4294901760
    %1666 = vmatprep.subr.mxu0 %v1665
    %v1667 = vand.u32 %v177, 4294901760
    %v1668 = vsub.f32 %v177, %v1667
    %v1669 = vand.u32 %v1668, 4294901760
    %1670 = vmatpush1.msra.mxu0 %v1669
    %v1671 = vand.u32 %v170, 4294901760
    %v1672 = vsub.f32 %v170, %v1671
    %v1673 = vand.u32 %v1672, 4294901760
    %1674 = vmatprep.subr.mxu0 %v1673
    %v1675 = vand.u32 %v169, 4294901760
    %v1676 = vsub.f32 %v169, %v1675
    %v1677 = vand.u32 %v1676, 4294901760
    %1678 = vmatpush1.msra.mxu0 %v1677
    %v1679 = vand.u32 %v162, 4294901760
    %v1680 = vsub.f32 %v162, %v1679
    %v1681 = vand.u32 %v1680, 4294901760
    %1682 = vmatprep.subr.mxu0 %v1681
    %v1683 = vand.u32 %v161, 4294901760
    %v1684 = vsub.f32 %v161, %v1683
    %v1685 = vand.u32 %v1684, 4294901760
    %1686 = vmatpush1.msra.mxu0 %v1685
    %v1687 = vand.u32 %v154, 4294901760
    %v1688 = vsub.f32 %v154, %v1687
    %v1689 = vand.u32 %v1688, 4294901760
    %1690 = vmatprep.subr.mxu0 %v1689
    %v1691 = vand.u32 %v153, 4294901760
    %v1692 = vsub.f32 %v153, %v1691
    %v1693 = vand.u32 %v1692, 4294901760
    %1694 = vmatpush1.msra.mxu0 %v1693
    %v1695 = vand.u32 %v146, 4294901760
    %v1696 = vsub.f32 %v146, %v1695
    %v1697 = vand.u32 %v1696, 4294901760
    %1698 = vmatprep.subr.mxu0 %v1697
    %v1699 = vand.u32 %v145, 4294901760
    %v1700 = vsub.f32 %v145, %v1699
    %v1701 = vand.u32 %v1700, 4294901760
    %1702 = vmatpush1.msra.mxu0 %v1701
    %v1703 = vand.u32 %v138, 4294901760
    %v1704 = vsub.f32 %v138, %v1703
    %v1705 = vand.u32 %v1704, 4294901760
    %1706 = vmatprep.subr.mxu0 %v1705
    %v1707 = vand.u32 %v137, 4294901760
    %v1708 = vsub.f32 %v137, %v1707
    %v1709 = vand.u32 %v1708, 4294901760
    %1710 = vmatpush1.msra.mxu0 %v1709
    %v1711 = vand.u32 %v130, 4294901760
    %v1712 = vsub.f32 %v130, %v1711
    %v1713 = vand.u32 %v1712, 4294901760
    %1714 = vmatprep.subr.mxu0 %v1713
    %v1715 = vand.u32 %v129, 4294901760
    %v1716 = vsub.f32 %v129, %v1715
    %v1717 = vand.u32 %v1716, 4294901760
    %1718 = vmatpush1.msra.mxu0 %v1717
    %v1719 = vand.u32 %v122, 4294901760
    %v1720 = vsub.f32 %v122, %v1719
    %v1721 = vand.u32 %v1720, 4294901760
    %1722 = vmatprep.subr.mxu0 %v1721
    %v1723 = vand.u32 %v121, 4294901760
    %v1724 = vsub.f32 %v121, %v1723
    %v1725 = vand.u32 %v1724, 4294901760
    %1726 = vmatpush1.msra.mxu0 %v1725
    %v1727 = vand.u32 %v114, 4294901760
    %v1728 = vsub.f32 %v114, %v1727
    %v1729 = vand.u32 %v1728, 4294901760
    %1730 = vmatprep.subr.mxu0 %v1729
    %v1731 = vand.u32 %v113, 4294901760
    %v1732 = vsub.f32 %v113, %v1731
    %v1733 = vand.u32 %v1732, 4294901760
    %1734 = vmatpush1.msra.mxu0 %v1733
    %v1735 = vand.u32 %v106, 4294901760
    %v1736 = vsub.f32 %v106, %v1735
    %v1737 = vand.u32 %v1736, 4294901760
    %1738 = vmatprep.subr.mxu0 %v1737
    %v1739 = vand.u32 %v105, 4294901760
    %v1740 = vsub.f32 %v105, %v1739
    %v1741 = vand.u32 %v1740, 4294901760
    %1742 = vmatpush1.msra.mxu0 %v1741
    %v1743 = vand.u32 %v98, 4294901760
    %v1744 = vsub.f32 %v98, %v1743
    %v1745 = vand.u32 %v1744, 4294901760
    %1746 = vmatprep.subr.mxu0 %v1745
    %v1747 = vand.u32 %v97, 4294901760
    %v1748 = vsub.f32 %v97, %v1747
    %v1749 = vand.u32 %v1748, 4294901760
    %1750 = vmatpush1.msra.mxu0 %v1749
    %v1751 = vand.u32 %v90, 4294901760
    %v1752 = vsub.f32 %v90, %v1751
    %v1753 = vand.u32 %v1752, 4294901760
    %1754 = vmatprep.subr.mxu0 %v1753
    %v1755 = vand.u32 %v89, 4294901760
    %v1756 = vsub.f32 %v89, %v1755
    %v1757 = vand.u32 %v1756, 4294901760
    %1758 = vmatpush1.msra.mxu0 %v1757
    %v1759 = vand.u32 %v82, 4294901760
    %v1760 = vsub.f32 %v82, %v1759
    %v1761 = vand.u32 %v1760, 4294901760
    %1762 = vmatprep.subr.mxu0 %v1761
    %v1763 = vand.u32 %v81, 4294901760
    %v1764 = vsub.f32 %v81, %v1763
    %v1765 = vand.u32 %v1764, 4294901760
    %1766 = vmatpush1.msra.mxu0 %v1765
    %v1767 = vand.u32 %v74, 4294901760
    %v1768 = vsub.f32 %v74, %v1767
    %v1769 = vand.u32 %v1768, 4294901760
    %1770 = vmatprep.subr.mxu0 %v1769
    %v1771 = vand.u32 %v73, 4294901760
    %v1772 = vsub.f32 %v73, %v1771
    %v1773 = vand.u32 %v1772, 4294901760
    %1774 = vmatpush1.msra.mxu0 %v1773
    %v1775 = vand.u32 %v66, 4294901760
    %v1776 = vsub.f32 %v66, %v1775
    %v1777 = vand.u32 %v1776, 4294901760
    %1778 = vmatprep.subr.mxu0 %v1777
    %v1779 = vand.u32 %v65, 4294901760
    %v1780 = vsub.f32 %v65, %v1779
    %v1781 = vand.u32 %v1780, 4294901760
    %1782 = vmatpush1.msra.mxu0 %v1781
    %v1783 = vand.u32 %v58, 4294901760
    %v1784 = vsub.f32 %v58, %v1783
    %v1785 = vand.u32 %v1784, 4294901760
    %1786 = vmatprep.subr.mxu0 %v1785
    %v1787 = vand.u32 %v57, 4294901760
    %v1788 = vsub.f32 %v57, %v1787
    %v1789 = vand.u32 %v1788, 4294901760
    %1790 = vmatpush1.msra.mxu0 %v1789
    %1791 = vmatprep.subr.mxu0 0.0
    %1792 = vmatpush2.msra.mxu0 0.0
    %1793 = vmatprep.subr.mxu0 0.0
    %1794 = vmatpush2.msra.mxu0 0.0
    %1795 = vmatprep.subr.mxu0 0.0
    %1796 = vmatpush2.msra.mxu0 0.0
    %1797 = vmatprep.subr.mxu0 0.0
    %1798 = vmatpush2.msra.mxu0 0.0
    %1799 = vmatprep.subr.mxu0 0.0
    %1800 = vmatpush2.msra.mxu0 0.0
    %1801 = vmatprep.subr.mxu0 0.0
    %1802 = vmatpush2.msra.mxu0 0.0
    %1803 = vmatprep.subr.mxu0 0.0
    %1804 = vmatpush2.msra.mxu0 0.0
    %1805 = vmatprep.subr.mxu0 0.0
    %1806 = vmatpush2.msra.mxu0 0.0
    %1807 = vmatprep.subr.mxu0 0.0
    %1808 = vmatpush2.msra.mxu0 0.0
    %1809 = vmatprep.subr.mxu0 0.0
    %1810 = vmatpush2.msra.mxu0 0.0
    %1811 = vmatprep.subr.mxu0 0.0
    %1812 = vmatpush2.msra.mxu0 0.0
    %1813 = vmatprep.subr.mxu0 0.0
    %1814 = vmatpush2.msra.mxu0 0.0
    %1815 = vmatprep.subr.mxu0 0.0
    %1816 = vmatpush2.msra.mxu0 0.0
    %1817 = vmatprep.subr.mxu0 0.0
    %1818 = vmatpush2.msra.mxu0 0.0
    %1819 = vmatprep.subr.mxu0 0.0
    %1820 = vmatpush2.msra.mxu0 0.0
    %1821 = vmatprep.subr.mxu0 0.0
    %1822 = vmatpush2.msra.mxu0 0.0
    %1823 = vmatprep.mubr.f32.mxu0 0.0
    %v1824 = vand.u32 %v54, 4294901760
    %1825 = vmatmul.mubr.f32.gmra.mxu0 %v1824
    %v1826 = vpop.f32.mrf.mxu0
    %v1827 = vadd.f32 %v1659, %v1826
    %v1828 = vpop.f32.mrf.mxu0
    %v1829 = vadd.f32 %v1661, %v1828
    %1830 = vdwg.mxu0
    %v1831 = vand.u32 %v178, 4294901760
    %1832 = vmatprep.subr.mxu0 %v1831
    %v1833 = vand.u32 %v177, 4294901760
    %1834 = vmatpush1.msra.mxu0 %v1833
    %v1835 = vand.u32 %v170, 4294901760
    %1836 = vmatprep.subr.mxu0 %v1835
    %v1837 = vand.u32 %v169, 4294901760
    %1838 = vmatpush1.msra.mxu0 %v1837
    %v1839 = vand.u32 %v162, 4294901760
    %1840 = vmatprep.subr.mxu0 %v1839
    %v1841 = vand.u32 %v161, 4294901760
    %1842 = vmatpush1.msra.mxu0 %v1841
    %v1843 = vand.u32 %v154, 4294901760
    %1844 = vmatprep.subr.mxu0 %v1843
    %v1845 = vand.u32 %v153, 4294901760
    %1846 = vmatpush1.msra.mxu0 %v1845
    %v1847 = vand.u32 %v146, 4294901760
    %1848 = vmatprep.subr.mxu0 %v1847
    %v1849 = vand.u32 %v145, 4294901760
    %1850 = vmatpush1.msra.mxu0 %v1849
    %v1851 = vand.u32 %v138, 4294901760
    %1852 = vmatprep.subr.mxu0 %v1851
    %v1853 = vand.u32 %v137, 4294901760
    %1854 = vmatpush1.msra.mxu0 %v1853
    %v1855 = vand.u32 %v130, 4294901760
    %1856 = vmatprep.subr.mxu0 %v1855
    %v1857 = vand.u32 %v129, 4294901760
    %1858 = vmatpush1.msra.mxu0 %v1857
    %v1859 = vand.u32 %v122, 4294901760
    %1860 = vmatprep.subr.mxu0 %v1859
    %v1861 = vand.u32 %v121, 4294901760
    %1862 = vmatpush1.msra.mxu0 %v1861
    %v1863 = vand.u32 %v114, 4294901760
    %1864 = vmatprep.subr.mxu0 %v1863
    %v1865 = vand.u32 %v113, 4294901760
    %1866 = vmatpush1.msra.mxu0 %v1865
    %v1867 = vand.u32 %v106, 4294901760
    %1868 = vmatprep.subr.mxu0 %v1867
    %v1869 = vand.u32 %v105, 4294901760
    %1870 = vmatpush1.msra.mxu0 %v1869
    %v1871 = vand.u32 %v98, 4294901760
    %1872 = vmatprep.subr.mxu0 %v1871
    %v1873 = vand.u32 %v97, 4294901760
    %1874 = vmatpush1.msra.mxu0 %v1873
    %v1875 = vand.u32 %v90, 4294901760
    %1876 = vmatprep.subr.mxu0 %v1875
    %v1877 = vand.u32 %v89, 4294901760
    %1878 = vmatpush1.msra.mxu0 %v1877
    %v1879 = vand.u32 %v82, 4294901760
    %1880 = vmatprep.subr.mxu0 %v1879
    %v1881 = vand.u32 %v81, 4294901760
    %1882 = vmatpush1.msra.mxu0 %v1881
    %v1883 = vand.u32 %v74, 4294901760
    %1884 = vmatprep.subr.mxu0 %v1883
    %v1885 = vand.u32 %v73, 4294901760
    %1886 = vmatpush1.msra.mxu0 %v1885
    %v1887 = vand.u32 %v66, 4294901760
    %1888 = vmatprep.subr.mxu0 %v1887
    %v1889 = vand.u32 %v65, 4294901760
    %1890 = vmatpush1.msra.mxu0 %v1889
    %v1891 = vand.u32 %v58, 4294901760
    %1892 = vmatprep.subr.mxu0 %v1891
    %v1893 = vand.u32 %v57, 4294901760
    %1894 = vmatpush1.msra.mxu0 %v1893
    %1895 = vmatprep.subr.mxu0 0.0
    %1896 = vmatpush2.msra.mxu0 0.0
    %1897 = vmatprep.subr.mxu0 0.0
    %1898 = vmatpush2.msra.mxu0 0.0
    %1899 = vmatprep.subr.mxu0 0.0
    %1900 = vmatpush2.msra.mxu0 0.0
    %1901 = vmatprep.subr.mxu0 0.0
    %1902 = vmatpush2.msra.mxu0 0.0
    %1903 = vmatprep.subr.mxu0 0.0
    %1904 = vmatpush2.msra.mxu0 0.0
    %1905 = vmatprep.subr.mxu0 0.0
    %1906 = vmatpush2.msra.mxu0 0.0
    %1907 = vmatprep.subr.mxu0 0.0
    %1908 = vmatpush2.msra.mxu0 0.0
    %1909 = vmatprep.subr.mxu0 0.0
    %1910 = vmatpush2.msra.mxu0 0.0
    %1911 = vmatprep.subr.mxu0 0.0
    %1912 = vmatpush2.msra.mxu0 0.0
    %1913 = vmatprep.subr.mxu0 0.0
    %1914 = vmatpush2.msra.mxu0 0.0
    %1915 = vmatprep.subr.mxu0 0.0
    %1916 = vmatpush2.msra.mxu0 0.0
    %1917 = vmatprep.subr.mxu0 0.0
    %1918 = vmatpush2.msra.mxu0 0.0
    %1919 = vmatprep.subr.mxu0 0.0
    %1920 = vmatpush2.msra.mxu0 0.0
    %1921 = vmatprep.subr.mxu0 0.0
    %1922 = vmatpush2.msra.mxu0 0.0
    %1923 = vmatprep.subr.mxu0 0.0
    %1924 = vmatpush2.msra.mxu0 0.0
    %1925 = vmatprep.subr.mxu0 0.0
    %1926 = vmatpush2.msra.mxu0 0.0
    %1927 = vmatprep.mubr.f32.mxu0 0.0
    %v1928 = vand.u32 %v54, 4294901760
    %1929 = vmatmul.mubr.f32.gmra.mxu0 %v1928
    %v1930 = vpop.f32.mrf.mxu0
    %v1931 = vadd.f32 %v1827, %v1930
    %v1932 = vpop.f32.mrf.mxu0
    %v1933 = vadd.f32 %v1829, %v1932
    %1934 = vdwg.mxu0
    %v1935 = vand.u32 %v180, 4294901760
    %1936 = vmatprep.subr.mxu0 %v1935
    %v1937 = vand.u32 %v179, 4294901760
    %1938 = vmatpush1.msra.mxu0 %v1937
    %v1939 = vand.u32 %v172, 4294901760
    %1940 = vmatprep.subr.mxu0 %v1939
    %v1941 = vand.u32 %v171, 4294901760
    %1942 = vmatpush1.msra.mxu0 %v1941
    %v1943 = vand.u32 %v164, 4294901760
    %1944 = vmatprep.subr.mxu0 %v1943
    %v1945 = vand.u32 %v163, 4294901760
    %1946 = vmatpush1.msra.mxu0 %v1945
    %v1947 = vand.u32 %v156, 4294901760
    %1948 = vmatprep.subr.mxu0 %v1947
    %v1949 = vand.u32 %v155, 4294901760
    %1950 = vmatpush1.msra.mxu0 %v1949
    %v1951 = vand.u32 %v148, 4294901760
    %1952 = vmatprep.subr.mxu0 %v1951
    %v1953 = vand.u32 %v147, 4294901760
    %1954 = vmatpush1.msra.mxu0 %v1953
    %v1955 = vand.u32 %v140, 4294901760
    %1956 = vmatprep.subr.mxu0 %v1955
    %v1957 = vand.u32 %v139, 4294901760
    %1958 = vmatpush1.msra.mxu0 %v1957
    %v1959 = vand.u32 %v132, 4294901760
    %1960 = vmatprep.subr.mxu0 %v1959
    %v1961 = vand.u32 %v131, 4294901760
    %1962 = vmatpush1.msra.mxu0 %v1961
    %v1963 = vand.u32 %v124, 4294901760
    %1964 = vmatprep.subr.mxu0 %v1963
    %v1965 = vand.u32 %v123, 4294901760
    %1966 = vmatpush1.msra.mxu0 %v1965
    %v1967 = vand.u32 %v116, 4294901760
    %1968 = vmatprep.subr.mxu0 %v1967
    %v1969 = vand.u32 %v115, 4294901760
    %1970 = vmatpush1.msra.mxu0 %v1969
    %v1971 = vand.u32 %v108, 4294901760
    %1972 = vmatprep.subr.mxu0 %v1971
    %v1973 = vand.u32 %v107, 4294901760
    %1974 = vmatpush1.msra.mxu0 %v1973
    %v1975 = vand.u32 %v100, 4294901760
    %1976 = vmatprep.subr.mxu0 %v1975
    %v1977 = vand.u32 %v99, 4294901760
    %1978 = vmatpush1.msra.mxu0 %v1977
    %v1979 = vand.u32 %v92, 4294901760
    %1980 = vmatprep.subr.mxu0 %v1979
    %v1981 = vand.u32 %v91, 4294901760
    %1982 = vmatpush1.msra.mxu0 %v1981
    %v1983 = vand.u32 %v84, 4294901760
    %1984 = vmatprep.subr.mxu0 %v1983
    %v1985 = vand.u32 %v83, 4294901760
    %1986 = vmatpush1.msra.mxu0 %v1985
    %v1987 = vand.u32 %v76, 4294901760
    %1988 = vmatprep.subr.mxu0 %v1987
    %v1989 = vand.u32 %v75, 4294901760
    %1990 = vmatpush1.msra.mxu0 %v1989
    %v1991 = vand.u32 %v68, 4294901760
    %1992 = vmatprep.subr.mxu0 %v1991
    %v1993 = vand.u32 %v67, 4294901760
    %1994 = vmatpush1.msra.mxu0 %v1993
    %v1995 = vand.u32 %v60, 4294901760
    %1996 = vmatprep.subr.mxu0 %v1995
    %v1997 = vand.u32 %v59, 4294901760
    %1998 = vmatpush1.msra.mxu0 %v1997
    %1999 = vmatprep.subr.mxu0 0.0
    %2000 = vmatpush2.msra.mxu0 0.0
    %2001 = vmatprep.subr.mxu0 0.0
    %2002 = vmatpush2.msra.mxu0 0.0
    %2003 = vmatprep.subr.mxu0 0.0
    %2004 = vmatpush2.msra.mxu0 0.0
    %2005 = vmatprep.subr.mxu0 0.0
    %2006 = vmatpush2.msra.mxu0 0.0
    %2007 = vmatprep.subr.mxu0 0.0
    %2008 = vmatpush2.msra.mxu0 0.0
    %2009 = vmatprep.subr.mxu0 0.0
    %2010 = vmatpush2.msra.mxu0 0.0
    %2011 = vmatprep.subr.mxu0 0.0
    %2012 = vmatpush2.msra.mxu0 0.0
    %2013 = vmatprep.subr.mxu0 0.0
    %2014 = vmatpush2.msra.mxu0 0.0
    %2015 = vmatprep.subr.mxu0 0.0
    %2016 = vmatpush2.msra.mxu0 0.0
    %2017 = vmatprep.subr.mxu0 0.0
    %2018 = vmatpush2.msra.mxu0 0.0
    %2019 = vmatprep.subr.mxu0 0.0
    %2020 = vmatpush2.msra.mxu0 0.0
    %2021 = vmatprep.subr.mxu0 0.0
    %2022 = vmatpush2.msra.mxu0 0.0
    %2023 = vmatprep.subr.mxu0 0.0
    %2024 = vmatpush2.msra.mxu0 0.0
    %2025 = vmatprep.subr.mxu0 0.0
    %2026 = vmatpush2.msra.mxu0 0.0
    %2027 = vmatprep.subr.mxu0 0.0
    %2028 = vmatpush2.msra.mxu0 0.0
    %2029 = vmatprep.subr.mxu0 0.0
    %2030 = vmatpush2.msra.mxu0 0.0
    %2031 = vmatprep.mubr.f32.mxu0 0.0
    %v2032 = vand.u32 %v54, 4294901760
    %v2033 = vsub.f32 %v54, %v2032
    %v2034 = vand.u32 %v2033, 4294901760
    %v2035 = vsub.f32 %v2033, %v2034
    %v2036 = vand.u32 %v2035, 4294901760
    %2037 = vmatmul.mubr.f32.gmra.mxu0 %v2036
    %v2038 = vpop.f32.mrf.mxu0
    %v2039 = vadd.f32 %v204, %v2038
    %v2040 = vpop.f32.mrf.mxu0
    %v2041 = vadd.f32 %v208, %v2040
    %2042 = vdwg.mxu0
    %v2043 = vand.u32 %v180, 4294901760
    %v2044 = vsub.f32 %v180, %v2043
    %v2045 = vand.u32 %v2044, 4294901760
    %v2046 = vsub.f32 %v2044, %v2045
    %v2047 = vand.u32 %v2046, 4294901760
    %2048 = vmatprep.subr.mxu0 %v2047
    %v2049 = vand.u32 %v179, 4294901760
    %v2050 = vsub.f32 %v179, %v2049
    %v2051 = vand.u32 %v2050, 4294901760
    %v2052 = vsub.f32 %v2050, %v2051
    %v2053 = vand.u32 %v2052, 4294901760
    %2054 = vmatpush1.msra.mxu0 %v2053
    %v2055 = vand.u32 %v172, 4294901760
    %v2056 = vsub.f32 %v172, %v2055
    %v2057 = vand.u32 %v2056, 4294901760
    %v2058 = vsub.f32 %v2056, %v2057
    %v2059 = vand.u32 %v2058, 4294901760
    %2060 = vmatprep.subr.mxu0 %v2059
    %v2061 = vand.u32 %v171, 4294901760
    %v2062 = vsub.f32 %v171, %v2061
    %v2063 = vand.u32 %v2062, 4294901760
    %v2064 = vsub.f32 %v2062, %v2063
    %v2065 = vand.u32 %v2064, 4294901760
    %2066 = vmatpush1.msra.mxu0 %v2065
    %v2067 = vand.u32 %v164, 4294901760
    %v2068 = vsub.f32 %v164, %v2067
    %v2069 = vand.u32 %v2068, 4294901760
    %v2070 = vsub.f32 %v2068, %v2069
    %v2071 = vand.u32 %v2070, 4294901760
    %2072 = vmatprep.subr.mxu0 %v2071
    %v2073 = vand.u32 %v163, 4294901760
    %v2074 = vsub.f32 %v163, %v2073
    %v2075 = vand.u32 %v2074, 4294901760
    %v2076 = vsub.f32 %v2074, %v2075
    %v2077 = vand.u32 %v2076, 4294901760
    %2078 = vmatpush1.msra.mxu0 %v2077
    %v2079 = vand.u32 %v156, 4294901760
    %v2080 = vsub.f32 %v156, %v2079
    %v2081 = vand.u32 %v2080, 4294901760
    %v2082 = vsub.f32 %v2080, %v2081
    %v2083 = vand.u32 %v2082, 4294901760
    %2084 = vmatprep.subr.mxu0 %v2083
    %v2085 = vand.u32 %v155, 4294901760
    %v2086 = vsub.f32 %v155, %v2085
    %v2087 = vand.u32 %v2086, 4294901760
    %v2088 = vsub.f32 %v2086, %v2087
    %v2089 = vand.u32 %v2088, 4294901760
    %2090 = vmatpush1.msra.mxu0 %v2089
    %v2091 = vand.u32 %v148, 4294901760
    %v2092 = vsub.f32 %v148, %v2091
    %v2093 = vand.u32 %v2092, 4294901760
    %v2094 = vsub.f32 %v2092, %v2093
    %v2095 = vand.u32 %v2094, 4294901760
    %2096 = vmatprep.subr.mxu0 %v2095
    %v2097 = vand.u32 %v147, 4294901760
    %v2098 = vsub.f32 %v147, %v2097
    %v2099 = vand.u32 %v2098, 4294901760
    %v2100 = vsub.f32 %v2098, %v2099
    %v2101 = vand.u32 %v2100, 4294901760
    %2102 = vmatpush1.msra.mxu0 %v2101
    %v2103 = vand.u32 %v140, 4294901760
    %v2104 = vsub.f32 %v140, %v2103
    %v2105 = vand.u32 %v2104, 4294901760
    %v2106 = vsub.f32 %v2104, %v2105
    %v2107 = vand.u32 %v2106, 4294901760
    %2108 = vmatprep.subr.mxu0 %v2107
    %v2109 = vand.u32 %v139, 4294901760
    %v2110 = vsub.f32 %v139, %v2109
    %v2111 = vand.u32 %v2110, 4294901760
    %v2112 = vsub.f32 %v2110, %v2111
    %v2113 = vand.u32 %v2112, 4294901760
    %2114 = vmatpush1.msra.mxu0 %v2113
    %v2115 = vand.u32 %v132, 4294901760
    %v2116 = vsub.f32 %v132, %v2115
    %v2117 = vand.u32 %v2116, 4294901760
    %v2118 = vsub.f32 %v2116, %v2117
    %v2119 = vand.u32 %v2118, 4294901760
    %2120 = vmatprep.subr.mxu0 %v2119
    %v2121 = vand.u32 %v131, 4294901760
    %v2122 = vsub.f32 %v131, %v2121
    %v2123 = vand.u32 %v2122, 4294901760
    %v2124 = vsub.f32 %v2122, %v2123
    %v2125 = vand.u32 %v2124, 4294901760
    %2126 = vmatpush1.msra.mxu0 %v2125
    %v2127 = vand.u32 %v124, 4294901760
    %v2128 = vsub.f32 %v124, %v2127
    %v2129 = vand.u32 %v2128, 4294901760
    %v2130 = vsub.f32 %v2128, %v2129
    %v2131 = vand.u32 %v2130, 4294901760
    %2132 = vmatprep.subr.mxu0 %v2131
    %v2133 = vand.u32 %v123, 4294901760
    %v2134 = vsub.f32 %v123, %v2133
    %v2135 = vand.u32 %v2134, 4294901760
    %v2136 = vsub.f32 %v2134, %v2135
    %v2137 = vand.u32 %v2136, 4294901760
    %2138 = vmatpush1.msra.mxu0 %v2137
    %v2139 = vand.u32 %v116, 4294901760
    %v2140 = vsub.f32 %v116, %v2139
    %v2141 = vand.u32 %v2140, 4294901760
    %v2142 = vsub.f32 %v2140, %v2141
    %v2143 = vand.u32 %v2142, 4294901760
    %2144 = vmatprep.subr.mxu0 %v2143
    %v2145 = vand.u32 %v115, 4294901760
    %v2146 = vsub.f32 %v115, %v2145
    %v2147 = vand.u32 %v2146, 4294901760
    %v2148 = vsub.f32 %v2146, %v2147
    %v2149 = vand.u32 %v2148, 4294901760
    %2150 = vmatpush1.msra.mxu0 %v2149
    %v2151 = vand.u32 %v108, 4294901760
    %v2152 = vsub.f32 %v108, %v2151
    %v2153 = vand.u32 %v2152, 4294901760
    %v2154 = vsub.f32 %v2152, %v2153
    %v2155 = vand.u32 %v2154, 4294901760
    %2156 = vmatprep.subr.mxu0 %v2155
    %v2157 = vand.u32 %v107, 4294901760
    %v2158 = vsub.f32 %v107, %v2157
    %v2159 = vand.u32 %v2158, 4294901760
    %v2160 = vsub.f32 %v2158, %v2159
    %v2161 = vand.u32 %v2160, 4294901760
    %2162 = vmatpush1.msra.mxu0 %v2161
    %v2163 = vand.u32 %v100, 4294901760
    %v2164 = vsub.f32 %v100, %v2163
    %v2165 = vand.u32 %v2164, 4294901760
    %v2166 = vsub.f32 %v2164, %v2165
    %v2167 = vand.u32 %v2166, 4294901760
    %2168 = vmatprep.subr.mxu0 %v2167
    %v2169 = vand.u32 %v99, 4294901760
    %v2170 = vsub.f32 %v99, %v2169
    %v2171 = vand.u32 %v2170, 4294901760
    %v2172 = vsub.f32 %v2170, %v2171
    %v2173 = vand.u32 %v2172, 4294901760
    %2174 = vmatpush1.msra.mxu0 %v2173
    %v2175 = vand.u32 %v92, 4294901760
    %v2176 = vsub.f32 %v92, %v2175
    %v2177 = vand.u32 %v2176, 4294901760
    %v2178 = vsub.f32 %v2176, %v2177
    %v2179 = vand.u32 %v2178, 4294901760
    %2180 = vmatprep.subr.mxu0 %v2179
    %v2181 = vand.u32 %v91, 4294901760
    %v2182 = vsub.f32 %v91, %v2181
    %v2183 = vand.u32 %v2182, 4294901760
    %v2184 = vsub.f32 %v2182, %v2183
    %v2185 = vand.u32 %v2184, 4294901760
    %2186 = vmatpush1.msra.mxu0 %v2185
    %v2187 = vand.u32 %v84, 4294901760
    %v2188 = vsub.f32 %v84, %v2187
    %v2189 = vand.u32 %v2188, 4294901760
    %v2190 = vsub.f32 %v2188, %v2189
    %v2191 = vand.u32 %v2190, 4294901760
    %2192 = vmatprep.subr.mxu0 %v2191
    %v2193 = vand.u32 %v83, 4294901760
    %v2194 = vsub.f32 %v83, %v2193
    %v2195 = vand.u32 %v2194, 4294901760
    %v2196 = vsub.f32 %v2194, %v2195
    %v2197 = vand.u32 %v2196, 4294901760
    %2198 = vmatpush1.msra.mxu0 %v2197
    %v2199 = vand.u32 %v76, 4294901760
    %v2200 = vsub.f32 %v76, %v2199
    %v2201 = vand.u32 %v2200, 4294901760
    %v2202 = vsub.f32 %v2200, %v2201
    %v2203 = vand.u32 %v2202, 4294901760
    %2204 = vmatprep.subr.mxu0 %v2203
    %v2205 = vand.u32 %v75, 4294901760
    %v2206 = vsub.f32 %v75, %v2205
    %v2207 = vand.u32 %v2206, 4294901760
    %v2208 = vsub.f32 %v2206, %v2207
    %v2209 = vand.u32 %v2208, 4294901760
    %2210 = vmatpush1.msra.mxu0 %v2209
    %v2211 = vand.u32 %v68, 4294901760
    %v2212 = vsub.f32 %v68, %v2211
    %v2213 = vand.u32 %v2212, 4294901760
    %v2214 = vsub.f32 %v2212, %v2213
    %v2215 = vand.u32 %v2214, 4294901760
    %2216 = vmatprep.subr.mxu0 %v2215
    %v2217 = vand.u32 %v67, 4294901760
    %v2218 = vsub.f32 %v67, %v2217
    %v2219 = vand.u32 %v2218, 4294901760
    %v2220 = vsub.f32 %v2218, %v2219
    %v2221 = vand.u32 %v2220, 4294901760
    %2222 = vmatpush1.msra.mxu0 %v2221
    %v2223 = vand.u32 %v60, 4294901760
    %v2224 = vsub.f32 %v60, %v2223
    %v2225 = vand.u32 %v2224, 4294901760
    %v2226 = vsub.f32 %v2224, %v2225
    %v2227 = vand.u32 %v2226, 4294901760
    %2228 = vmatprep.subr.mxu0 %v2227
    %v2229 = vand.u32 %v59, 4294901760
    %v2230 = vsub.f32 %v59, %v2229
    %v2231 = vand.u32 %v2230, 4294901760
    %v2232 = vsub.f32 %v2230, %v2231
    %v2233 = vand.u32 %v2232, 4294901760
    %2234 = vmatpush1.msra.mxu0 %v2233
    %2235 = vmatprep.subr.mxu0 0.0
    %2236 = vmatpush2.msra.mxu0 0.0
    %2237 = vmatprep.subr.mxu0 0.0
    %2238 = vmatpush2.msra.mxu0 0.0
    %2239 = vmatprep.subr.mxu0 0.0
    %2240 = vmatpush2.msra.mxu0 0.0
    %2241 = vmatprep.subr.mxu0 0.0
    %2242 = vmatpush2.msra.mxu0 0.0
    %2243 = vmatprep.subr.mxu0 0.0
    %2244 = vmatpush2.msra.mxu0 0.0
    %2245 = vmatprep.subr.mxu0 0.0
    %2246 = vmatpush2.msra.mxu0 0.0
    %2247 = vmatprep.subr.mxu0 0.0
    %2248 = vmatpush2.msra.mxu0 0.0
    %2249 = vmatprep.subr.mxu0 0.0
    %2250 = vmatpush2.msra.mxu0 0.0
    %2251 = vmatprep.subr.mxu0 0.0
    %2252 = vmatpush2.msra.mxu0 0.0
    %2253 = vmatprep.subr.mxu0 0.0
    %2254 = vmatpush2.msra.mxu0 0.0
    %2255 = vmatprep.subr.mxu0 0.0
    %2256 = vmatpush2.msra.mxu0 0.0
    %2257 = vmatprep.subr.mxu0 0.0
    %2258 = vmatpush2.msra.mxu0 0.0
    %2259 = vmatprep.subr.mxu0 0.0
    %2260 = vmatpush2.msra.mxu0 0.0
    %2261 = vmatprep.subr.mxu0 0.0
    %2262 = vmatpush2.msra.mxu0 0.0
    %2263 = vmatprep.subr.mxu0 0.0
    %2264 = vmatpush2.msra.mxu0 0.0
    %2265 = vmatprep.subr.mxu0 0.0
    %2266 = vmatpush2.msra.mxu0 0.0
    %2267 = vmatprep.mubr.f32.mxu0 0.0
    %v2268 = vand.u32 %v54, 4294901760
    %2269 = vmatmul.mubr.f32.gmra.mxu0 %v2268
    %v2270 = vpop.f32.mrf.mxu0
    %v2271 = vadd.f32 %v2039, %v2270
    %v2272 = vpop.f32.mrf.mxu0
    %v2273 = vadd.f32 %v2041, %v2272
    %2274 = vdwg.mxu0
    %v2275 = vand.u32 %v180, 4294901760
    %v2276 = vsub.f32 %v180, %v2275
    %2277 = vmatprep.subr.mxu0 %v2276
    %v2278 = vand.u32 %v179, 4294901760
    %v2279 = vsub.f32 %v179, %v2278
    %2280 = vmatpush1.msra.mxu0 %v2279
    %v2281 = vand.u32 %v172, 4294901760
    %v2282 = vsub.f32 %v172, %v2281
    %2283 = vmatprep.subr.mxu0 %v2282
    %v2284 = vand.u32 %v171, 4294901760
    %v2285 = vsub.f32 %v171, %v2284
    %2286 = vmatpush1.msra.mxu0 %v2285
    %v2287 = vand.u32 %v164, 4294901760
    %v2288 = vsub.f32 %v164, %v2287
    %2289 = vmatprep.subr.mxu0 %v2288
    %v2290 = vand.u32 %v163, 4294901760
    %v2291 = vsub.f32 %v163, %v2290
    %2292 = vmatpush1.msra.mxu0 %v2291
    %v2293 = vand.u32 %v156, 4294901760
    %v2294 = vsub.f32 %v156, %v2293
    %2295 = vmatprep.subr.mxu0 %v2294
    %v2296 = vand.u32 %v155, 4294901760
    %v2297 = vsub.f32 %v155, %v2296
    %2298 = vmatpush1.msra.mxu0 %v2297
    %v2299 = vand.u32 %v148, 4294901760
    %v2300 = vsub.f32 %v148, %v2299
    %2301 = vmatprep.subr.mxu0 %v2300
    %v2302 = vand.u32 %v147, 4294901760
    %v2303 = vsub.f32 %v147, %v2302
    %2304 = vmatpush1.msra.mxu0 %v2303
    %v2305 = vand.u32 %v140, 4294901760
    %v2306 = vsub.f32 %v140, %v2305
    %2307 = vmatprep.subr.mxu0 %v2306
    %v2308 = vand.u32 %v139, 4294901760
    %v2309 = vsub.f32 %v139, %v2308
    %2310 = vmatpush1.msra.mxu0 %v2309
    %v2311 = vand.u32 %v132, 4294901760
    %v2312 = vsub.f32 %v132, %v2311
    %2313 = vmatprep.subr.mxu0 %v2312
    %v2314 = vand.u32 %v131, 4294901760
    %v2315 = vsub.f32 %v131, %v2314
    %2316 = vmatpush1.msra.mxu0 %v2315
    %v2317 = vand.u32 %v124, 4294901760
    %v2318 = vsub.f32 %v124, %v2317
    %2319 = vmatprep.subr.mxu0 %v2318
    %v2320 = vand.u32 %v123, 4294901760
    %v2321 = vsub.f32 %v123, %v2320
    %2322 = vmatpush1.msra.mxu0 %v2321
    %v2323 = vand.u32 %v116, 4294901760
    %v2324 = vsub.f32 %v116, %v2323
    %2325 = vmatprep.subr.mxu0 %v2324
    %v2326 = vand.u32 %v115, 4294901760
    %v2327 = vsub.f32 %v115, %v2326
    %2328 = vmatpush1.msra.mxu0 %v2327
    %v2329 = vand.u32 %v108, 4294901760
    %v2330 = vsub.f32 %v108, %v2329
    %2331 = vmatprep.subr.mxu0 %v2330
    %v2332 = vand.u32 %v107, 4294901760
    %v2333 = vsub.f32 %v107, %v2332
    %2334 = vmatpush1.msra.mxu0 %v2333
    %v2335 = vand.u32 %v100, 4294901760
    %v2336 = vsub.f32 %v100, %v2335
    %2337 = vmatprep.subr.mxu0 %v2336
    %v2338 = vand.u32 %v99, 4294901760
    %v2339 = vsub.f32 %v99, %v2338
    %2340 = vmatpush1.msra.mxu0 %v2339
    %v2341 = vand.u32 %v92, 4294901760
    %v2342 = vsub.f32 %v92, %v2341
    %2343 = vmatprep.subr.mxu0 %v2342
    %v2344 = vand.u32 %v91, 4294901760
    %v2345 = vsub.f32 %v91, %v2344
    %2346 = vmatpush1.msra.mxu0 %v2345
    %v2347 = vand.u32 %v84, 4294901760
    %v2348 = vsub.f32 %v84, %v2347
    %2349 = vmatprep.subr.mxu0 %v2348
    %v2350 = vand.u32 %v83, 4294901760
    %v2351 = vsub.f32 %v83, %v2350
    %2352 = vmatpush1.msra.mxu0 %v2351
    %v2353 = vand.u32 %v76, 4294901760
    %v2354 = vsub.f32 %v76, %v2353
    %2355 = vmatprep.subr.mxu0 %v2354
    %v2356 = vand.u32 %v75, 4294901760
    %v2357 = vsub.f32 %v75, %v2356
    %2358 = vmatpush1.msra.mxu0 %v2357
    %v2359 = vand.u32 %v68, 4294901760
    %v2360 = vsub.f32 %v68, %v2359
    %2361 = vmatprep.subr.mxu0 %v2360
    %v2362 = vand.u32 %v67, 4294901760
    %v2363 = vsub.f32 %v67, %v2362
    %2364 = vmatpush1.msra.mxu0 %v2363
    %v2365 = vand.u32 %v60, 4294901760
    %v2366 = vsub.f32 %v60, %v2365
    %2367 = vmatprep.subr.mxu0 %v2366
    %v2368 = vand.u32 %v59, 4294901760
    %v2369 = vsub.f32 %v59, %v2368
    %2370 = vmatpush1.msra.mxu0 %v2369
    %2371 = vmatprep.subr.mxu0 0.0
    %2372 = vmatpush2.msra.mxu0 0.0
    %2373 = vmatprep.subr.mxu0 0.0
    %2374 = vmatpush2.msra.mxu0 0.0
    %2375 = vmatprep.subr.mxu0 0.0
    %2376 = vmatpush2.msra.mxu0 0.0
    %2377 = vmatprep.subr.mxu0 0.0
    %2378 = vmatpush2.msra.mxu0 0.0
    %2379 = vmatprep.subr.mxu0 0.0
    %2380 = vmatpush2.msra.mxu0 0.0
    %2381 = vmatprep.subr.mxu0 0.0
    %2382 = vmatpush2.msra.mxu0 0.0
    %2383 = vmatprep.subr.mxu0 0.0
    %2384 = vmatpush2.msra.mxu0 0.0
    %2385 = vmatprep.subr.mxu0 0.0
    %2386 = vmatpush2.msra.mxu0 0.0
    %2387 = vmatprep.subr.mxu0 0.0
    %2388 = vmatpush2.msra.mxu0 0.0
    %2389 = vmatprep.subr.mxu0 0.0
    %2390 = vmatpush2.msra.mxu0 0.0
    %2391 = vmatprep.subr.mxu0 0.0
    %2392 = vmatpush2.msra.mxu0 0.0
    %2393 = vmatprep.subr.mxu0 0.0
    %2394 = vmatpush2.msra.mxu0 0.0
    %2395 = vmatprep.subr.mxu0 0.0
    %2396 = vmatpush2.msra.mxu0 0.0
    %2397 = vmatprep.subr.mxu0 0.0
    %2398 = vmatpush2.msra.mxu0 0.0
    %2399 = vmatprep.subr.mxu0 0.0
    %2400 = vmatpush2.msra.mxu0 0.0
    %2401 = vmatprep.subr.mxu0 0.0
    %2402 = vmatpush2.msra.mxu0 0.0
    %2403 = vmatprep.mubr.f32.mxu0 0.0
    %v2404 = vand.u32 %v54, 4294901760
    %v2405 = vsub.f32 %v54, %v2404
    %2406 = vmatmul.mubr.f32.gmra.mxu0 %v2405
    %v2407 = vpop.f32.mrf.mxu0
    %v2408 = vadd.f32 %v2271, %v2407
    %v2409 = vpop.f32.mrf.mxu0
    %v2410 = vadd.f32 %v2273, %v2409
    %2411 = vdwg.mxu0
    %v2412 = vand.u32 %v180, 4294901760
    %2413 = vmatprep.subr.mxu0 %v2412
    %v2414 = vand.u32 %v179, 4294901760
    %2415 = vmatpush1.msra.mxu0 %v2414
    %v2416 = vand.u32 %v172, 4294901760
    %2417 = vmatprep.subr.mxu0 %v2416
    %v2418 = vand.u32 %v171, 4294901760
    %2419 = vmatpush1.msra.mxu0 %v2418
    %v2420 = vand.u32 %v164, 4294901760
    %2421 = vmatprep.subr.mxu0 %v2420
    %v2422 = vand.u32 %v163, 4294901760
    %2423 = vmatpush1.msra.mxu0 %v2422
    %v2424 = vand.u32 %v156, 4294901760
    %2425 = vmatprep.subr.mxu0 %v2424
    %v2426 = vand.u32 %v155, 4294901760
    %2427 = vmatpush1.msra.mxu0 %v2426
    %v2428 = vand.u32 %v148, 4294901760
    %2429 = vmatprep.subr.mxu0 %v2428
    %v2430 = vand.u32 %v147, 4294901760
    %2431 = vmatpush1.msra.mxu0 %v2430
    %v2432 = vand.u32 %v140, 4294901760
    %2433 = vmatprep.subr.mxu0 %v2432
    %v2434 = vand.u32 %v139, 4294901760
    %2435 = vmatpush1.msra.mxu0 %v2434
    %v2436 = vand.u32 %v132, 4294901760
    %2437 = vmatprep.subr.mxu0 %v2436
    %v2438 = vand.u32 %v131, 4294901760
    %2439 = vmatpush1.msra.mxu0 %v2438
    %v2440 = vand.u32 %v124, 4294901760
    %2441 = vmatprep.subr.mxu0 %v2440
    %v2442 = vand.u32 %v123, 4294901760
    %2443 = vmatpush1.msra.mxu0 %v2442
    %v2444 = vand.u32 %v116, 4294901760
    %2445 = vmatprep.subr.mxu0 %v2444
    %v2446 = vand.u32 %v115, 4294901760
    %2447 = vmatpush1.msra.mxu0 %v2446
    %v2448 = vand.u32 %v108, 4294901760
    %2449 = vmatprep.subr.mxu0 %v2448
    %v2450 = vand.u32 %v107, 4294901760
    %2451 = vmatpush1.msra.mxu0 %v2450
    %v2452 = vand.u32 %v100, 4294901760
    %2453 = vmatprep.subr.mxu0 %v2452
    %v2454 = vand.u32 %v99, 4294901760
    %2455 = vmatpush1.msra.mxu0 %v2454
    %v2456 = vand.u32 %v92, 4294901760
    %2457 = vmatprep.subr.mxu0 %v2456
    %v2458 = vand.u32 %v91, 4294901760
    %2459 = vmatpush1.msra.mxu0 %v2458
    %v2460 = vand.u32 %v84, 4294901760
    %2461 = vmatprep.subr.mxu0 %v2460
    %v2462 = vand.u32 %v83, 4294901760
    %2463 = vmatpush1.msra.mxu0 %v2462
    %v2464 = vand.u32 %v76, 4294901760
    %2465 = vmatprep.subr.mxu0 %v2464
    %v2466 = vand.u32 %v75, 4294901760
    %2467 = vmatpush1.msra.mxu0 %v2466
    %v2468 = vand.u32 %v68, 4294901760
    %2469 = vmatprep.subr.mxu0 %v2468
    %v2470 = vand.u32 %v67, 4294901760
    %2471 = vmatpush1.msra.mxu0 %v2470
    %v2472 = vand.u32 %v60, 4294901760
    %2473 = vmatprep.subr.mxu0 %v2472
    %v2474 = vand.u32 %v59, 4294901760
    %2475 = vmatpush1.msra.mxu0 %v2474
    %2476 = vmatprep.subr.mxu0 0.0
    %2477 = vmatpush2.msra.mxu0 0.0
    %2478 = vmatprep.subr.mxu0 0.0
    %2479 = vmatpush2.msra.mxu0 0.0
    %2480 = vmatprep.subr.mxu0 0.0
    %2481 = vmatpush2.msra.mxu0 0.0
    %2482 = vmatprep.subr.mxu0 0.0
    %2483 = vmatpush2.msra.mxu0 0.0
    %2484 = vmatprep.subr.mxu0 0.0
    %2485 = vmatpush2.msra.mxu0 0.0
    %2486 = vmatprep.subr.mxu0 0.0
    %2487 = vmatpush2.msra.mxu0 0.0
    %2488 = vmatprep.subr.mxu0 0.0
    %2489 = vmatpush2.msra.mxu0 0.0
    %2490 = vmatprep.subr.mxu0 0.0
    %2491 = vmatpush2.msra.mxu0 0.0
    %2492 = vmatprep.subr.mxu0 0.0
    %2493 = vmatpush2.msra.mxu0 0.0
    %2494 = vmatprep.subr.mxu0 0.0
    %2495 = vmatpush2.msra.mxu0 0.0
    %2496 = vmatprep.subr.mxu0 0.0
    %2497 = vmatpush2.msra.mxu0 0.0
    %2498 = vmatprep.subr.mxu0 0.0
    %2499 = vmatpush2.msra.mxu0 0.0
    %2500 = vmatprep.subr.mxu0 0.0
    %2501 = vmatpush2.msra.mxu0 0.0
    %2502 = vmatprep.subr.mxu0 0.0
    %2503 = vmatpush2.msra.mxu0 0.0
    %2504 = vmatprep.subr.mxu0 0.0
    %2505 = vmatpush2.msra.mxu0 0.0
    %2506 = vmatprep.subr.mxu0 0.0
    %2507 = vmatpush2.msra.mxu0 0.0
    %2508 = vmatprep.mubr.f32.mxu0 0.0
    %v2509 = vand.u32 %v54, 4294901760
    %v2510 = vsub.f32 %v54, %v2509
    %v2511 = vand.u32 %v2510, 4294901760
    %2512 = vmatmul.mubr.f32.gmra.mxu0 %v2511
    %v2513 = vpop.f32.mrf.mxu0
    %v2514 = vadd.f32 %v2408, %v2513
    %v2515 = vpop.f32.mrf.mxu0
    %v2516 = vadd.f32 %v2410, %v2515
    %2517 = vdwg.mxu0
    %v2518 = vand.u32 %v180, 4294901760
    %v2519 = vsub.f32 %v180, %v2518
    %v2520 = vand.u32 %v2519, 4294901760
    %2521 = vmatprep.subr.mxu0 %v2520
    %v2522 = vand.u32 %v179, 4294901760
    %v2523 = vsub.f32 %v179, %v2522
    %v2524 = vand.u32 %v2523, 4294901760
    %2525 = vmatpush1.msra.mxu0 %v2524
    %v2526 = vand.u32 %v172, 4294901760
    %v2527 = vsub.f32 %v172, %v2526
    %v2528 = vand.u32 %v2527, 4294901760
    %2529 = vmatprep.subr.mxu0 %v2528
    %v2530 = vand.u32 %v171, 4294901760
    %v2531 = vsub.f32 %v171, %v2530
    %v2532 = vand.u32 %v2531, 4294901760
    %2533 = vmatpush1.msra.mxu0 %v2532
    %v2534 = vand.u32 %v164, 4294901760
    %v2535 = vsub.f32 %v164, %v2534
    %v2536 = vand.u32 %v2535, 4294901760
    %2537 = vmatprep.subr.mxu0 %v2536
    %v2538 = vand.u32 %v163, 4294901760
    %v2539 = vsub.f32 %v163, %v2538
    %v2540 = vand.u32 %v2539, 4294901760
    %2541 = vmatpush1.msra.mxu0 %v2540
    %v2542 = vand.u32 %v156, 4294901760
    %v2543 = vsub.f32 %v156, %v2542
    %v2544 = vand.u32 %v2543, 4294901760
    %2545 = vmatprep.subr.mxu0 %v2544
    %v2546 = vand.u32 %v155, 4294901760
    %v2547 = vsub.f32 %v155, %v2546
    %v2548 = vand.u32 %v2547, 4294901760
    %2549 = vmatpush1.msra.mxu0 %v2548
    %v2550 = vand.u32 %v148, 4294901760
    %v2551 = vsub.f32 %v148, %v2550
    %v2552 = vand.u32 %v2551, 4294901760
    %2553 = vmatprep.subr.mxu0 %v2552
    %v2554 = vand.u32 %v147, 4294901760
    %v2555 = vsub.f32 %v147, %v2554
    %v2556 = vand.u32 %v2555, 4294901760
    %2557 = vmatpush1.msra.mxu0 %v2556
    %v2558 = vand.u32 %v140, 4294901760
    %v2559 = vsub.f32 %v140, %v2558
    %v2560 = vand.u32 %v2559, 4294901760
    %2561 = vmatprep.subr.mxu0 %v2560
    %v2562 = vand.u32 %v139, 4294901760
    %v2563 = vsub.f32 %v139, %v2562
    %v2564 = vand.u32 %v2563, 4294901760
    %2565 = vmatpush1.msra.mxu0 %v2564
    %v2566 = vand.u32 %v132, 4294901760
    %v2567 = vsub.f32 %v132, %v2566
    %v2568 = vand.u32 %v2567, 4294901760
    %2569 = vmatprep.subr.mxu0 %v2568
    %v2570 = vand.u32 %v131, 4294901760
    %v2571 = vsub.f32 %v131, %v2570
    %v2572 = vand.u32 %v2571, 4294901760
    %2573 = vmatpush1.msra.mxu0 %v2572
    %v2574 = vand.u32 %v124, 4294901760
    %v2575 = vsub.f32 %v124, %v2574
    %v2576 = vand.u32 %v2575, 4294901760
    %2577 = vmatprep.subr.mxu0 %v2576
    %v2578 = vand.u32 %v123, 4294901760
    %v2579 = vsub.f32 %v123, %v2578
    %v2580 = vand.u32 %v2579, 4294901760
    %2581 = vmatpush1.msra.mxu0 %v2580
    %v2582 = vand.u32 %v116, 4294901760
    %v2583 = vsub.f32 %v116, %v2582
    %v2584 = vand.u32 %v2583, 4294901760
    %2585 = vmatprep.subr.mxu0 %v2584
    %v2586 = vand.u32 %v115, 4294901760
    %v2587 = vsub.f32 %v115, %v2586
    %v2588 = vand.u32 %v2587, 4294901760
    %2589 = vmatpush1.msra.mxu0 %v2588
    %v2590 = vand.u32 %v108, 4294901760
    %v2591 = vsub.f32 %v108, %v2590
    %v2592 = vand.u32 %v2591, 4294901760
    %2593 = vmatprep.subr.mxu0 %v2592
    %v2594 = vand.u32 %v107, 4294901760
    %v2595 = vsub.f32 %v107, %v2594
    %v2596 = vand.u32 %v2595, 4294901760
    %2597 = vmatpush1.msra.mxu0 %v2596
    %v2598 = vand.u32 %v100, 4294901760
    %v2599 = vsub.f32 %v100, %v2598
    %v2600 = vand.u32 %v2599, 4294901760
    %2601 = vmatprep.subr.mxu0 %v2600
    %v2602 = vand.u32 %v99, 4294901760
    %v2603 = vsub.f32 %v99, %v2602
    %v2604 = vand.u32 %v2603, 4294901760
    %2605 = vmatpush1.msra.mxu0 %v2604
    %v2606 = vand.u32 %v92, 4294901760
    %v2607 = vsub.f32 %v92, %v2606
    %v2608 = vand.u32 %v2607, 4294901760
    %2609 = vmatprep.subr.mxu0 %v2608
    %v2610 = vand.u32 %v91, 4294901760
    %v2611 = vsub.f32 %v91, %v2610
    %v2612 = vand.u32 %v2611, 4294901760
    %2613 = vmatpush1.msra.mxu0 %v2612
    %v2614 = vand.u32 %v84, 4294901760
    %v2615 = vsub.f32 %v84, %v2614
    %v2616 = vand.u32 %v2615, 4294901760
    %2617 = vmatprep.subr.mxu0 %v2616
    %v2618 = vand.u32 %v83, 4294901760
    %v2619 = vsub.f32 %v83, %v2618
    %v2620 = vand.u32 %v2619, 4294901760
    %2621 = vmatpush1.msra.mxu0 %v2620
    %v2622 = vand.u32 %v76, 4294901760
    %v2623 = vsub.f32 %v76, %v2622
    %v2624 = vand.u32 %v2623, 4294901760
    %2625 = vmatprep.subr.mxu0 %v2624
    %v2626 = vand.u32 %v75, 4294901760
    %v2627 = vsub.f32 %v75, %v2626
    %v2628 = vand.u32 %v2627, 4294901760
    %2629 = vmatpush1.msra.mxu0 %v2628
    %v2630 = vand.u32 %v68, 4294901760
    %v2631 = vsub.f32 %v68, %v2630
    %v2632 = vand.u32 %v2631, 4294901760
    %2633 = vmatprep.subr.mxu0 %v2632
    %v2634 = vand.u32 %v67, 4294901760
    %v2635 = vsub.f32 %v67, %v2634
    %v2636 = vand.u32 %v2635, 4294901760
    %2637 = vmatpush1.msra.mxu0 %v2636
    %v2638 = vand.u32 %v60, 4294901760
    %v2639 = vsub.f32 %v60, %v2638
    %v2640 = vand.u32 %v2639, 4294901760
    %2641 = vmatprep.subr.mxu0 %v2640
    %v2642 = vand.u32 %v59, 4294901760
    %v2643 = vsub.f32 %v59, %v2642
    %v2644 = vand.u32 %v2643, 4294901760
    %2645 = vmatpush1.msra.mxu0 %v2644
    %2646 = vmatprep.subr.mxu0 0.0
    %2647 = vmatpush2.msra.mxu0 0.0
    %2648 = vmatprep.subr.mxu0 0.0
    %2649 = vmatpush2.msra.mxu0 0.0
    %2650 = vmatprep.subr.mxu0 0.0
    %2651 = vmatpush2.msra.mxu0 0.0
    %2652 = vmatprep.subr.mxu0 0.0
    %2653 = vmatpush2.msra.mxu0 0.0
    %2654 = vmatprep.subr.mxu0 0.0
    %2655 = vmatpush2.msra.mxu0 0.0
    %2656 = vmatprep.subr.mxu0 0.0
    %2657 = vmatpush2.msra.mxu0 0.0
    %2658 = vmatprep.subr.mxu0 0.0
    %2659 = vmatpush2.msra.mxu0 0.0
    %2660 = vmatprep.subr.mxu0 0.0
    %2661 = vmatpush2.msra.mxu0 0.0
    %2662 = vmatprep.subr.mxu0 0.0
    %2663 = vmatpush2.msra.mxu0 0.0
    %2664 = vmatprep.subr.mxu0 0.0
    %2665 = vmatpush2.msra.mxu0 0.0
    %2666 = vmatprep.subr.mxu0 0.0
    %2667 = vmatpush2.msra.mxu0 0.0
    %2668 = vmatprep.subr.mxu0 0.0
    %2669 = vmatpush2.msra.mxu0 0.0
    %2670 = vmatprep.subr.mxu0 0.0
    %2671 = vmatpush2.msra.mxu0 0.0
    %2672 = vmatprep.subr.mxu0 0.0
    %2673 = vmatpush2.msra.mxu0 0.0
    %2674 = vmatprep.subr.mxu0 0.0
    %2675 = vmatpush2.msra.mxu0 0.0
    %2676 = vmatprep.subr.mxu0 0.0
    %2677 = vmatpush2.msra.mxu0 0.0
    %2678 = vmatprep.mubr.f32.mxu0 0.0
    %v2679 = vand.u32 %v54, 4294901760
    %2680 = vmatmul.mubr.f32.gmra.mxu0 %v2679
    %v2681 = vpop.f32.mrf.mxu0
    %v2682 = vadd.f32 %v2514, %v2681
    %v2683 = vpop.f32.mrf.mxu0
    %v2684 = vadd.f32 %v2516, %v2683
    %2685 = vdwg.mxu0
    %v2686 = vand.u32 %v180, 4294901760
    %2687 = vmatprep.subr.mxu0 %v2686
    %v2688 = vand.u32 %v179, 4294901760
    %2689 = vmatpush1.msra.mxu0 %v2688
    %v2690 = vand.u32 %v172, 4294901760
    %2691 = vmatprep.subr.mxu0 %v2690
    %v2692 = vand.u32 %v171, 4294901760
    %2693 = vmatpush1.msra.mxu0 %v2692
    %v2694 = vand.u32 %v164, 4294901760
    %2695 = vmatprep.subr.mxu0 %v2694
    %v2696 = vand.u32 %v163, 4294901760
    %2697 = vmatpush1.msra.mxu0 %v2696
    %v2698 = vand.u32 %v156, 4294901760
    %2699 = vmatprep.subr.mxu0 %v2698
    %v2700 = vand.u32 %v155, 4294901760
    %2701 = vmatpush1.msra.mxu0 %v2700
    %v2702 = vand.u32 %v148, 4294901760
    %2703 = vmatprep.subr.mxu0 %v2702
    %v2704 = vand.u32 %v147, 4294901760
    %2705 = vmatpush1.msra.mxu0 %v2704
    %v2706 = vand.u32 %v140, 4294901760
    %2707 = vmatprep.subr.mxu0 %v2706
    %v2708 = vand.u32 %v139, 4294901760
    %2709 = vmatpush1.msra.mxu0 %v2708
    %v2710 = vand.u32 %v132, 4294901760
    %2711 = vmatprep.subr.mxu0 %v2710
    %v2712 = vand.u32 %v131, 4294901760
    %2713 = vmatpush1.msra.mxu0 %v2712
    %v2714 = vand.u32 %v124, 4294901760
    %2715 = vmatprep.subr.mxu0 %v2714
    %v2716 = vand.u32 %v123, 4294901760
    %2717 = vmatpush1.msra.mxu0 %v2716
    %v2718 = vand.u32 %v116, 4294901760
    %2719 = vmatprep.subr.mxu0 %v2718
    %v2720 = vand.u32 %v115, 4294901760
    %2721 = vmatpush1.msra.mxu0 %v2720
    %v2722 = vand.u32 %v108, 4294901760
    %2723 = vmatprep.subr.mxu0 %v2722
    %v2724 = vand.u32 %v107, 4294901760
    %2725 = vmatpush1.msra.mxu0 %v2724
    %v2726 = vand.u32 %v100, 4294901760
    %2727 = vmatprep.subr.mxu0 %v2726
    %v2728 = vand.u32 %v99, 4294901760
    %2729 = vmatpush1.msra.mxu0 %v2728
    %v2730 = vand.u32 %v92, 4294901760
    %2731 = vmatprep.subr.mxu0 %v2730
    %v2732 = vand.u32 %v91, 4294901760
    %2733 = vmatpush1.msra.mxu0 %v2732
    %v2734 = vand.u32 %v84, 4294901760
    %2735 = vmatprep.subr.mxu0 %v2734
    %v2736 = vand.u32 %v83, 4294901760
    %2737 = vmatpush1.msra.mxu0 %v2736
    %v2738 = vand.u32 %v76, 4294901760
    %2739 = vmatprep.subr.mxu0 %v2738
    %v2740 = vand.u32 %v75, 4294901760
    %2741 = vmatpush1.msra.mxu0 %v2740
    %v2742 = vand.u32 %v68, 4294901760
    %2743 = vmatprep.subr.mxu0 %v2742
    %v2744 = vand.u32 %v67, 4294901760
    %2745 = vmatpush1.msra.mxu0 %v2744
    %v2746 = vand.u32 %v60, 4294901760
    %2747 = vmatprep.subr.mxu0 %v2746
    %v2748 = vand.u32 %v59, 4294901760
    %2749 = vmatpush1.msra.mxu0 %v2748
    %2750 = vmatprep.subr.mxu0 0.0
    %2751 = vmatpush2.msra.mxu0 0.0
    %2752 = vmatprep.subr.mxu0 0.0
    %2753 = vmatpush2.msra.mxu0 0.0
    %2754 = vmatprep.subr.mxu0 0.0
    %2755 = vmatpush2.msra.mxu0 0.0
    %2756 = vmatprep.subr.mxu0 0.0
    %2757 = vmatpush2.msra.mxu0 0.0
    %2758 = vmatprep.subr.mxu0 0.0
    %2759 = vmatpush2.msra.mxu0 0.0
    %2760 = vmatprep.subr.mxu0 0.0
    %2761 = vmatpush2.msra.mxu0 0.0
    %2762 = vmatprep.subr.mxu0 0.0
    %2763 = vmatpush2.msra.mxu0 0.0
    %2764 = vmatprep.subr.mxu0 0.0
    %2765 = vmatpush2.msra.mxu0 0.0
    %2766 = vmatprep.subr.mxu0 0.0
    %2767 = vmatpush2.msra.mxu0 0.0
    %2768 = vmatprep.subr.mxu0 0.0
    %2769 = vmatpush2.msra.mxu0 0.0
    %2770 = vmatprep.subr.mxu0 0.0
    %2771 = vmatpush2.msra.mxu0 0.0
    %2772 = vmatprep.subr.mxu0 0.0
    %2773 = vmatpush2.msra.mxu0 0.0
    %2774 = vmatprep.subr.mxu0 0.0
    %2775 = vmatpush2.msra.mxu0 0.0
    %2776 = vmatprep.subr.mxu0 0.0
    %2777 = vmatpush2.msra.mxu0 0.0
    %2778 = vmatprep.subr.mxu0 0.0
    %2779 = vmatpush2.msra.mxu0 0.0
    %2780 = vmatprep.subr.mxu0 0.0
    %2781 = vmatpush2.msra.mxu0 0.0
    %2782 = vmatprep.mubr.f32.mxu0 0.0
    %v2783 = vand.u32 %v54, 4294901760
    %2784 = vmatmul.mubr.f32.gmra.mxu0 %v2783
    %v2785 = vpop.f32.mrf.mxu0
    %v2786 = vadd.f32 %v2682, %v2785
    %v2787 = vpop.f32.mrf.mxu0
    %v2788 = vadd.f32 %v2684, %v2787
    %2789 = vdwg.mxu0
    %v2790 = vand.u32 %v182, 4294901760
    %2791 = vmatprep.subr.mxu0 %v2790
    %v2792 = vand.u32 %v181, 4294901760
    %2793 = vmatpush1.msra.mxu0 %v2792
    %v2794 = vand.u32 %v174, 4294901760
    %2795 = vmatprep.subr.mxu0 %v2794
    %v2796 = vand.u32 %v173, 4294901760
    %2797 = vmatpush1.msra.mxu0 %v2796
    %v2798 = vand.u32 %v166, 4294901760
    %2799 = vmatprep.subr.mxu0 %v2798
    %v2800 = vand.u32 %v165, 4294901760
    %2801 = vmatpush1.msra.mxu0 %v2800
    %v2802 = vand.u32 %v158, 4294901760
    %2803 = vmatprep.subr.mxu0 %v2802
    %v2804 = vand.u32 %v157, 4294901760
    %2805 = vmatpush1.msra.mxu0 %v2804
    %v2806 = vand.u32 %v150, 4294901760
    %2807 = vmatprep.subr.mxu0 %v2806
    %v2808 = vand.u32 %v149, 4294901760
    %2809 = vmatpush1.msra.mxu0 %v2808
    %v2810 = vand.u32 %v142, 4294901760
    %2811 = vmatprep.subr.mxu0 %v2810
    %v2812 = vand.u32 %v141, 4294901760
    %2813 = vmatpush1.msra.mxu0 %v2812
    %v2814 = vand.u32 %v134, 4294901760
    %2815 = vmatprep.subr.mxu0 %v2814
    %v2816 = vand.u32 %v133, 4294901760
    %2817 = vmatpush1.msra.mxu0 %v2816
    %v2818 = vand.u32 %v126, 4294901760
    %2819 = vmatprep.subr.mxu0 %v2818
    %v2820 = vand.u32 %v125, 4294901760
    %2821 = vmatpush1.msra.mxu0 %v2820
    %v2822 = vand.u32 %v118, 4294901760
    %2823 = vmatprep.subr.mxu0 %v2822
    %v2824 = vand.u32 %v117, 4294901760
    %2825 = vmatpush1.msra.mxu0 %v2824
    %v2826 = vand.u32 %v110, 4294901760
    %2827 = vmatprep.subr.mxu0 %v2826
    %v2828 = vand.u32 %v109, 4294901760
    %2829 = vmatpush1.msra.mxu0 %v2828
    %v2830 = vand.u32 %v102, 4294901760
    %2831 = vmatprep.subr.mxu0 %v2830
    %v2832 = vand.u32 %v101, 4294901760
    %2833 = vmatpush1.msra.mxu0 %v2832
    %v2834 = vand.u32 %v94, 4294901760
    %2835 = vmatprep.subr.mxu0 %v2834
    %v2836 = vand.u32 %v93, 4294901760
    %2837 = vmatpush1.msra.mxu0 %v2836
    %v2838 = vand.u32 %v86, 4294901760
    %2839 = vmatprep.subr.mxu0 %v2838
    %v2840 = vand.u32 %v85, 4294901760
    %2841 = vmatpush1.msra.mxu0 %v2840
    %v2842 = vand.u32 %v78, 4294901760
    %2843 = vmatprep.subr.mxu0 %v2842
    %v2844 = vand.u32 %v77, 4294901760
    %2845 = vmatpush1.msra.mxu0 %v2844
    %v2846 = vand.u32 %v70, 4294901760
    %2847 = vmatprep.subr.mxu0 %v2846
    %v2848 = vand.u32 %v69, 4294901760
    %2849 = vmatpush1.msra.mxu0 %v2848
    %v2850 = vand.u32 %v62, 4294901760
    %2851 = vmatprep.subr.mxu0 %v2850
    %v2852 = vand.u32 %v61, 4294901760
    %2853 = vmatpush1.msra.mxu0 %v2852
    %2854 = vmatprep.subr.mxu0 0.0
    %2855 = vmatpush2.msra.mxu0 0.0
    %2856 = vmatprep.subr.mxu0 0.0
    %2857 = vmatpush2.msra.mxu0 0.0
    %2858 = vmatprep.subr.mxu0 0.0
    %2859 = vmatpush2.msra.mxu0 0.0
    %2860 = vmatprep.subr.mxu0 0.0
    %2861 = vmatpush2.msra.mxu0 0.0
    %2862 = vmatprep.subr.mxu0 0.0
    %2863 = vmatpush2.msra.mxu0 0.0
    %2864 = vmatprep.subr.mxu0 0.0
    %2865 = vmatpush2.msra.mxu0 0.0
    %2866 = vmatprep.subr.mxu0 0.0
    %2867 = vmatpush2.msra.mxu0 0.0
    %2868 = vmatprep.subr.mxu0 0.0
    %2869 = vmatpush2.msra.mxu0 0.0
    %2870 = vmatprep.subr.mxu0 0.0
    %2871 = vmatpush2.msra.mxu0 0.0
    %2872 = vmatprep.subr.mxu0 0.0
    %2873 = vmatpush2.msra.mxu0 0.0
    %2874 = vmatprep.subr.mxu0 0.0
    %2875 = vmatpush2.msra.mxu0 0.0
    %2876 = vmatprep.subr.mxu0 0.0
    %2877 = vmatpush2.msra.mxu0 0.0
    %2878 = vmatprep.subr.mxu0 0.0
    %2879 = vmatpush2.msra.mxu0 0.0
    %2880 = vmatprep.subr.mxu0 0.0
    %2881 = vmatpush2.msra.mxu0 0.0
    %2882 = vmatprep.subr.mxu0 0.0
    %2883 = vmatpush2.msra.mxu0 0.0
    %2884 = vmatprep.subr.mxu0 0.0
    %2885 = vmatpush2.msra.mxu0 0.0
    %2886 = vmatprep.mubr.f32.mxu0 0.0
    %v2887 = vand.u32 %v54, 4294901760
    %v2888 = vsub.f32 %v54, %v2887
    %v2889 = vand.u32 %v2888, 4294901760
    %v2890 = vsub.f32 %v2888, %v2889
    %v2891 = vand.u32 %v2890, 4294901760
    %2892 = vmatmul.mubr.f32.gmra.mxu0 %v2891
    %v2893 = vpop.f32.mrf.mxu0
    %v2894 = vadd.f32 %v212, %v2893
    %v2895 = vpop.f32.mrf.mxu0
    %v2896 = vadd.f32 %v216, %v2895
    %2897 = vdwg.mxu0
    %v2898 = vand.u32 %v182, 4294901760
    %v2899 = vsub.f32 %v182, %v2898
    %v2900 = vand.u32 %v2899, 4294901760
    %v2901 = vsub.f32 %v2899, %v2900
    %v2902 = vand.u32 %v2901, 4294901760
    %2903 = vmatprep.subr.mxu0 %v2902
    %v2904 = vand.u32 %v181, 4294901760
    %v2905 = vsub.f32 %v181, %v2904
    %v2906 = vand.u32 %v2905, 4294901760
    %v2907 = vsub.f32 %v2905, %v2906
    %v2908 = vand.u32 %v2907, 4294901760
    %2909 = vmatpush1.msra.mxu0 %v2908
    %v2910 = vand.u32 %v174, 4294901760
    %v2911 = vsub.f32 %v174, %v2910
    %v2912 = vand.u32 %v2911, 4294901760
    %v2913 = vsub.f32 %v2911, %v2912
    %v2914 = vand.u32 %v2913, 4294901760
    %2915 = vmatprep.subr.mxu0 %v2914
    %v2916 = vand.u32 %v173, 4294901760
    %v2917 = vsub.f32 %v173, %v2916
    %v2918 = vand.u32 %v2917, 4294901760
    %v2919 = vsub.f32 %v2917, %v2918
    %v2920 = vand.u32 %v2919, 4294901760
    %2921 = vmatpush1.msra.mxu0 %v2920
    %v2922 = vand.u32 %v166, 4294901760
    %v2923 = vsub.f32 %v166, %v2922
    %v2924 = vand.u32 %v2923, 4294901760
    %v2925 = vsub.f32 %v2923, %v2924
    %v2926 = vand.u32 %v2925, 4294901760
    %2927 = vmatprep.subr.mxu0 %v2926
    %v2928 = vand.u32 %v165, 4294901760
    %v2929 = vsub.f32 %v165, %v2928
    %v2930 = vand.u32 %v2929, 4294901760
    %v2931 = vsub.f32 %v2929, %v2930
    %v2932 = vand.u32 %v2931, 4294901760
    %2933 = vmatpush1.msra.mxu0 %v2932
    %v2934 = vand.u32 %v158, 4294901760
    %v2935 = vsub.f32 %v158, %v2934
    %v2936 = vand.u32 %v2935, 4294901760
    %v2937 = vsub.f32 %v2935, %v2936
    %v2938 = vand.u32 %v2937, 4294901760
    %2939 = vmatprep.subr.mxu0 %v2938
    %v2940 = vand.u32 %v157, 4294901760
    %v2941 = vsub.f32 %v157, %v2940
    %v2942 = vand.u32 %v2941, 4294901760
    %v2943 = vsub.f32 %v2941, %v2942
    %v2944 = vand.u32 %v2943, 4294901760
    %2945 = vmatpush1.msra.mxu0 %v2944
    %v2946 = vand.u32 %v150, 4294901760
    %v2947 = vsub.f32 %v150, %v2946
    %v2948 = vand.u32 %v2947, 4294901760
    %v2949 = vsub.f32 %v2947, %v2948
    %v2950 = vand.u32 %v2949, 4294901760
    %2951 = vmatprep.subr.mxu0 %v2950
    %v2952 = vand.u32 %v149, 4294901760
    %v2953 = vsub.f32 %v149, %v2952
    %v2954 = vand.u32 %v2953, 4294901760
    %v2955 = vsub.f32 %v2953, %v2954
    %v2956 = vand.u32 %v2955, 4294901760
    %2957 = vmatpush1.msra.mxu0 %v2956
    %v2958 = vand.u32 %v142, 4294901760
    %v2959 = vsub.f32 %v142, %v2958
    %v2960 = vand.u32 %v2959, 4294901760
    %v2961 = vsub.f32 %v2959, %v2960
    %v2962 = vand.u32 %v2961, 4294901760
    %2963 = vmatprep.subr.mxu0 %v2962
    %v2964 = vand.u32 %v141, 4294901760
    %v2965 = vsub.f32 %v141, %v2964
    %v2966 = vand.u32 %v2965, 4294901760
    %v2967 = vsub.f32 %v2965, %v2966
    %v2968 = vand.u32 %v2967, 4294901760
    %2969 = vmatpush1.msra.mxu0 %v2968
    %v2970 = vand.u32 %v134, 4294901760
    %v2971 = vsub.f32 %v134, %v2970
    %v2972 = vand.u32 %v2971, 4294901760
    %v2973 = vsub.f32 %v2971, %v2972
    %v2974 = vand.u32 %v2973, 4294901760
    %2975 = vmatprep.subr.mxu0 %v2974
    %v2976 = vand.u32 %v133, 4294901760
    %v2977 = vsub.f32 %v133, %v2976
    %v2978 = vand.u32 %v2977, 4294901760
    %v2979 = vsub.f32 %v2977, %v2978
    %v2980 = vand.u32 %v2979, 4294901760
    %2981 = vmatpush1.msra.mxu0 %v2980
    %v2982 = vand.u32 %v126, 4294901760
    %v2983 = vsub.f32 %v126, %v2982
    %v2984 = vand.u32 %v2983, 4294901760
    %v2985 = vsub.f32 %v2983, %v2984
    %v2986 = vand.u32 %v2985, 4294901760
    %2987 = vmatprep.subr.mxu0 %v2986
    %v2988 = vand.u32 %v125, 4294901760
    %v2989 = vsub.f32 %v125, %v2988
    %v2990 = vand.u32 %v2989, 4294901760
    %v2991 = vsub.f32 %v2989, %v2990
    %v2992 = vand.u32 %v2991, 4294901760
    %2993 = vmatpush1.msra.mxu0 %v2992
    %v2994 = vand.u32 %v118, 4294901760
    %v2995 = vsub.f32 %v118, %v2994
    %v2996 = vand.u32 %v2995, 4294901760
    %v2997 = vsub.f32 %v2995, %v2996
    %v2998 = vand.u32 %v2997, 4294901760
    %2999 = vmatprep.subr.mxu0 %v2998
    %v3000 = vand.u32 %v117, 4294901760
    %v3001 = vsub.f32 %v117, %v3000
    %v3002 = vand.u32 %v3001, 4294901760
    %v3003 = vsub.f32 %v3001, %v3002
    %v3004 = vand.u32 %v3003, 4294901760
    %3005 = vmatpush1.msra.mxu0 %v3004
    %v3006 = vand.u32 %v110, 4294901760
    %v3007 = vsub.f32 %v110, %v3006
    %v3008 = vand.u32 %v3007, 4294901760
    %v3009 = vsub.f32 %v3007, %v3008
    %v3010 = vand.u32 %v3009, 4294901760
    %3011 = vmatprep.subr.mxu0 %v3010
    %v3012 = vand.u32 %v109, 4294901760
    %v3013 = vsub.f32 %v109, %v3012
    %v3014 = vand.u32 %v3013, 4294901760
    %v3015 = vsub.f32 %v3013, %v3014
    %v3016 = vand.u32 %v3015, 4294901760
    %3017 = vmatpush1.msra.mxu0 %v3016
    %v3018 = vand.u32 %v102, 4294901760
    %v3019 = vsub.f32 %v102, %v3018
    %v3020 = vand.u32 %v3019, 4294901760
    %v3021 = vsub.f32 %v3019, %v3020
    %v3022 = vand.u32 %v3021, 4294901760
    %3023 = vmatprep.subr.mxu0 %v3022
    %v3024 = vand.u32 %v101, 4294901760
    %v3025 = vsub.f32 %v101, %v3024
    %v3026 = vand.u32 %v3025, 4294901760
    %v3027 = vsub.f32 %v3025, %v3026
    %v3028 = vand.u32 %v3027, 4294901760
    %3029 = vmatpush1.msra.mxu0 %v3028
    %v3030 = vand.u32 %v94, 4294901760
    %v3031 = vsub.f32 %v94, %v3030
    %v3032 = vand.u32 %v3031, 4294901760
    %v3033 = vsub.f32 %v3031, %v3032
    %v3034 = vand.u32 %v3033, 4294901760
    %3035 = vmatprep.subr.mxu0 %v3034
    %v3036 = vand.u32 %v93, 4294901760
    %v3037 = vsub.f32 %v93, %v3036
    %v3038 = vand.u32 %v3037, 4294901760
    %v3039 = vsub.f32 %v3037, %v3038
    %v3040 = vand.u32 %v3039, 4294901760
    %3041 = vmatpush1.msra.mxu0 %v3040
    %v3042 = vand.u32 %v86, 4294901760
    %v3043 = vsub.f32 %v86, %v3042
    %v3044 = vand.u32 %v3043, 4294901760
    %v3045 = vsub.f32 %v3043, %v3044
    %v3046 = vand.u32 %v3045, 4294901760
    %3047 = vmatprep.subr.mxu0 %v3046
    %v3048 = vand.u32 %v85, 4294901760
    %v3049 = vsub.f32 %v85, %v3048
    %v3050 = vand.u32 %v3049, 4294901760
    %v3051 = vsub.f32 %v3049, %v3050
    %v3052 = vand.u32 %v3051, 4294901760
    %3053 = vmatpush1.msra.mxu0 %v3052
    %v3054 = vand.u32 %v78, 4294901760
    %v3055 = vsub.f32 %v78, %v3054
    %v3056 = vand.u32 %v3055, 4294901760
    %v3057 = vsub.f32 %v3055, %v3056
    %v3058 = vand.u32 %v3057, 4294901760
    %3059 = vmatprep.subr.mxu0 %v3058
    %v3060 = vand.u32 %v77, 4294901760
    %v3061 = vsub.f32 %v77, %v3060
    %v3062 = vand.u32 %v3061, 4294901760
    %v3063 = vsub.f32 %v3061, %v3062
    %v3064 = vand.u32 %v3063, 4294901760
    %3065 = vmatpush1.msra.mxu0 %v3064
    %v3066 = vand.u32 %v70, 4294901760
    %v3067 = vsub.f32 %v70, %v3066
    %v3068 = vand.u32 %v3067, 4294901760
    %v3069 = vsub.f32 %v3067, %v3068
    %v3070 = vand.u32 %v3069, 4294901760
    %3071 = vmatprep.subr.mxu0 %v3070
    %v3072 = vand.u32 %v69, 4294901760
    %v3073 = vsub.f32 %v69, %v3072
    %v3074 = vand.u32 %v3073, 4294901760
    %v3075 = vsub.f32 %v3073, %v3074
    %v3076 = vand.u32 %v3075, 4294901760
    %3077 = vmatpush1.msra.mxu0 %v3076
    %v3078 = vand.u32 %v62, 4294901760
    %v3079 = vsub.f32 %v62, %v3078
    %v3080 = vand.u32 %v3079, 4294901760
    %v3081 = vsub.f32 %v3079, %v3080
    %v3082 = vand.u32 %v3081, 4294901760
    %3083 = vmatprep.subr.mxu0 %v3082
    %v3084 = vand.u32 %v61, 4294901760
    %v3085 = vsub.f32 %v61, %v3084
    %v3086 = vand.u32 %v3085, 4294901760
    %v3087 = vsub.f32 %v3085, %v3086
    %v3088 = vand.u32 %v3087, 4294901760
    %3089 = vmatpush1.msra.mxu0 %v3088
    %3090 = vmatprep.subr.mxu0 0.0
    %3091 = vmatpush2.msra.mxu0 0.0
    %3092 = vmatprep.subr.mxu0 0.0
    %3093 = vmatpush2.msra.mxu0 0.0
    %3094 = vmatprep.subr.mxu0 0.0
    %3095 = vmatpush2.msra.mxu0 0.0
    %3096 = vmatprep.subr.mxu0 0.0
    %3097 = vmatpush2.msra.mxu0 0.0
    %3098 = vmatprep.subr.mxu0 0.0
    %3099 = vmatpush2.msra.mxu0 0.0
    %3100 = vmatprep.subr.mxu0 0.0
    %3101 = vmatpush2.msra.mxu0 0.0
    %3102 = vmatprep.subr.mxu0 0.0
    %3103 = vmatpush2.msra.mxu0 0.0
    %3104 = vmatprep.subr.mxu0 0.0
    %3105 = vmatpush2.msra.mxu0 0.0
    %3106 = vmatprep.subr.mxu0 0.0
    %3107 = vmatpush2.msra.mxu0 0.0
    %3108 = vmatprep.subr.mxu0 0.0
    %3109 = vmatpush2.msra.mxu0 0.0
    %3110 = vmatprep.subr.mxu0 0.0
    %3111 = vmatpush2.msra.mxu0 0.0
    %3112 = vmatprep.subr.mxu0 0.0
    %3113 = vmatpush2.msra.mxu0 0.0
    %3114 = vmatprep.subr.mxu0 0.0
    %3115 = vmatpush2.msra.mxu0 0.0
    %3116 = vmatprep.subr.mxu0 0.0
    %3117 = vmatpush2.msra.mxu0 0.0
    %3118 = vmatprep.subr.mxu0 0.0
    %3119 = vmatpush2.msra.mxu0 0.0
    %3120 = vmatprep.subr.mxu0 0.0
    %3121 = vmatpush2.msra.mxu0 0.0
    %3122 = vmatprep.mubr.f32.mxu0 0.0
    %v3123 = vand.u32 %v54, 4294901760
    %3124 = vmatmul.mubr.f32.gmra.mxu0 %v3123
    %v3125 = vpop.f32.mrf.mxu0
    %v3126 = vadd.f32 %v2894, %v3125
    %v3127 = vpop.f32.mrf.mxu0
    %v3128 = vadd.f32 %v2896, %v3127
    %3129 = vdwg.mxu0
    %v3130 = vand.u32 %v182, 4294901760
    %v3131 = vsub.f32 %v182, %v3130
    %3132 = vmatprep.subr.mxu0 %v3131
    %v3133 = vand.u32 %v181, 4294901760
    %v3134 = vsub.f32 %v181, %v3133
    %3135 = vmatpush1.msra.mxu0 %v3134
    %v3136 = vand.u32 %v174, 4294901760
    %v3137 = vsub.f32 %v174, %v3136
    %3138 = vmatprep.subr.mxu0 %v3137
    %v3139 = vand.u32 %v173, 4294901760
    %v3140 = vsub.f32 %v173, %v3139
    %3141 = vmatpush1.msra.mxu0 %v3140
    %v3142 = vand.u32 %v166, 4294901760
    %v3143 = vsub.f32 %v166, %v3142
    %3144 = vmatprep.subr.mxu0 %v3143
    %v3145 = vand.u32 %v165, 4294901760
    %v3146 = vsub.f32 %v165, %v3145
    %3147 = vmatpush1.msra.mxu0 %v3146
    %v3148 = vand.u32 %v158, 4294901760
    %v3149 = vsub.f32 %v158, %v3148
    %3150 = vmatprep.subr.mxu0 %v3149
    %v3151 = vand.u32 %v157, 4294901760
    %v3152 = vsub.f32 %v157, %v3151
    %3153 = vmatpush1.msra.mxu0 %v3152
    %v3154 = vand.u32 %v150, 4294901760
    %v3155 = vsub.f32 %v150, %v3154
    %3156 = vmatprep.subr.mxu0 %v3155
    %v3157 = vand.u32 %v149, 4294901760
    %v3158 = vsub.f32 %v149, %v3157
    %3159 = vmatpush1.msra.mxu0 %v3158
    %v3160 = vand.u32 %v142, 4294901760
    %v3161 = vsub.f32 %v142, %v3160
    %3162 = vmatprep.subr.mxu0 %v3161
    %v3163 = vand.u32 %v141, 4294901760
    %v3164 = vsub.f32 %v141, %v3163
    %3165 = vmatpush1.msra.mxu0 %v3164
    %v3166 = vand.u32 %v134, 4294901760
    %v3167 = vsub.f32 %v134, %v3166
    %3168 = vmatprep.subr.mxu0 %v3167
    %v3169 = vand.u32 %v133, 4294901760
    %v3170 = vsub.f32 %v133, %v3169
    %3171 = vmatpush1.msra.mxu0 %v3170
    %v3172 = vand.u32 %v126, 4294901760
    %v3173 = vsub.f32 %v126, %v3172
    %3174 = vmatprep.subr.mxu0 %v3173
    %v3175 = vand.u32 %v125, 4294901760
    %v3176 = vsub.f32 %v125, %v3175
    %3177 = vmatpush1.msra.mxu0 %v3176
    %v3178 = vand.u32 %v118, 4294901760
    %v3179 = vsub.f32 %v118, %v3178
    %3180 = vmatprep.subr.mxu0 %v3179
    %v3181 = vand.u32 %v117, 4294901760
    %v3182 = vsub.f32 %v117, %v3181
    %3183 = vmatpush1.msra.mxu0 %v3182
    %v3184 = vand.u32 %v110, 4294901760
    %v3185 = vsub.f32 %v110, %v3184
    %3186 = vmatprep.subr.mxu0 %v3185
    %v3187 = vand.u32 %v109, 4294901760
    %v3188 = vsub.f32 %v109, %v3187
    %3189 = vmatpush1.msra.mxu0 %v3188
    %v3190 = vand.u32 %v102, 4294901760
    %v3191 = vsub.f32 %v102, %v3190
    %3192 = vmatprep.subr.mxu0 %v3191
    %v3193 = vand.u32 %v101, 4294901760
    %v3194 = vsub.f32 %v101, %v3193
    %3195 = vmatpush1.msra.mxu0 %v3194
    %v3196 = vand.u32 %v94, 4294901760
    %v3197 = vsub.f32 %v94, %v3196
    %3198 = vmatprep.subr.mxu0 %v3197
    %v3199 = vand.u32 %v93, 4294901760
    %v3200 = vsub.f32 %v93, %v3199
    %3201 = vmatpush1.msra.mxu0 %v3200
    %v3202 = vand.u32 %v86, 4294901760
    %v3203 = vsub.f32 %v86, %v3202
    %3204 = vmatprep.subr.mxu0 %v3203
    %v3205 = vand.u32 %v85, 4294901760
    %v3206 = vsub.f32 %v85, %v3205
    %3207 = vmatpush1.msra.mxu0 %v3206
    %v3208 = vand.u32 %v78, 4294901760
    %v3209 = vsub.f32 %v78, %v3208
    %3210 = vmatprep.subr.mxu0 %v3209
    %v3211 = vand.u32 %v77, 4294901760
    %v3212 = vsub.f32 %v77, %v3211
    %3213 = vmatpush1.msra.mxu0 %v3212
    %v3214 = vand.u32 %v70, 4294901760
    %v3215 = vsub.f32 %v70, %v3214
    %3216 = vmatprep.subr.mxu0 %v3215
    %v3217 = vand.u32 %v69, 4294901760
    %v3218 = vsub.f32 %v69, %v3217
    %3219 = vmatpush1.msra.mxu0 %v3218
    %v3220 = vand.u32 %v62, 4294901760
    %v3221 = vsub.f32 %v62, %v3220
    %3222 = vmatprep.subr.mxu0 %v3221
    %v3223 = vand.u32 %v61, 4294901760
    %v3224 = vsub.f32 %v61, %v3223
    %3225 = vmatpush1.msra.mxu0 %v3224
    %3226 = vmatprep.subr.mxu0 0.0
    %3227 = vmatpush2.msra.mxu0 0.0
    %3228 = vmatprep.subr.mxu0 0.0
    %3229 = vmatpush2.msra.mxu0 0.0
    %3230 = vmatprep.subr.mxu0 0.0
    %3231 = vmatpush2.msra.mxu0 0.0
    %3232 = vmatprep.subr.mxu0 0.0
    %3233 = vmatpush2.msra.mxu0 0.0
    %3234 = vmatprep.subr.mxu0 0.0
    %3235 = vmatpush2.msra.mxu0 0.0
    %3236 = vmatprep.subr.mxu0 0.0
    %3237 = vmatpush2.msra.mxu0 0.0
    %3238 = vmatprep.subr.mxu0 0.0
    %3239 = vmatpush2.msra.mxu0 0.0
    %3240 = vmatprep.subr.mxu0 0.0
    %3241 = vmatpush2.msra.mxu0 0.0
    %3242 = vmatprep.subr.mxu0 0.0
    %3243 = vmatpush2.msra.mxu0 0.0
    %3244 = vmatprep.subr.mxu0 0.0
    %3245 = vmatpush2.msra.mxu0 0.0
    %3246 = vmatprep.subr.mxu0 0.0
    %3247 = vmatpush2.msra.mxu0 0.0
    %3248 = vmatprep.subr.mxu0 0.0
    %3249 = vmatpush2.msra.mxu0 0.0
    %3250 = vmatprep.subr.mxu0 0.0
    %3251 = vmatpush2.msra.mxu0 0.0
    %3252 = vmatprep.subr.mxu0 0.0
    %3253 = vmatpush2.msra.mxu0 0.0
    %3254 = vmatprep.subr.mxu0 0.0
    %3255 = vmatpush2.msra.mxu0 0.0
    %3256 = vmatprep.subr.mxu0 0.0
    %3257 = vmatpush2.msra.mxu0 0.0
    %3258 = vmatprep.mubr.f32.mxu0 0.0
    %v3259 = vand.u32 %v54, 4294901760
    %v3260 = vsub.f32 %v54, %v3259
    %3261 = vmatmul.mubr.f32.gmra.mxu0 %v3260
    %v3262 = vpop.f32.mrf.mxu0
    %v3263 = vadd.f32 %v3126, %v3262
    %v3264 = vpop.f32.mrf.mxu0
    %v3265 = vadd.f32 %v3128, %v3264
    %3266 = vdwg.mxu0
    %v3267 = vand.u32 %v182, 4294901760
    %3268 = vmatprep.subr.mxu0 %v3267
    %v3269 = vand.u32 %v181, 4294901760
    %3270 = vmatpush1.msra.mxu0 %v3269
    %v3271 = vand.u32 %v174, 4294901760
    %3272 = vmatprep.subr.mxu0 %v3271
    %v3273 = vand.u32 %v173, 4294901760
    %3274 = vmatpush1.msra.mxu0 %v3273
    %v3275 = vand.u32 %v166, 4294901760
    %3276 = vmatprep.subr.mxu0 %v3275
    %v3277 = vand.u32 %v165, 4294901760
    %3278 = vmatpush1.msra.mxu0 %v3277
    %v3279 = vand.u32 %v158, 4294901760
    %3280 = vmatprep.subr.mxu0 %v3279
    %v3281 = vand.u32 %v157, 4294901760
    %3282 = vmatpush1.msra.mxu0 %v3281
    %v3283 = vand.u32 %v150, 4294901760
    %3284 = vmatprep.subr.mxu0 %v3283
    %v3285 = vand.u32 %v149, 4294901760
    %3286 = vmatpush1.msra.mxu0 %v3285
    %v3287 = vand.u32 %v142, 4294901760
    %3288 = vmatprep.subr.mxu0 %v3287
    %v3289 = vand.u32 %v141, 4294901760
    %3290 = vmatpush1.msra.mxu0 %v3289
    %v3291 = vand.u32 %v134, 4294901760
    %3292 = vmatprep.subr.mxu0 %v3291
    %v3293 = vand.u32 %v133, 4294901760
    %3294 = vmatpush1.msra.mxu0 %v3293
    %v3295 = vand.u32 %v126, 4294901760
    %3296 = vmatprep.subr.mxu0 %v3295
    %v3297 = vand.u32 %v125, 4294901760
    %3298 = vmatpush1.msra.mxu0 %v3297
    %v3299 = vand.u32 %v118, 4294901760
    %3300 = vmatprep.subr.mxu0 %v3299
    %v3301 = vand.u32 %v117, 4294901760
    %3302 = vmatpush1.msra.mxu0 %v3301
    %v3303 = vand.u32 %v110, 4294901760
    %3304 = vmatprep.subr.mxu0 %v3303
    %v3305 = vand.u32 %v109, 4294901760
    %3306 = vmatpush1.msra.mxu0 %v3305
    %v3307 = vand.u32 %v102, 4294901760
    %3308 = vmatprep.subr.mxu0 %v3307
    %v3309 = vand.u32 %v101, 4294901760
    %3310 = vmatpush1.msra.mxu0 %v3309
    %v3311 = vand.u32 %v94, 4294901760
    %3312 = vmatprep.subr.mxu0 %v3311
    %v3313 = vand.u32 %v93, 4294901760
    %3314 = vmatpush1.msra.mxu0 %v3313
    %v3315 = vand.u32 %v86, 4294901760
    %3316 = vmatprep.subr.mxu0 %v3315
    %v3317 = vand.u32 %v85, 4294901760
    %3318 = vmatpush1.msra.mxu0 %v3317
    %v3319 = vand.u32 %v78, 4294901760
    %3320 = vmatprep.subr.mxu0 %v3319
    %v3321 = vand.u32 %v77, 4294901760
    %3322 = vmatpush1.msra.mxu0 %v3321
    %v3323 = vand.u32 %v70, 4294901760
    %3324 = vmatprep.subr.mxu0 %v3323
    %v3325 = vand.u32 %v69, 4294901760
    %3326 = vmatpush1.msra.mxu0 %v3325
    %v3327 = vand.u32 %v62, 4294901760
    %3328 = vmatprep.subr.mxu0 %v3327
    %v3329 = vand.u32 %v61, 4294901760
    %3330 = vmatpush1.msra.mxu0 %v3329
    %3331 = vmatprep.subr.mxu0 0.0
    %3332 = vmatpush2.msra.mxu0 0.0
    %3333 = vmatprep.subr.mxu0 0.0
    %3334 = vmatpush2.msra.mxu0 0.0
    %3335 = vmatprep.subr.mxu0 0.0
    %3336 = vmatpush2.msra.mxu0 0.0
    %3337 = vmatprep.subr.mxu0 0.0
    %3338 = vmatpush2.msra.mxu0 0.0
    %3339 = vmatprep.subr.mxu0 0.0
    %3340 = vmatpush2.msra.mxu0 0.0
    %3341 = vmatprep.subr.mxu0 0.0
    %3342 = vmatpush2.msra.mxu0 0.0
    %3343 = vmatprep.subr.mxu0 0.0
    %3344 = vmatpush2.msra.mxu0 0.0
    %3345 = vmatprep.subr.mxu0 0.0
    %3346 = vmatpush2.msra.mxu0 0.0
    %3347 = vmatprep.subr.mxu0 0.0
    %3348 = vmatpush2.msra.mxu0 0.0
    %3349 = vmatprep.subr.mxu0 0.0
    %3350 = vmatpush2.msra.mxu0 0.0
    %3351 = vmatprep.subr.mxu0 0.0
    %3352 = vmatpush2.msra.mxu0 0.0
    %3353 = vmatprep.subr.mxu0 0.0
    %3354 = vmatpush2.msra.mxu0 0.0
    %3355 = vmatprep.subr.mxu0 0.0
    %3356 = vmatpush2.msra.mxu0 0.0
    %3357 = vmatprep.subr.mxu0 0.0
    %3358 = vmatpush2.msra.mxu0 0.0
    %3359 = vmatprep.subr.mxu0 0.0
    %3360 = vmatpush2.msra.mxu0 0.0
    %3361 = vmatprep.subr.mxu0 0.0
    %3362 = vmatpush2.msra.mxu0 0.0
    %3363 = vmatprep.mubr.f32.mxu0 0.0
    %v3364 = vand.u32 %v54, 4294901760
    %v3365 = vsub.f32 %v54, %v3364
    %v3366 = vand.u32 %v3365, 4294901760
    %3367 = vmatmul.mubr.f32.gmra.mxu0 %v3366
    %v3368 = vpop.f32.mrf.mxu0
    %v3369 = vadd.f32 %v3263, %v3368
    %v3370 = vpop.f32.mrf.mxu0
    %v3371 = vadd.f32 %v3265, %v3370
    %3372 = vdwg.mxu0
    %v3373 = vand.u32 %v182, 4294901760
    %v3374 = vsub.f32 %v182, %v3373
    %v3375 = vand.u32 %v3374, 4294901760
    %3376 = vmatprep.subr.mxu0 %v3375
    %v3377 = vand.u32 %v181, 4294901760
    %v3378 = vsub.f32 %v181, %v3377
    %v3379 = vand.u32 %v3378, 4294901760
    %3380 = vmatpush1.msra.mxu0 %v3379
    %v3381 = vand.u32 %v174, 4294901760
    %v3382 = vsub.f32 %v174, %v3381
    %v3383 = vand.u32 %v3382, 4294901760
    %3384 = vmatprep.subr.mxu0 %v3383
    %v3385 = vand.u32 %v173, 4294901760
    %v3386 = vsub.f32 %v173, %v3385
    %v3387 = vand.u32 %v3386, 4294901760
    %3388 = vmatpush1.msra.mxu0 %v3387
    %v3389 = vand.u32 %v166, 4294901760
    %v3390 = vsub.f32 %v166, %v3389
    %v3391 = vand.u32 %v3390, 4294901760
    %3392 = vmatprep.subr.mxu0 %v3391
    %v3393 = vand.u32 %v165, 4294901760
    %v3394 = vsub.f32 %v165, %v3393
    %v3395 = vand.u32 %v3394, 4294901760
    %3396 = vmatpush1.msra.mxu0 %v3395
    %v3397 = vand.u32 %v158, 4294901760
    %v3398 = vsub.f32 %v158, %v3397
    %v3399 = vand.u32 %v3398, 4294901760
    %3400 = vmatprep.subr.mxu0 %v3399
    %v3401 = vand.u32 %v157, 4294901760
    %v3402 = vsub.f32 %v157, %v3401
    %v3403 = vand.u32 %v3402, 4294901760
    %3404 = vmatpush1.msra.mxu0 %v3403
    %v3405 = vand.u32 %v150, 4294901760
    %v3406 = vsub.f32 %v150, %v3405
    %v3407 = vand.u32 %v3406, 4294901760
    %3408 = vmatprep.subr.mxu0 %v3407
    %v3409 = vand.u32 %v149, 4294901760
    %v3410 = vsub.f32 %v149, %v3409
    %v3411 = vand.u32 %v3410, 4294901760
    %3412 = vmatpush1.msra.mxu0 %v3411
    %v3413 = vand.u32 %v142, 4294901760
    %v3414 = vsub.f32 %v142, %v3413
    %v3415 = vand.u32 %v3414, 4294901760
    %3416 = vmatprep.subr.mxu0 %v3415
    %v3417 = vand.u32 %v141, 4294901760
    %v3418 = vsub.f32 %v141, %v3417
    %v3419 = vand.u32 %v3418, 4294901760
    %3420 = vmatpush1.msra.mxu0 %v3419
    %v3421 = vand.u32 %v134, 4294901760
    %v3422 = vsub.f32 %v134, %v3421
    %v3423 = vand.u32 %v3422, 4294901760
    %3424 = vmatprep.subr.mxu0 %v3423
    %v3425 = vand.u32 %v133, 4294901760
    %v3426 = vsub.f32 %v133, %v3425
    %v3427 = vand.u32 %v3426, 4294901760
    %3428 = vmatpush1.msra.mxu0 %v3427
    %v3429 = vand.u32 %v126, 4294901760
    %v3430 = vsub.f32 %v126, %v3429
    %v3431 = vand.u32 %v3430, 4294901760
    %3432 = vmatprep.subr.mxu0 %v3431
    %v3433 = vand.u32 %v125, 4294901760
    %v3434 = vsub.f32 %v125, %v3433
    %v3435 = vand.u32 %v3434, 4294901760
    %3436 = vmatpush1.msra.mxu0 %v3435
    %v3437 = vand.u32 %v118, 4294901760
    %v3438 = vsub.f32 %v118, %v3437
    %v3439 = vand.u32 %v3438, 4294901760
    %3440 = vmatprep.subr.mxu0 %v3439
    %v3441 = vand.u32 %v117, 4294901760
    %v3442 = vsub.f32 %v117, %v3441
    %v3443 = vand.u32 %v3442, 4294901760
    %3444 = vmatpush1.msra.mxu0 %v3443
    %v3445 = vand.u32 %v110, 4294901760
    %v3446 = vsub.f32 %v110, %v3445
    %v3447 = vand.u32 %v3446, 4294901760
    %3448 = vmatprep.subr.mxu0 %v3447
    %v3449 = vand.u32 %v109, 4294901760
    %v3450 = vsub.f32 %v109, %v3449
    %v3451 = vand.u32 %v3450, 4294901760
    %3452 = vmatpush1.msra.mxu0 %v3451
    %v3453 = vand.u32 %v102, 4294901760
    %v3454 = vsub.f32 %v102, %v3453
    %v3455 = vand.u32 %v3454, 4294901760
    %3456 = vmatprep.subr.mxu0 %v3455
    %v3457 = vand.u32 %v101, 4294901760
    %v3458 = vsub.f32 %v101, %v3457
    %v3459 = vand.u32 %v3458, 4294901760
    %3460 = vmatpush1.msra.mxu0 %v3459
    %v3461 = vand.u32 %v94, 4294901760
    %v3462 = vsub.f32 %v94, %v3461
    %v3463 = vand.u32 %v3462, 4294901760
    %3464 = vmatprep.subr.mxu0 %v3463
    %v3465 = vand.u32 %v93, 4294901760
    %v3466 = vsub.f32 %v93, %v3465
    %v3467 = vand.u32 %v3466, 4294901760
    %3468 = vmatpush1.msra.mxu0 %v3467
    %v3469 = vand.u32 %v86, 4294901760
    %v3470 = vsub.f32 %v86, %v3469
    %v3471 = vand.u32 %v3470, 4294901760
    %3472 = vmatprep.subr.mxu0 %v3471
    %v3473 = vand.u32 %v85, 4294901760
    %v3474 = vsub.f32 %v85, %v3473
    %v3475 = vand.u32 %v3474, 4294901760
    %3476 = vmatpush1.msra.mxu0 %v3475
    %v3477 = vand.u32 %v78, 4294901760
    %v3478 = vsub.f32 %v78, %v3477
    %v3479 = vand.u32 %v3478, 4294901760
    %3480 = vmatprep.subr.mxu0 %v3479
    %v3481 = vand.u32 %v77, 4294901760
    %v3482 = vsub.f32 %v77, %v3481
    %v3483 = vand.u32 %v3482, 4294901760
    %3484 = vmatpush1.msra.mxu0 %v3483
    %v3485 = vand.u32 %v70, 4294901760
    %v3486 = vsub.f32 %v70, %v3485
    %v3487 = vand.u32 %v3486, 4294901760
    %3488 = vmatprep.subr.mxu0 %v3487
    %v3489 = vand.u32 %v69, 4294901760
    %v3490 = vsub.f32 %v69, %v3489
    %v3491 = vand.u32 %v3490, 4294901760
    %3492 = vmatpush1.msra.mxu0 %v3491
    %v3493 = vand.u32 %v62, 4294901760
    %v3494 = vsub.f32 %v62, %v3493
    %v3495 = vand.u32 %v3494, 4294901760
    %3496 = vmatprep.subr.mxu0 %v3495
    %v3497 = vand.u32 %v61, 4294901760
    %v3498 = vsub.f32 %v61, %v3497
    %v3499 = vand.u32 %v3498, 4294901760
    %3500 = vmatpush1.msra.mxu0 %v3499
    %3501 = vmatprep.subr.mxu0 0.0
    %3502 = vmatpush2.msra.mxu0 0.0
    %3503 = vmatprep.subr.mxu0 0.0
    %3504 = vmatpush2.msra.mxu0 0.0
    %3505 = vmatprep.subr.mxu0 0.0
    %3506 = vmatpush2.msra.mxu0 0.0
    %3507 = vmatprep.subr.mxu0 0.0
    %3508 = vmatpush2.msra.mxu0 0.0
    %3509 = vmatprep.subr.mxu0 0.0
    %3510 = vmatpush2.msra.mxu0 0.0
    %3511 = vmatprep.subr.mxu0 0.0
    %3512 = vmatpush2.msra.mxu0 0.0
    %3513 = vmatprep.subr.mxu0 0.0
    %3514 = vmatpush2.msra.mxu0 0.0
    %3515 = vmatprep.subr.mxu0 0.0
    %3516 = vmatpush2.msra.mxu0 0.0
    %3517 = vmatprep.subr.mxu0 0.0
    %3518 = vmatpush2.msra.mxu0 0.0
    %3519 = vmatprep.subr.mxu0 0.0
    %3520 = vmatpush2.msra.mxu0 0.0
    %3521 = vmatprep.subr.mxu0 0.0
    %3522 = vmatpush2.msra.mxu0 0.0
    %3523 = vmatprep.subr.mxu0 0.0
    %3524 = vmatpush2.msra.mxu0 0.0
    %3525 = vmatprep.subr.mxu0 0.0
    %3526 = vmatpush2.msra.mxu0 0.0
    %3527 = vmatprep.subr.mxu0 0.0
    %3528 = vmatpush2.msra.mxu0 0.0
    %3529 = vmatprep.subr.mxu0 0.0
    %3530 = vmatpush2.msra.mxu0 0.0
    %3531 = vmatprep.subr.mxu0 0.0
    %3532 = vmatpush2.msra.mxu0 0.0
    %3533 = vmatprep.mubr.f32.mxu0 0.0
    %v3534 = vand.u32 %v54, 4294901760
    %3535 = vmatmul.mubr.f32.gmra.mxu0 %v3534
    %v3536 = vpop.f32.mrf.mxu0
    %v3537 = vadd.f32 %v3369, %v3536
    %v3538 = vpop.f32.mrf.mxu0
    %v3539 = vadd.f32 %v3371, %v3538
    %3540 = vdwg.mxu0
    %v3541 = vand.u32 %v182, 4294901760
    %3542 = vmatprep.subr.mxu0 %v3541
    %v3543 = vand.u32 %v181, 4294901760
    %3544 = vmatpush1.msra.mxu0 %v3543
    %v3545 = vand.u32 %v174, 4294901760
    %3546 = vmatprep.subr.mxu0 %v3545
    %v3547 = vand.u32 %v173, 4294901760
    %3548 = vmatpush1.msra.mxu0 %v3547
    %v3549 = vand.u32 %v166, 4294901760
    %3550 = vmatprep.subr.mxu0 %v3549
    %v3551 = vand.u32 %v165, 4294901760
    %3552 = vmatpush1.msra.mxu0 %v3551
    %v3553 = vand.u32 %v158, 4294901760
    %3554 = vmatprep.subr.mxu0 %v3553
    %v3555 = vand.u32 %v157, 4294901760
    %3556 = vmatpush1.msra.mxu0 %v3555
    %v3557 = vand.u32 %v150, 4294901760
    %3558 = vmatprep.subr.mxu0 %v3557
    %v3559 = vand.u32 %v149, 4294901760
    %3560 = vmatpush1.msra.mxu0 %v3559
    %v3561 = vand.u32 %v142, 4294901760
    %3562 = vmatprep.subr.mxu0 %v3561
    %v3563 = vand.u32 %v141, 4294901760
    %3564 = vmatpush1.msra.mxu0 %v3563
    %v3565 = vand.u32 %v134, 4294901760
    %3566 = vmatprep.subr.mxu0 %v3565
    %v3567 = vand.u32 %v133, 4294901760
    %3568 = vmatpush1.msra.mxu0 %v3567
    %v3569 = vand.u32 %v126, 4294901760
    %3570 = vmatprep.subr.mxu0 %v3569
    %v3571 = vand.u32 %v125, 4294901760
    %3572 = vmatpush1.msra.mxu0 %v3571
    %v3573 = vand.u32 %v118, 4294901760
    %3574 = vmatprep.subr.mxu0 %v3573
    %v3575 = vand.u32 %v117, 4294901760
    %3576 = vmatpush1.msra.mxu0 %v3575
    %v3577 = vand.u32 %v110, 4294901760
    %3578 = vmatprep.subr.mxu0 %v3577
    %v3579 = vand.u32 %v109, 4294901760
    %3580 = vmatpush1.msra.mxu0 %v3579
    %v3581 = vand.u32 %v102, 4294901760
    %3582 = vmatprep.subr.mxu0 %v3581
    %v3583 = vand.u32 %v101, 4294901760
    %3584 = vmatpush1.msra.mxu0 %v3583
    %v3585 = vand.u32 %v94, 4294901760
    %3586 = vmatprep.subr.mxu0 %v3585
    %v3587 = vand.u32 %v93, 4294901760
    %3588 = vmatpush1.msra.mxu0 %v3587
    %v3589 = vand.u32 %v86, 4294901760
    %3590 = vmatprep.subr.mxu0 %v3589
    %v3591 = vand.u32 %v85, 4294901760
    %3592 = vmatpush1.msra.mxu0 %v3591
    %v3593 = vand.u32 %v78, 4294901760
    %3594 = vmatprep.subr.mxu0 %v3593
    %v3595 = vand.u32 %v77, 4294901760
    %3596 = vmatpush1.msra.mxu0 %v3595
    %v3597 = vand.u32 %v70, 4294901760
    %3598 = vmatprep.subr.mxu0 %v3597
    %v3599 = vand.u32 %v69, 4294901760
    %3600 = vmatpush1.msra.mxu0 %v3599
    %v3601 = vand.u32 %v62, 4294901760
    %3602 = vmatprep.subr.mxu0 %v3601
    %v3603 = vand.u32 %v61, 4294901760
    %3604 = vmatpush1.msra.mxu0 %v3603
    %3605 = vmatprep.subr.mxu0 0.0
    %3606 = vmatpush2.msra.mxu0 0.0
    %3607 = vmatprep.subr.mxu0 0.0
    %3608 = vmatpush2.msra.mxu0 0.0
    %3609 = vmatprep.subr.mxu0 0.0
    %3610 = vmatpush2.msra.mxu0 0.0
    %3611 = vmatprep.subr.mxu0 0.0
    %3612 = vmatpush2.msra.mxu0 0.0
    %3613 = vmatprep.subr.mxu0 0.0
    %3614 = vmatpush2.msra.mxu0 0.0
    %3615 = vmatprep.subr.mxu0 0.0
    %3616 = vmatpush2.msra.mxu0 0.0
    %3617 = vmatprep.subr.mxu0 0.0
    %3618 = vmatpush2.msra.mxu0 0.0
    %3619 = vmatprep.subr.mxu0 0.0
    %3620 = vmatpush2.msra.mxu0 0.0
    %3621 = vmatprep.subr.mxu0 0.0
    %3622 = vmatpush2.msra.mxu0 0.0
    %3623 = vmatprep.subr.mxu0 0.0
    %3624 = vmatpush2.msra.mxu0 0.0
    %3625 = vmatprep.subr.mxu0 0.0
    %3626 = vmatpush2.msra.mxu0 0.0
    %3627 = vmatprep.subr.mxu0 0.0
    %3628 = vmatpush2.msra.mxu0 0.0
    %3629 = vmatprep.subr.mxu0 0.0
    %3630 = vmatpush2.msra.mxu0 0.0
    %3631 = vmatprep.subr.mxu0 0.0
    %3632 = vmatpush2.msra.mxu0 0.0
    %3633 = vmatprep.subr.mxu0 0.0
    %3634 = vmatpush2.msra.mxu0 0.0
    %3635 = vmatprep.subr.mxu0 0.0
    %3636 = vmatpush2.msra.mxu0 0.0
    %3637 = vmatprep.mubr.f32.mxu0 0.0
    %v3638 = vand.u32 %v54, 4294901760
    %3639 = vmatmul.mubr.f32.gmra.mxu0 %v3638
    %v3640 = vpop.f32.mrf.mxu0
    %v3641 = vadd.f32 %v3537, %v3640
    %v3642 = vpop.f32.mrf.mxu0
    %v3643 = vadd.f32 %v3539, %v3642
    %3644 = vdwg.mxu0
    %v3645 = vand.u32 2147483647, %v1076
    %vm3646 = vcmp.le.f32.partialorder %v3645, 0.7853982
    %vm3647 = vcmp.lt.s32.totalorder %v1076, 0
    %v3648 = vand.u32 %v1076, 2139095040
    %v3649 = vshrl.u32 %v3648, 23
    %v3650 = vsub.s32 %v3649, 127
    %v3651 = vand.u32 2147483647, %v1076
    %v3652 = vand.u32 %v3651, 8388607
    %v3653 = vor.u32 %v3652, 8388608
    %v3654 = vsub.s32 0, %v3653
    %v3655 = vadd.s32 %v3650, 1
    %vm3656 = vcmp.gt.s32.totalorder %v3655, 0
    %v3657 = vsel %vm3656, %v3655, 0
    %v3658 = vshrl.u32 %v3657, 5
    %v3659 = vand.u32 %v3657, 31
    %v3660 = vsub.s32 32, %v3659
    %v3661 = vshrl.u32 683565275, %v3660
    %v3662 = vshll.u32 683565275, %v3659
    %v3663 = vshrl.u32 2475754826, %v3660
    %v3664 = vor.u32 %v3662, %v3663
    %v3665 = vshll.u32 2475754826, %v3659
    %v3666 = vshrl.u32 2131351028, %v3660
    %v3667 = vor.u32 %v3665, %v3666
    %v3668 = vshll.u32 2131351028, %v3659
    %v3669 = vshrl.u32 2102212464, %v3660
    %v3670 = vor.u32 %v3668, %v3669
    %v3671 = vshll.u32 2102212464, %v3659
    %v3672 = vshrl.u32 920167782, %v3660
    %v3673 = vor.u32 %v3671, %v3672
    %v3674 = vshll.u32 920167782, %v3659
    %v3675 = vshrl.u32 1326507024, %v3660
    %v3676 = vor.u32 %v3674, %v3675
    %vm3677 = vcmp.lt.s32.totalorder %v3658, 1
    %vm3678 = vcmp.lt.s32.totalorder %v3658, 2
    %vm3679 = vcmp.lt.s32.totalorder %v3658, 3
    %vm3680 = vcmp.lt.s32.totalorder %v3658, 4
    %v3681 = vsel %vm3677, %v3661, %v3664
    %v3682 = vsel %vm3680, %v3670, 2102212464
    %v3683 = vsel %vm3679, %v3667, %v3682
    %v3684 = vsel %vm3678, %v3681, %v3683
    %v3685 = vsel %vm3677, %v3664, %v3667
    %v3686 = vsel %vm3680, %v3673, 920167782
    %v3687 = vsel %vm3679, %v3670, %v3686
    %v3688 = vsel %vm3678, %v3685, %v3687
    %v3689 = vsel %vm3677, %v3667, %v3670
    %v3690 = vsel %vm3680, %v3676, 1326507024
    %v3691 = vsel %vm3679, %v3673, %v3690
    %v3692 = vsel %vm3678, %v3689, %v3691
    %v3693 = vshll.u32 %v3653, 8
    %v3694 = vmul.u32.u64.compose %v3693, %v3692
    %v3695 = vextract.low.u32 %v3694
    %v3696 = vextract.high.u32 %v3694
    %v3697 = vmul.u32.u64.compose %v3693, %v3688
    %v3698 = vextract.low.u32 %v3697
    %v3699 = vextract.high.u32 %v3697
    %v3700 = vmul.u32 %v3693, %v3684
    %v3701 = vadd.s32 %v3696, %v3698
    %vm3702 = vc.u32 %v3696, %v3698
    %v3703 = vadd.s32 %v3699, 1
    %v3704 = vsel %vm3702, %v3703, %v3699
    %v3705 = vadd.s32 %v3700, %v3704
    %v3706 = vadd.s32 %v3705, 536870912
    %v3707 = vshrl.u32 %v3706, 30
    %v3708 = vshll.u32 %v3707, 30
    %v3709 = vsub.s32 %v3705, %v3708
    %vm3710 = vcmp.lt.s32.totalorder %v3709, 0
    %v3711 = vsub.s32 0, %v3709
    %v3712 = vsel %vm3710, %v3711, %v3709
    %v3713 = vclz %v3712
    %v3714 = vsub.s32 %v3713, 2
    %vm3715 = vcmp.gt.s32.totalorder 0, %v3714
    %v3716 = vsel %vm3715, 0, %v3714
    %v3717 = vsub.s32 32, %v3716
    %v3718 = vshll.u32 %v3709, %v3716
    %v3719 = vshrl.u32 %v3701, %v3717
    %v3720 = vor.u32 %v3718, %v3719
    %v3721 = vsub.s32 4294967266, %v3716
    %v3722 = vadd.s32 %v3721, 127
    %v3723 = vshll.u32 %v3722, 23
    %v3724 = vor.u32 4788187, %v3723
    %v3725 = vand.u32 2147483647, %v3724
    %v3727 = vcvt.s32.f32 %v3720
    %v3728 = vmul.f32 %v3727, %v3725
    %v3729 = vxor.u32 %v3728, 2147483648
    %v3730 = vsel %vm3647, %v3729, %v3728
    %v3731 = vsub.s32 4, %v3707
    %v3732 = vsel %vm3647, %v3731, %v3707
    %v3733 = vsel %vm3646, %v1076, %v3730
    %v3734 = vsel %vm3646, 0, %v3732
    %v3735 = vcosq.f32.pop %v3733
    %v3736 = vsinq.f32.pop %v3733
    %vm3737 = vweird.f32 %v1076
    %v3738 = vadd.s32 %v3734, 3
    %v3739 = vand.u32 %v3738, 3
    %vm3740 = vcmp.lt.s32.totalorder %v3739, 2
    %vm3741 = vcmp.eq.s32.totalorder %v3739, 0
    %v3742 = vxor.u32 %v3736, 2147483648
    %v3743 = vsel %vm3741, %v3735, %v3742
    %vm3744 = vcmp.eq.s32.totalorder %v3739, 2
    %v3745 = vxor.u32 %v3735, 2147483648
    %v3746 = vsel %vm3744, %v3745, %v3736
    %v3747 = vsel %vm3740, %v3743, %v3746
    %v3748 = vsel %vm3737, nan, %v3747
    %v3749 = vand.u32 2147483647, %v1078
    %vm3750 = vcmp.le.f32.partialorder %v3749, 0.7853982
    %vm3751 = vcmp.lt.s32.totalorder %v1078, 0
    %v3752 = vand.u32 %v1078, 2139095040
    %v3753 = vshrl.u32 %v3752, 23
    %v3754 = vsub.s32 %v3753, 127
    %v3755 = vand.u32 2147483647, %v1078
    %v3756 = vand.u32 %v3755, 8388607
    %v3757 = vor.u32 %v3756, 8388608
    %v3758 = vsub.s32 0, %v3757
    %v3759 = vadd.s32 %v3754, 1
    %vm3760 = vcmp.gt.s32.totalorder %v3759, 0
    %v3761 = vsel %vm3760, %v3759, 0
    %v3762 = vshrl.u32 %v3761, 5
    %v3763 = vand.u32 %v3761, 31
    %v3764 = vsub.s32 32, %v3763
    %v3765 = vshrl.u32 683565275, %v3764
    %v3766 = vshll.u32 683565275, %v3763
    %v3767 = vshrl.u32 2475754826, %v3764
    %v3768 = vor.u32 %v3766, %v3767
    %v3769 = vshll.u32 2475754826, %v3763
    %v3770 = vshrl.u32 2131351028, %v3764
    %v3771 = vor.u32 %v3769, %v3770
    %v3772 = vshll.u32 2131351028, %v3763
    %v3773 = vshrl.u32 2102212464, %v3764
    %v3774 = vor.u32 %v3772, %v3773
    %v3775 = vshll.u32 2102212464, %v3763
    %v3776 = vshrl.u32 920167782, %v3764
    %v3777 = vor.u32 %v3775, %v3776
    %v3778 = vshll.u32 920167782, %v3763
    %v3779 = vshrl.u32 1326507024, %v3764
    %v3780 = vor.u32 %v3778, %v3779
    %vm3781 = vcmp.lt.s32.totalorder %v3762, 1
    %vm3782 = vcmp.lt.s32.totalorder %v3762, 2
    %vm3783 = vcmp.lt.s32.totalorder %v3762, 3
    %vm3784 = vcmp.lt.s32.totalorder %v3762, 4
    %v3785 = vsel %vm3781, %v3765, %v3768
    %v3786 = vsel %vm3784, %v3774, 2102212464
    %v3787 = vsel %vm3783, %v3771, %v3786
    %v3788 = vsel %vm3782, %v3785, %v3787
    %v3789 = vsel %vm3781, %v3768, %v3771
    %v3790 = vsel %vm3784, %v3777, 920167782
    %v3791 = vsel %vm3783, %v3774, %v3790
    %v3792 = vsel %vm3782, %v3789, %v3791
    %v3793 = vsel %vm3781, %v3771, %v3774
    %v3794 = vsel %vm3784, %v3780, 1326507024
    %v3795 = vsel %vm3783, %v3777, %v3794
    %v3796 = vsel %vm3782, %v3793, %v3795
    %v3797 = vshll.u32 %v3757, 8
    %v3798 = vmul.u32.u64.compose %v3797, %v3796
    %v3799 = vextract.low.u32 %v3798
    %v3800 = vextract.high.u32 %v3798
    %v3801 = vmul.u32.u64.compose %v3797, %v3792
    %v3802 = vextract.low.u32 %v3801
    %v3803 = vextract.high.u32 %v3801
    %v3804 = vmul.u32 %v3797, %v3788
    %v3805 = vadd.s32 %v3800, %v3802
    %vm3806 = vc.u32 %v3800, %v3802
    %v3807 = vadd.s32 %v3803, 1
    %v3808 = vsel %vm3806, %v3807, %v3803
    %v3809 = vadd.s32 %v3804, %v3808
    %v3810 = vadd.s32 %v3809, 536870912
    %v3811 = vshrl.u32 %v3810, 30
    %v3812 = vshll.u32 %v3811, 30
    %v3813 = vsub.s32 %v3809, %v3812
    %vm3814 = vcmp.lt.s32.totalorder %v3813, 0
    %v3815 = vsub.s32 0, %v3813
    %v3816 = vsel %vm3814, %v3815, %v3813
    %v3817 = vclz %v3816
    %v3818 = vsub.s32 %v3817, 2
    %vm3819 = vcmp.gt.s32.totalorder 0, %v3818
    %v3820 = vsel %vm3819, 0, %v3818
    %v3821 = vsub.s32 32, %v3820
    %v3822 = vshll.u32 %v3813, %v3820
    %v3823 = vshrl.u32 %v3805, %v3821
    %v3824 = vor.u32 %v3822, %v3823
    %v3825 = vsub.s32 4294967266, %v3820
    %v3826 = vadd.s32 %v3825, 127
    %v3827 = vshll.u32 %v3826, 23
    %v3828 = vor.u32 4788187, %v3827
    %v3829 = vand.u32 2147483647, %v3828
    %v3831 = vcvt.s32.f32 %v3824
    %v3832 = vmul.f32 %v3831, %v3829
    %v3833 = vxor.u32 %v3832, 2147483648
    %v3834 = vsel %vm3751, %v3833, %v3832
    %v3835 = vsub.s32 4, %v3811
    %v3836 = vsel %vm3751, %v3835, %v3811
    %v3837 = vsel %vm3750, %v1078, %v3834
    %v3838 = vsel %vm3750, 0, %v3836
    %v3839 = vcosq.f32.pop %v3837
    %v3840 = vsinq.f32.pop %v3837
    %vm3841 = vweird.f32 %v1078
    %v3842 = vadd.s32 %v3838, 3
    %v3843 = vand.u32 %v3842, 3
    %vm3844 = vcmp.lt.s32.totalorder %v3843, 2
    %vm3845 = vcmp.eq.s32.totalorder %v3843, 0
    %v3846 = vxor.u32 %v3840, 2147483648
    %v3847 = vsel %vm3845, %v3839, %v3846
    %vm3848 = vcmp.eq.s32.totalorder %v3843, 2
    %v3849 = vxor.u32 %v3839, 2147483648
    %v3850 = vsel %vm3848, %v3849, %v3840
    %v3851 = vsel %vm3844, %v3847, %v3850
    %v3852 = vsel %vm3841, nan, %v3851
    %v3853 = vand.u32 2147483647, %v1931
    %vm3854 = vcmp.le.f32.partialorder %v3853, 0.7853982
    %vm3855 = vcmp.lt.s32.totalorder %v1931, 0
    %v3856 = vand.u32 %v1931, 2139095040
    %v3857 = vshrl.u32 %v3856, 23
    %v3858 = vsub.s32 %v3857, 127
    %v3859 = vand.u32 2147483647, %v1931
    %v3860 = vand.u32 %v3859, 8388607
    %v3861 = vor.u32 %v3860, 8388608
    %v3862 = vsub.s32 0, %v3861
    %v3863 = vadd.s32 %v3858, 1
    %vm3864 = vcmp.gt.s32.totalorder %v3863, 0
    %v3865 = vsel %vm3864, %v3863, 0
    %v3866 = vshrl.u32 %v3865, 5
    %v3867 = vand.u32 %v3865, 31
    %v3868 = vsub.s32 32, %v3867
    %v3869 = vshrl.u32 683565275, %v3868
    %v3870 = vshll.u32 683565275, %v3867
    %v3871 = vshrl.u32 2475754826, %v3868
    %v3872 = vor.u32 %v3870, %v3871
    %v3873 = vshll.u32 2475754826, %v3867
    %v3874 = vshrl.u32 2131351028, %v3868
    %v3875 = vor.u32 %v3873, %v3874
    %v3876 = vshll.u32 2131351028, %v3867
    %v3877 = vshrl.u32 2102212464, %v3868
    %v3878 = vor.u32 %v3876, %v3877
    %v3879 = vshll.u32 2102212464, %v3867
    %v3880 = vshrl.u32 920167782, %v3868
    %v3881 = vor.u32 %v3879, %v3880
    %v3882 = vshll.u32 920167782, %v3867
    %v3883 = vshrl.u32 1326507024, %v3868
    %v3884 = vor.u32 %v3882, %v3883
    %vm3885 = vcmp.lt.s32.totalorder %v3866, 1
    %vm3886 = vcmp.lt.s32.totalorder %v3866, 2
    %vm3887 = vcmp.lt.s32.totalorder %v3866, 3
    %vm3888 = vcmp.lt.s32.totalorder %v3866, 4
    %v3889 = vsel %vm3885, %v3869, %v3872
    %v3890 = vsel %vm3888, %v3878, 2102212464
    %v3891 = vsel %vm3887, %v3875, %v3890
    %v3892 = vsel %vm3886, %v3889, %v3891
    %v3893 = vsel %vm3885, %v3872, %v3875
    %v3894 = vsel %vm3888, %v3881, 920167782
    %v3895 = vsel %vm3887, %v3878, %v3894
    %v3896 = vsel %vm3886, %v3893, %v3895
    %v3897 = vsel %vm3885, %v3875, %v3878
    %v3898 = vsel %vm3888, %v3884, 1326507024
    %v3899 = vsel %vm3887, %v3881, %v3898
    %v3900 = vsel %vm3886, %v3897, %v3899
    %v3901 = vshll.u32 %v3861, 8
    %v3902 = vmul.u32.u64.compose %v3901, %v3900
    %v3903 = vextract.low.u32 %v3902
    %v3904 = vextract.high.u32 %v3902
    %v3905 = vmul.u32.u64.compose %v3901, %v3896
    %v3906 = vextract.low.u32 %v3905
    %v3907 = vextract.high.u32 %v3905
    %v3908 = vmul.u32 %v3901, %v3892
    %v3909 = vadd.s32 %v3904, %v3906
    %vm3910 = vc.u32 %v3904, %v3906
    %v3911 = vadd.s32 %v3907, 1
    %v3912 = vsel %vm3910, %v3911, %v3907
    %v3913 = vadd.s32 %v3908, %v3912
    %v3914 = vadd.s32 %v3913, 536870912
    %v3915 = vshrl.u32 %v3914, 30
    %v3916 = vshll.u32 %v3915, 30
    %v3917 = vsub.s32 %v3913, %v3916
    %vm3918 = vcmp.lt.s32.totalorder %v3917, 0
    %v3919 = vsub.s32 0, %v3917
    %v3920 = vsel %vm3918, %v3919, %v3917
    %v3921 = vclz %v3920
    %v3922 = vsub.s32 %v3921, 2
    %vm3923 = vcmp.gt.s32.totalorder 0, %v3922
    %v3924 = vsel %vm3923, 0, %v3922
    %v3925 = vsub.s32 32, %v3924
    %v3926 = vshll.u32 %v3917, %v3924
    %v3927 = vshrl.u32 %v3909, %v3925
    %v3928 = vor.u32 %v3926, %v3927
    %v3929 = vsub.s32 4294967266, %v3924
    %v3930 = vadd.s32 %v3929, 127
    %v3931 = vshll.u32 %v3930, 23
    %v3932 = vor.u32 4788187, %v3931
    %v3933 = vand.u32 2147483647, %v3932
    %v3935 = vcvt.s32.f32 %v3928
    %v3936 = vmul.f32 %v3935, %v3933
    %v3937 = vxor.u32 %v3936, 2147483648
    %v3938 = vsel %vm3855, %v3937, %v3936
    %v3939 = vsub.s32 4, %v3915
    %v3940 = vsel %vm3855, %v3939, %v3915
    %v3941 = vsel %vm3854, %v1931, %v3938
    %v3942 = vsel %vm3854, 0, %v3940
    %v3943 = vcosq.f32.pop %v3941
    %v3944 = vsinq.f32.pop %v3941
    %vm3945 = vweird.f32 %v1931
    %v3946 = vadd.s32 %v3942, 3
    %v3947 = vand.u32 %v3946, 3
    %vm3948 = vcmp.lt.s32.totalorder %v3947, 2
    %vm3949 = vcmp.eq.s32.totalorder %v3947, 0
    %v3950 = vxor.u32 %v3944, 2147483648
    %v3951 = vsel %vm3949, %v3943, %v3950
    %vm3952 = vcmp.eq.s32.totalorder %v3947, 2
    %v3953 = vxor.u32 %v3943, 2147483648
    %v3954 = vsel %vm3952, %v3953, %v3944
    %v3955 = vsel %vm3948, %v3951, %v3954
    %v3956 = vsel %vm3945, nan, %v3955
    %v3957 = vand.u32 2147483647, %v1933
    %vm3958 = vcmp.le.f32.partialorder %v3957, 0.7853982
    %vm3959 = vcmp.lt.s32.totalorder %v1933, 0
    %v3960 = vand.u32 %v1933, 2139095040
    %v3961 = vshrl.u32 %v3960, 23
    %v3962 = vsub.s32 %v3961, 127
    %v3963 = vand.u32 2147483647, %v1933
    %v3964 = vand.u32 %v3963, 8388607
    %v3965 = vor.u32 %v3964, 8388608
    %v3966 = vsub.s32 0, %v3965
    %v3967 = vadd.s32 %v3962, 1
    %vm3968 = vcmp.gt.s32.totalorder %v3967, 0
    %v3969 = vsel %vm3968, %v3967, 0
    %v3970 = vshrl.u32 %v3969, 5
    %v3971 = vand.u32 %v3969, 31
    %v3972 = vsub.s32 32, %v3971
    %v3973 = vshrl.u32 683565275, %v3972
    %v3974 = vshll.u32 683565275, %v3971
    %v3975 = vshrl.u32 2475754826, %v3972
    %v3976 = vor.u32 %v3974, %v3975
    %v3977 = vshll.u32 2475754826, %v3971
    %v3978 = vshrl.u32 2131351028, %v3972
    %v3979 = vor.u32 %v3977, %v3978
    %v3980 = vshll.u32 2131351028, %v3971
    %v3981 = vshrl.u32 2102212464, %v3972
    %v3982 = vor.u32 %v3980, %v3981
    %v3983 = vshll.u32 2102212464, %v3971
    %v3984 = vshrl.u32 920167782, %v3972
    %v3985 = vor.u32 %v3983, %v3984
    %v3986 = vshll.u32 920167782, %v3971
    %v3987 = vshrl.u32 1326507024, %v3972
    %v3988 = vor.u32 %v3986, %v3987
    %vm3989 = vcmp.lt.s32.totalorder %v3970, 1
    %vm3990 = vcmp.lt.s32.totalorder %v3970, 2
    %vm3991 = vcmp.lt.s32.totalorder %v3970, 3
    %vm3992 = vcmp.lt.s32.totalorder %v3970, 4
    %v3993 = vsel %vm3989, %v3973, %v3976
    %v3994 = vsel %vm3992, %v3982, 2102212464
    %v3995 = vsel %vm3991, %v3979, %v3994
    %v3996 = vsel %vm3990, %v3993, %v3995
    %v3997 = vsel %vm3989, %v3976, %v3979
    %v3998 = vsel %vm3992, %v3985, 920167782
    %v3999 = vsel %vm3991, %v3982, %v3998
    %v4000 = vsel %vm3990, %v3997, %v3999
    %v4001 = vsel %vm3989, %v3979, %v3982
    %v4002 = vsel %vm3992, %v3988, 1326507024
    %v4003 = vsel %vm3991, %v3985, %v4002
    %v4004 = vsel %vm3990, %v4001, %v4003
    %v4005 = vshll.u32 %v3965, 8
    %v4006 = vmul.u32.u64.compose %v4005, %v4004
    %v4007 = vextract.low.u32 %v4006
    %v4008 = vextract.high.u32 %v4006
    %v4009 = vmul.u32.u64.compose %v4005, %v4000
    %v4010 = vextract.low.u32 %v4009
    %v4011 = vextract.high.u32 %v4009
    %v4012 = vmul.u32 %v4005, %v3996
    %v4013 = vadd.s32 %v4008, %v4010
    %vm4014 = vc.u32 %v4008, %v4010
    %v4015 = vadd.s32 %v4011, 1
    %v4016 = vsel %vm4014, %v4015, %v4011
    %v4017 = vadd.s32 %v4012, %v4016
    %v4018 = vadd.s32 %v4017, 536870912
    %v4019 = vshrl.u32 %v4018, 30
    %v4020 = vshll.u32 %v4019, 30
    %v4021 = vsub.s32 %v4017, %v4020
    %vm4022 = vcmp.lt.s32.totalorder %v4021, 0
    %v4023 = vsub.s32 0, %v4021
    %v4024 = vsel %vm4022, %v4023, %v4021
    %v4025 = vclz %v4024
    %v4026 = vsub.s32 %v4025, 2
    %vm4027 = vcmp.gt.s32.totalorder 0, %v4026
    %v4028 = vsel %vm4027, 0, %v4026
    %v4029 = vsub.s32 32, %v4028
    %v4030 = vshll.u32 %v4021, %v4028
    %v4031 = vshrl.u32 %v4013, %v4029
    %v4032 = vor.u32 %v4030, %v4031
    %v4033 = vsub.s32 4294967266, %v4028
    %v4034 = vadd.s32 %v4033, 127
    %v4035 = vshll.u32 %v4034, 23
    %v4036 = vor.u32 4788187, %v4035
    %v4037 = vand.u32 2147483647, %v4036
    %v4039 = vcvt.s32.f32 %v4032
    %v4040 = vmul.f32 %v4039, %v4037
    %v4041 = vxor.u32 %v4040, 2147483648
    %v4042 = vsel %vm3959, %v4041, %v4040
    %v4043 = vsub.s32 4, %v4019
    %v4044 = vsel %vm3959, %v4043, %v4019
    %v4045 = vsel %vm3958, %v1933, %v4042
    %v4046 = vsel %vm3958, 0, %v4044
    %v4047 = vcosq.f32.pop %v4045
    %v4048 = vsinq.f32.pop %v4045
    %vm4049 = vweird.f32 %v1933
    %v4050 = vadd.s32 %v4046, 3
    %v4051 = vand.u32 %v4050, 3
    %vm4052 = vcmp.lt.s32.totalorder %v4051, 2
    %vm4053 = vcmp.eq.s32.totalorder %v4051, 0
    %v4054 = vxor.u32 %v4048, 2147483648
    %v4055 = vsel %vm4053, %v4047, %v4054
    %vm4056 = vcmp.eq.s32.totalorder %v4051, 2
    %v4057 = vxor.u32 %v4047, 2147483648
    %v4058 = vsel %vm4056, %v4057, %v4048
    %v4059 = vsel %vm4052, %v4055, %v4058
    %v4060 = vsel %vm4049, nan, %v4059
    %v4061 = vand.u32 2147483647, %v2786
    %vm4062 = vcmp.le.f32.partialorder %v4061, 0.7853982
    %vm4063 = vcmp.lt.s32.totalorder %v2786, 0
    %v4064 = vand.u32 %v2786, 2139095040
    %v4065 = vshrl.u32 %v4064, 23
    %v4066 = vsub.s32 %v4065, 127
    %v4067 = vand.u32 2147483647, %v2786
    %v4068 = vand.u32 %v4067, 8388607
    %v4069 = vor.u32 %v4068, 8388608
    %v4070 = vsub.s32 0, %v4069
    %v4071 = vadd.s32 %v4066, 1
    %vm4072 = vcmp.gt.s32.totalorder %v4071, 0
    %v4073 = vsel %vm4072, %v4071, 0
    %v4074 = vshrl.u32 %v4073, 5
    %v4075 = vand.u32 %v4073, 31
    %v4076 = vsub.s32 32, %v4075
    %v4077 = vshrl.u32 683565275, %v4076
    %v4078 = vshll.u32 683565275, %v4075
    %v4079 = vshrl.u32 2475754826, %v4076
    %v4080 = vor.u32 %v4078, %v4079
    %v4081 = vshll.u32 2475754826, %v4075
    %v4082 = vshrl.u32 2131351028, %v4076
    %v4083 = vor.u32 %v4081, %v4082
    %v4084 = vshll.u32 2131351028, %v4075
    %v4085 = vshrl.u32 2102212464, %v4076
    %v4086 = vor.u32 %v4084, %v4085
    %v4087 = vshll.u32 2102212464, %v4075
    %v4088 = vshrl.u32 920167782, %v4076
    %v4089 = vor.u32 %v4087, %v4088
    %v4090 = vshll.u32 920167782, %v4075
    %v4091 = vshrl.u32 1326507024, %v4076
    %v4092 = vor.u32 %v4090, %v4091
    %vm4093 = vcmp.lt.s32.totalorder %v4074, 1
    %vm4094 = vcmp.lt.s32.totalorder %v4074, 2
    %vm4095 = vcmp.lt.s32.totalorder %v4074, 3
    %vm4096 = vcmp.lt.s32.totalorder %v4074, 4
    %v4097 = vsel %vm4093, %v4077, %v4080
    %v4098 = vsel %vm4096, %v4086, 2102212464
    %v4099 = vsel %vm4095, %v4083, %v4098
    %v4100 = vsel %vm4094, %v4097, %v4099
    %v4101 = vsel %vm4093, %v4080, %v4083
    %v4102 = vsel %vm4096, %v4089, 920167782
    %v4103 = vsel %vm4095, %v4086, %v4102
    %v4104 = vsel %vm4094, %v4101, %v4103
    %v4105 = vsel %vm4093, %v4083, %v4086
    %v4106 = vsel %vm4096, %v4092, 1326507024
    %v4107 = vsel %vm4095, %v4089, %v4106
    %v4108 = vsel %vm4094, %v4105, %v4107
    %v4109 = vshll.u32 %v4069, 8
    %v4110 = vmul.u32.u64.compose %v4109, %v4108
    %v4111 = vextract.low.u32 %v4110
    %v4112 = vextract.high.u32 %v4110
    %v4113 = vmul.u32.u64.compose %v4109, %v4104
    %v4114 = vextract.low.u32 %v4113
    %v4115 = vextract.high.u32 %v4113
    %v4116 = vmul.u32 %v4109, %v4100
    %v4117 = vadd.s32 %v4112, %v4114
    %vm4118 = vc.u32 %v4112, %v4114
    %v4119 = vadd.s32 %v4115, 1
    %v4120 = vsel %vm4118, %v4119, %v4115
    %v4121 = vadd.s32 %v4116, %v4120
    %v4122 = vadd.s32 %v4121, 536870912
    %v4123 = vshrl.u32 %v4122, 30
    %v4124 = vshll.u32 %v4123, 30
    %v4125 = vsub.s32 %v4121, %v4124
    %vm4126 = vcmp.lt.s32.totalorder %v4125, 0
    %v4127 = vsub.s32 0, %v4125
    %v4128 = vsel %vm4126, %v4127, %v4125
    %v4129 = vclz %v4128
    %v4130 = vsub.s32 %v4129, 2
    %vm4131 = vcmp.gt.s32.totalorder 0, %v4130
    %v4132 = vsel %vm4131, 0, %v4130
    %v4133 = vsub.s32 32, %v4132
    %v4134 = vshll.u32 %v4125, %v4132
    %v4135 = vshrl.u32 %v4117, %v4133
    %v4136 = vor.u32 %v4134, %v4135
    %v4137 = vsub.s32 4294967266, %v4132
    %v4138 = vadd.s32 %v4137, 127
    %v4139 = vshll.u32 %v4138, 23
    %v4140 = vor.u32 4788187, %v4139
    %v4141 = vand.u32 2147483647, %v4140
    %v4143 = vcvt.s32.f32 %v4136
    %v4144 = vmul.f32 %v4143, %v4141
    %v4145 = vxor.u32 %v4144, 2147483648
    %v4146 = vsel %vm4063, %v4145, %v4144
    %v4147 = vsub.s32 4, %v4123
    %v4148 = vsel %vm4063, %v4147, %v4123
    %v4149 = vsel %vm4062, %v2786, %v4146
    %v4150 = vsel %vm4062, 0, %v4148
    %v4151 = vcosq.f32.pop %v4149
    %v4152 = vsinq.f32.pop %v4149
    %vm4153 = vweird.f32 %v2786
    %v4154 = vadd.s32 %v4150, 3
    %v4155 = vand.u32 %v4154, 3
    %vm4156 = vcmp.lt.s32.totalorder %v4155, 2
    %vm4157 = vcmp.eq.s32.totalorder %v4155, 0
    %v4158 = vxor.u32 %v4152, 2147483648
    %v4159 = vsel %vm4157, %v4151, %v4158
    %vm4160 = vcmp.eq.s32.totalorder %v4155, 2
    %v4161 = vxor.u32 %v4151, 2147483648
    %v4162 = vsel %vm4160, %v4161, %v4152
    %v4163 = vsel %vm4156, %v4159, %v4162
    %v4164 = vsel %vm4153, nan, %v4163
    %v4165 = vand.u32 2147483647, %v2788
    %vm4166 = vcmp.le.f32.partialorder %v4165, 0.7853982
    %vm4167 = vcmp.lt.s32.totalorder %v2788, 0
    %v4168 = vand.u32 %v2788, 2139095040
    %v4169 = vshrl.u32 %v4168, 23
    %v4170 = vsub.s32 %v4169, 127
    %v4171 = vand.u32 2147483647, %v2788
    %v4172 = vand.u32 %v4171, 8388607
    %v4173 = vor.u32 %v4172, 8388608
    %v4174 = vsub.s32 0, %v4173
    %v4175 = vadd.s32 %v4170, 1
    %vm4176 = vcmp.gt.s32.totalorder %v4175, 0
    %v4177 = vsel %vm4176, %v4175, 0
    %v4178 = vshrl.u32 %v4177, 5
    %v4179 = vand.u32 %v4177, 31
    %v4180 = vsub.s32 32, %v4179
    %v4181 = vshrl.u32 683565275, %v4180
    %v4182 = vshll.u32 683565275, %v4179
    %v4183 = vshrl.u32 2475754826, %v4180
    %v4184 = vor.u32 %v4182, %v4183
    %v4185 = vshll.u32 2475754826, %v4179
    %v4186 = vshrl.u32 2131351028, %v4180
    %v4187 = vor.u32 %v4185, %v4186
    %v4188 = vshll.u32 2131351028, %v4179
    %v4189 = vshrl.u32 2102212464, %v4180
    %v4190 = vor.u32 %v4188, %v4189
    %v4191 = vshll.u32 2102212464, %v4179
    %v4192 = vshrl.u32 920167782, %v4180
    %v4193 = vor.u32 %v4191, %v4192
    %v4194 = vshll.u32 920167782, %v4179
    %v4195 = vshrl.u32 1326507024, %v4180
    %v4196 = vor.u32 %v4194, %v4195
    %vm4197 = vcmp.lt.s32.totalorder %v4178, 1
    %vm4198 = vcmp.lt.s32.totalorder %v4178, 2
    %vm4199 = vcmp.lt.s32.totalorder %v4178, 3
    %vm4200 = vcmp.lt.s32.totalorder %v4178, 4
    %v4201 = vsel %vm4197, %v4181, %v4184
    %v4202 = vsel %vm4200, %v4190, 2102212464
    %v4203 = vsel %vm4199, %v4187, %v4202
    %v4204 = vsel %vm4198, %v4201, %v4203
    %v4205 = vsel %vm4197, %v4184, %v4187
    %v4206 = vsel %vm4200, %v4193, 920167782
    %v4207 = vsel %vm4199, %v4190, %v4206
    %v4208 = vsel %vm4198, %v4205, %v4207
    %v4209 = vsel %vm4197, %v4187, %v4190
    %v4210 = vsel %vm4200, %v4196, 1326507024
    %v4211 = vsel %vm4199, %v4193, %v4210
    %v4212 = vsel %vm4198, %v4209, %v4211
    %v4213 = vshll.u32 %v4173, 8
    %v4214 = vmul.u32.u64.compose %v4213, %v4212
    %v4215 = vextract.low.u32 %v4214
    %v4216 = vextract.high.u32 %v4214
    %v4217 = vmul.u32.u64.compose %v4213, %v4208
    %v4218 = vextract.low.u32 %v4217
    %v4219 = vextract.high.u32 %v4217
    %v4220 = vmul.u32 %v4213, %v4204
    %v4221 = vadd.s32 %v4216, %v4218
    %vm4222 = vc.u32 %v4216, %v4218
    %v4223 = vadd.s32 %v4219, 1
    %v4224 = vsel %vm4222, %v4223, %v4219
    %v4225 = vadd.s32 %v4220, %v4224
    %v4226 = vadd.s32 %v4225, 536870912
    %v4227 = vshrl.u32 %v4226, 30
    %v4228 = vshll.u32 %v4227, 30
    %v4229 = vsub.s32 %v4225, %v4228
    %vm4230 = vcmp.lt.s32.totalorder %v4229, 0
    %v4231 = vsub.s32 0, %v4229
    %v4232 = vsel %vm4230, %v4231, %v4229
    %v4233 = vclz %v4232
    %v4234 = vsub.s32 %v4233, 2
    %vm4235 = vcmp.gt.s32.totalorder 0, %v4234
    %v4236 = vsel %vm4235, 0, %v4234
    %v4237 = vsub.s32 32, %v4236
    %v4238 = vshll.u32 %v4229, %v4236
    %v4239 = vshrl.u32 %v4221, %v4237
    %v4240 = vor.u32 %v4238, %v4239
    %v4241 = vsub.s32 4294967266, %v4236
    %v4242 = vadd.s32 %v4241, 127
    %v4243 = vshll.u32 %v4242, 23
    %v4244 = vor.u32 4788187, %v4243
    %v4245 = vand.u32 2147483647, %v4244
    %v4247 = vcvt.s32.f32 %v4240
    %v4248 = vmul.f32 %v4247, %v4245
    %v4249 = vxor.u32 %v4248, 2147483648
    %v4250 = vsel %vm4167, %v4249, %v4248
    %v4251 = vsub.s32 4, %v4227
    %v4252 = vsel %vm4167, %v4251, %v4227
    %v4253 = vsel %vm4166, %v2788, %v4250
    %v4254 = vsel %vm4166, 0, %v4252
    %v4255 = vcosq.f32.pop %v4253
    %v4256 = vsinq.f32.pop %v4253
    %vm4257 = vweird.f32 %v2788
    %v4258 = vadd.s32 %v4254, 3
    %v4259 = vand.u32 %v4258, 3
    %vm4260 = vcmp.lt.s32.totalorder %v4259, 2
    %vm4261 = vcmp.eq.s32.totalorder %v4259, 0
    %v4262 = vxor.u32 %v4256, 2147483648
    %v4263 = vsel %vm4261, %v4255, %v4262
    %vm4264 = vcmp.eq.s32.totalorder %v4259, 2
    %v4265 = vxor.u32 %v4255, 2147483648
    %v4266 = vsel %vm4264, %v4265, %v4256
    %v4267 = vsel %vm4260, %v4263, %v4266
    %v4268 = vsel %vm4257, nan, %v4267
    %v4269 = vand.u32 2147483647, %v3641
    %vm4270 = vcmp.le.f32.partialorder %v4269, 0.7853982
    %vm4271 = vcmp.lt.s32.totalorder %v3641, 0
    %v4272 = vand.u32 %v3641, 2139095040
    %v4273 = vshrl.u32 %v4272, 23
    %v4274 = vsub.s32 %v4273, 127
    %v4275 = vand.u32 2147483647, %v3641
    %v4276 = vand.u32 %v4275, 8388607
    %v4277 = vor.u32 %v4276, 8388608
    %v4278 = vsub.s32 0, %v4277
    %v4279 = vadd.s32 %v4274, 1
    %vm4280 = vcmp.gt.s32.totalorder %v4279, 0
    %v4281 = vsel %vm4280, %v4279, 0
    %v4282 = vshrl.u32 %v4281, 5
    %v4283 = vand.u32 %v4281, 31
    %v4284 = vsub.s32 32, %v4283
    %v4285 = vshrl.u32 683565275, %v4284
    %v4286 = vshll.u32 683565275, %v4283
    %v4287 = vshrl.u32 2475754826, %v4284
    %v4288 = vor.u32 %v4286, %v4287
    %v4289 = vshll.u32 2475754826, %v4283
    %v4290 = vshrl.u32 2131351028, %v4284
    %v4291 = vor.u32 %v4289, %v4290
    %v4292 = vshll.u32 2131351028, %v4283
    %v4293 = vshrl.u32 2102212464, %v4284
    %v4294 = vor.u32 %v4292, %v4293
    %v4295 = vshll.u32 2102212464, %v4283
    %v4296 = vshrl.u32 920167782, %v4284
    %v4297 = vor.u32 %v4295, %v4296
    %v4298 = vshll.u32 920167782, %v4283
    %v4299 = vshrl.u32 1326507024, %v4284
    %v4300 = vor.u32 %v4298, %v4299
    %vm4301 = vcmp.lt.s32.totalorder %v4282, 1
    %vm4302 = vcmp.lt.s32.totalorder %v4282, 2
    %vm4303 = vcmp.lt.s32.totalorder %v4282, 3
    %vm4304 = vcmp.lt.s32.totalorder %v4282, 4
    %v4305 = vsel %vm4301, %v4285, %v4288
    %v4306 = vsel %vm4304, %v4294, 2102212464
    %v4307 = vsel %vm4303, %v4291, %v4306
    %v4308 = vsel %vm4302, %v4305, %v4307
    %v4309 = vsel %vm4301, %v4288, %v4291
    %v4310 = vsel %vm4304, %v4297, 920167782
    %v4311 = vsel %vm4303, %v4294, %v4310
    %v4312 = vsel %vm4302, %v4309, %v4311
    %v4313 = vsel %vm4301, %v4291, %v4294
    %v4314 = vsel %vm4304, %v4300, 1326507024
    %v4315 = vsel %vm4303, %v4297, %v4314
    %v4316 = vsel %vm4302, %v4313, %v4315
    %v4317 = vshll.u32 %v4277, 8
    %v4318 = vmul.u32.u64.compose %v4317, %v4316
    %v4319 = vextract.low.u32 %v4318
    %v4320 = vextract.high.u32 %v4318
    %v4321 = vmul.u32.u64.compose %v4317, %v4312
    %v4322 = vextract.low.u32 %v4321
    %v4323 = vextract.high.u32 %v4321
    %v4324 = vmul.u32 %v4317, %v4308
    %v4325 = vadd.s32 %v4320, %v4322
    %vm4326 = vc.u32 %v4320, %v4322
    %v4327 = vadd.s32 %v4323, 1
    %v4328 = vsel %vm4326, %v4327, %v4323
    %v4329 = vadd.s32 %v4324, %v4328
    %v4330 = vadd.s32 %v4329, 536870912
    %v4331 = vshrl.u32 %v4330, 30
    %v4332 = vshll.u32 %v4331, 30
    %v4333 = vsub.s32 %v4329, %v4332
    %vm4334 = vcmp.lt.s32.totalorder %v4333, 0
    %v4335 = vsub.s32 0, %v4333
    %v4336 = vsel %vm4334, %v4335, %v4333
    %v4337 = vclz %v4336
    %v4338 = vsub.s32 %v4337, 2
    %vm4339 = vcmp.gt.s32.totalorder 0, %v4338
    %v4340 = vsel %vm4339, 0, %v4338
    %v4341 = vsub.s32 32, %v4340
    %v4342 = vshll.u32 %v4333, %v4340
    %v4343 = vshrl.u32 %v4325, %v4341
    %v4344 = vor.u32 %v4342, %v4343
    %v4345 = vsub.s32 4294967266, %v4340
    %v4346 = vadd.s32 %v4345, 127
    %v4347 = vshll.u32 %v4346, 23
    %v4348 = vor.u32 4788187, %v4347
    %v4349 = vand.u32 2147483647, %v4348
    %v4351 = vcvt.s32.f32 %v4344
    %v4352 = vmul.f32 %v4351, %v4349
    %v4353 = vxor.u32 %v4352, 2147483648
    %v4354 = vsel %vm4271, %v4353, %v4352
    %v4355 = vsub.s32 4, %v4331
    %v4356 = vsel %vm4271, %v4355, %v4331
    %v4357 = vsel %vm4270, %v3641, %v4354
    %v4358 = vsel %vm4270, 0, %v4356
    %v4359 = vcosq.f32.pop %v4357
    %v4360 = vsinq.f32.pop %v4357
    %vm4361 = vweird.f32 %v3641
    %v4362 = vadd.s32 %v4358, 3
    %v4363 = vand.u32 %v4362, 3
    %vm4364 = vcmp.lt.s32.totalorder %v4363, 2
    %vm4365 = vcmp.eq.s32.totalorder %v4363, 0
    %v4366 = vxor.u32 %v4360, 2147483648
    %v4367 = vsel %vm4365, %v4359, %v4366
    %vm4368 = vcmp.eq.s32.totalorder %v4363, 2
    %v4369 = vxor.u32 %v4359, 2147483648
    %v4370 = vsel %vm4368, %v4369, %v4360
    %v4371 = vsel %vm4364, %v4367, %v4370
    %v4372 = vsel %vm4361, nan, %v4371
    %v4373 = vand.u32 2147483647, %v3643
    %vm4374 = vcmp.le.f32.partialorder %v4373, 0.7853982
    %vm4375 = vcmp.lt.s32.totalorder %v3643, 0
    %v4376 = vand.u32 %v3643, 2139095040
    %v4377 = vshrl.u32 %v4376, 23
    %v4378 = vsub.s32 %v4377, 127
    %v4379 = vand.u32 2147483647, %v3643
    %v4380 = vand.u32 %v4379, 8388607
    %v4381 = vor.u32 %v4380, 8388608
    %v4382 = vsub.s32 0, %v4381
    %v4383 = vadd.s32 %v4378, 1
    %vm4384 = vcmp.gt.s32.totalorder %v4383, 0
    %v4385 = vsel %vm4384, %v4383, 0
    %v4386 = vshrl.u32 %v4385, 5
    %v4387 = vand.u32 %v4385, 31
    %v4388 = vsub.s32 32, %v4387
    %v4389 = vshrl.u32 683565275, %v4388
    %v4390 = vshll.u32 683565275, %v4387
    %v4391 = vshrl.u32 2475754826, %v4388
    %v4392 = vor.u32 %v4390, %v4391
    %v4393 = vshll.u32 2475754826, %v4387
    %v4394 = vshrl.u32 2131351028, %v4388
    %v4395 = vor.u32 %v4393, %v4394
    %v4396 = vshll.u32 2131351028, %v4387
    %v4397 = vshrl.u32 2102212464, %v4388
    %v4398 = vor.u32 %v4396, %v4397
    %v4399 = vshll.u32 2102212464, %v4387
    %v4400 = vshrl.u32 920167782, %v4388
    %v4401 = vor.u32 %v4399, %v4400
    %v4402 = vshll.u32 920167782, %v4387
    %v4403 = vshrl.u32 1326507024, %v4388
    %v4404 = vor.u32 %v4402, %v4403
    %vm4405 = vcmp.lt.s32.totalorder %v4386, 1
    %vm4406 = vcmp.lt.s32.totalorder %v4386, 2
    %vm4407 = vcmp.lt.s32.totalorder %v4386, 3
    %vm4408 = vcmp.lt.s32.totalorder %v4386, 4
    %v4409 = vsel %vm4405, %v4389, %v4392
    %v4410 = vsel %vm4408, %v4398, 2102212464
    %v4411 = vsel %vm4407, %v4395, %v4410
    %v4412 = vsel %vm4406, %v4409, %v4411
    %v4413 = vsel %vm4405, %v4392, %v4395
    %v4414 = vsel %vm4408, %v4401, 920167782
    %v4415 = vsel %vm4407, %v4398, %v4414
    %v4416 = vsel %vm4406, %v4413, %v4415
    %v4417 = vsel %vm4405, %v4395, %v4398
    %v4418 = vsel %vm4408, %v4404, 1326507024
    %v4419 = vsel %vm4407, %v4401, %v4418
    %v4420 = vsel %vm4406, %v4417, %v4419
    %v4421 = vshll.u32 %v4381, 8
    %v4422 = vmul.u32.u64.compose %v4421, %v4420
    %v4423 = vextract.low.u32 %v4422
    %v4424 = vextract.high.u32 %v4422
    %v4425 = vmul.u32.u64.compose %v4421, %v4416
    %v4426 = vextract.low.u32 %v4425
    %v4427 = vextract.high.u32 %v4425
    %v4428 = vmul.u32 %v4421, %v4412
    %v4429 = vadd.s32 %v4424, %v4426
    %vm4430 = vc.u32 %v4424, %v4426
    %v4431 = vadd.s32 %v4427, 1
    %v4432 = vsel %vm4430, %v4431, %v4427
    %v4433 = vadd.s32 %v4428, %v4432
    %v4434 = vadd.s32 %v4433, 536870912
    %v4435 = vshrl.u32 %v4434, 30
    %v4436 = vshll.u32 %v4435, 30
    %v4437 = vsub.s32 %v4433, %v4436
    %vm4438 = vcmp.lt.s32.totalorder %v4437, 0
    %v4439 = vsub.s32 0, %v4437
    %v4440 = vsel %vm4438, %v4439, %v4437
    %v4441 = vclz %v4440
    %v4442 = vsub.s32 %v4441, 2
    %vm4443 = vcmp.gt.s32.totalorder 0, %v4442
    %v4444 = vsel %vm4443, 0, %v4442
    %v4445 = vsub.s32 32, %v4444
    %v4446 = vshll.u32 %v4437, %v4444
    %v4447 = vshrl.u32 %v4429, %v4445
    %v4448 = vor.u32 %v4446, %v4447
    %v4449 = vsub.s32 4294967266, %v4444
    %v4450 = vadd.s32 %v4449, 127
    %v4451 = vshll.u32 %v4450, 23
    %v4452 = vor.u32 4788187, %v4451
    %v4453 = vand.u32 2147483647, %v4452
    %v4455 = vcvt.s32.f32 %v4448
    %v4456 = vmul.f32 %v4455, %v4453
    %v4457 = vxor.u32 %v4456, 2147483648
    %v4458 = vsel %vm4375, %v4457, %v4456
    %v4459 = vsub.s32 4, %v4435
    %v4460 = vsel %vm4375, %v4459, %v4435
    %v4461 = vsel %vm4374, %v3643, %v4458
    %v4462 = vsel %vm4374, 0, %v4460
    %v4463 = vcosq.f32.pop %v4461
    %v4464 = vsinq.f32.pop %v4461
    %vm4465 = vweird.f32 %v3643
    %v4466 = vadd.s32 %v4462, 3
    %v4467 = vand.u32 %v4466, 3
    %vm4468 = vcmp.lt.s32.totalorder %v4467, 2
    %vm4469 = vcmp.eq.s32.totalorder %v4467, 0
    %v4470 = vxor.u32 %v4464, 2147483648
    %v4471 = vsel %vm4469, %v4463, %v4470
    %vm4472 = vcmp.eq.s32.totalorder %v4467, 2
    %v4473 = vxor.u32 %v4463, 2147483648
    %v4474 = vsel %vm4472, %v4473, %v4464
    %v4475 = vsel %vm4468, %v4471, %v4474
    %v4476 = vsel %vm4465, nan, %v4475
    %v4485 = vcombine.low %v3748, %v3852
    %v4486 = vcombine.high %v3748, %v3852
    %v4487 = vcombine.low %v3956, %v4060
    %v4488 = vcombine.high %v3956, %v4060
    %v4489 = vcombine.low %v4164, %v4268
    %v4490 = vcombine.high %v4164, %v4268
    %v4491 = vcombine.low %v4372, %v4476
    %v4492 = vcombine.high %v4372, %v4476
    %v4494 = vunpack.c.l.s4 1966171168
    %v4495 = vunpack.c.0.s8 %v4494
    %v4496 = vlaneseq
    %v4497 = vshrl.u32 %v4496, 7
    %v4498 = vsub.s32 %v4495, %v4497
    %v4499 = vrot.slane %v4485, %v4498
    %v4501 = vunpack.c.l.s4 1966171168
    %v4502 = vunpack.c.0.s8 %v4501
    %v4503 = vlaneseq
    %v4504 = vshrl.u32 %v4503, 7
    %v4505 = vsub.s32 %v4502, %v4504
    %v4506 = vrot.slane %v4486, %v4505
    %v4508 = vunpack.c.l.s4 1966171168
    %v4509 = vunpack.c.0.s8 %v4508
    %v4510 = vlaneseq
    %v4511 = vshrl.u32 %v4510, 7
    %v4512 = vsub.s32 %v4509, %v4511
    %v4513 = vrot.slane %v4487, %v4512
    %v4515 = vunpack.c.l.s4 1966171168
    %v4516 = vunpack.c.0.s8 %v4515
    %v4517 = vlaneseq
    %v4518 = vshrl.u32 %v4517, 7
    %v4519 = vsub.s32 %v4516, %v4518
    %v4520 = vrot.slane %v4488, %v4519
    %v4522 = vunpack.c.l.s4 1966171168
    %v4523 = vunpack.c.0.s8 %v4522
    %v4524 = vlaneseq
    %v4525 = vshrl.u32 %v4524, 7
    %v4526 = vsub.s32 %v4523, %v4525
    %v4527 = vrot.slane %v4489, %v4526
    %v4529 = vunpack.c.l.s4 1966171168
    %v4530 = vunpack.c.0.s8 %v4529
    %v4531 = vlaneseq
    %v4532 = vshrl.u32 %v4531, 7
    %v4533 = vsub.s32 %v4530, %v4532
    %v4534 = vrot.slane %v4490, %v4533
    %v4536 = vunpack.c.l.s4 1966171168
    %v4537 = vunpack.c.0.s8 %v4536
    %v4538 = vlaneseq
    %v4539 = vshrl.u32 %v4538, 7
    %v4540 = vsub.s32 %v4537, %v4539
    %v4541 = vrot.slane %v4491, %v4540
    %v4543 = vunpack.c.l.s4 1966171168
    %v4544 = vunpack.c.0.s8 %v4543
    %v4545 = vlaneseq
    %v4546 = vshrl.u32 %v4545, 7
    %v4547 = vsub.s32 %v4544, %v4546
    %v4548 = vrot.slane %v4492, %v4547
    %v4549 = vcombine.low %v4499, %v4513
    %v4550 = vcombine.high %v4499, %v4513
    %v4551 = vcombine.low %v4506, %v4520
    %v4552 = vcombine.high %v4506, %v4520
    %v4553 = vcombine.low %v4527, %v4541
    %v4554 = vcombine.high %v4527, %v4541
    %v4555 = vcombine.low %v4534, %v4548
    %v4556 = vcombine.high %v4534, %v4548
    %v4558 = vunpack.c.l.s4 1966171168
    %v4559 = vunpack.c.0.s8 %v4558
    %v4560 = vlaneseq
    %v4561 = vshrl.u32 %v4560, 7
    %v4562 = vsub.s32 %v4559, %v4561
    %v4563 = vrot.slane %v4549, %v4562
    %v4565 = vunpack.c.l.s4 1966171168
    %v4566 = vunpack.c.0.s8 %v4565
    %v4567 = vlaneseq
    %v4568 = vshrl.u32 %v4567, 7
    %v4569 = vsub.s32 %v4566, %v4568
    %v4570 = vrot.slane %v4551, %v4569
    %v4572 = vunpack.c.l.s4 1966171168
    %v4573 = vunpack.c.0.s8 %v4572
    %v4574 = vlaneseq
    %v4575 = vshrl.u32 %v4574, 7
    %v4576 = vsub.s32 %v4573, %v4575
    %v4577 = vrot.slane %v4550, %v4576
    %v4579 = vunpack.c.l.s4 1966171168
    %v4580 = vunpack.c.0.s8 %v4579
    %v4581 = vlaneseq
    %v4582 = vshrl.u32 %v4581, 7
    %v4583 = vsub.s32 %v4580, %v4582
    %v4584 = vrot.slane %v4552, %v4583
    %v4586 = vunpack.c.l.s4 1966171168
    %v4587 = vunpack.c.0.s8 %v4586
    %v4588 = vlaneseq
    %v4589 = vshrl.u32 %v4588, 7
    %v4590 = vsub.s32 %v4587, %v4589
    %v4591 = vrot.slane %v4553, %v4590
    %v4593 = vunpack.c.l.s4 1966171168
    %v4594 = vunpack.c.0.s8 %v4593
    %v4595 = vlaneseq
    %v4596 = vshrl.u32 %v4595, 7
    %v4597 = vsub.s32 %v4594, %v4596
    %v4598 = vrot.slane %v4555, %v4597
    %v4600 = vunpack.c.l.s4 1966171168
    %v4601 = vunpack.c.0.s8 %v4600
    %v4602 = vlaneseq
    %v4603 = vshrl.u32 %v4602, 7
    %v4604 = vsub.s32 %v4601, %v4603
    %v4605 = vrot.slane %v4554, %v4604
    %v4607 = vunpack.c.l.s4 1966171168
    %v4608 = vunpack.c.0.s8 %v4607
    %v4609 = vlaneseq
    %v4610 = vshrl.u32 %v4609, 7
    %v4611 = vsub.s32 %v4608, %v4610
    %v4612 = vrot.slane %v4556, %v4611
    %v4613 = vcombine.low %v4563, %v4591
    %v4614 = vcombine.high %v4563, %v4591
    %v4615 = vcombine.low %v4570, %v4598
    %v4616 = vcombine.high %v4570, %v4598
    %v4617 = vcombine.low %v4577, %v4605
    %v4618 = vcombine.high %v4577, %v4605
    %v4619 = vcombine.low %v4584, %v4612
    %v4620 = vcombine.high %v4584, %v4612
    %4629 = vst [vmem:[#allocation8] sm:$0xff] %v4613
    %4630 = vst [vmem:[#allocation8 + $0x8] sm:$0xff] %v4617
    %4631 = vst [vmem:[#allocation8 + $0x10] sm:$0xff] %v4614
    %4632 = vst [vmem:[#allocation8 + $0x18] sm:$0xff] %v4618
    %4633 = vst [vmem:[#allocation8 + $0x20] sm:$0xff] %v4615
    %4634 = vst [vmem:[#allocation8 + $0x28] sm:$0xff] %v4619
    %4635 = vst [vmem:[#allocation8 + $0x30] sm:$0xff] %v4616
    %4636 = vst [vmem:[#allocation8 + $0x38] sm:$0xff] %v4620
    // Predicated region
    $region26: #{tpu_custom_call.1} parent=1 // pred_check
      _
    $region27: #{tpu_custom_call.1} parent=1 // pred_check_branch
      %4638 = sbr.rel (0) target = $region29
    $region28: #{tpu_custom_call.1} parent=1 // pred_region
      %s4640 = ssub.s32 1024, 128
      %4641 = vsyncadd [#allocation4], %s4640
      %s4642 = sshll.u32 [#allocation8], 4
      %s4643 = int_to_ptr.vmem [resolvable:$true] %s4642
      %4648 = dma.vmem_to_hbm [thread:$0]  %s4643, 128, %s3, [#allocation4], 128, 128, 8
    $region29: #{tpu_custom_call.1} parent=1 // pred_fallthru
      _
    // Predicated region
    $region30: #{tpu_custom_call.1} parent=1 // pred_check
      _
    $region31: #{tpu_custom_call.1} parent=1 // pred_check_branch
      %4650 = sbr.rel (0) target = $region33
    $region32: #{tpu_custom_call.1} parent=1 // pred_region
      %4651 = dma.done [#allocation4], 1024
    $region33: #{tpu_custom_call.1} parent=1 // pred_fallthru
      _
    %4652 = vsyncpa [#allocation3], 1
    %4653 = vsyncpa [#allocation6], 1
    %4654 = vsyncpa [#allocation4], 1

</llo_original>
